<compile_context>
chip_gen: v5e
topology: v5e:2x2
jax: 0.10.0
libtpu: 0.0.40
codegen_flags: <defaults>
</compile_context>

<pallas_src>
import math
import functools

import jax
import jax.numpy as jnp
from jax.experimental import pallas as pl
from jax.experimental.pallas import tpu as pltpu


# ----------------------------------------------------------------------------
# Fused decoder kernel (one grid step = one batch element, whole decoder)
# ----------------------------------------------------------------------------
def _decoder_kernel(
    emb_ref,        # (T, E)   f32   embedded target tokens
    e_ref,          # (S, D)   f32   encoder outputs
    smask_ref,      # (T, S)   f32   pre-expanded source mask
    tmask_ref,      # (T, T)   f32   target (causal) mask
    lin_w_ref,      # (E, D)   bf16
    lin_b_ref,      # (1, D)   f32
    pe_ref,         # (T, D)   f32
    na_ref,         # (3N, 1, D) f32 norm alphas  [n1, n2, n3] per layer
    nb_ref,         # (3N, 1, D) f32 norm biases
    aw_ref,         # (8N, D, D) bf16 [wq,wk,wv,wo] x [self, cross] per layer
    ab_ref,         # (8N, 1, D) f32  [bq,bk,bv,bo] x [self, cross] per layer
    fw1_ref,        # (N, D, Dff) bf16
    fb1_ref,        # (N, 1, Dff) f32
    fw2_ref,        # (N, Dff, D) bf16
    fb2_ref,        # (N, 1, D)   f32
    nfa_ref,        # (1, D) f32 final norm alpha
    nfb_ref,        # (1, D) f32 final norm bias
    o_ref,          # (T, D) f32 output
    *,
    n_layers, heads, d_model, eps, scale, compute_dtype,
):
    dk = d_model // heads
    inv_sqrt_dk = 1.0 / math.sqrt(dk)

    def mxu(a, w):
        # MXU matmul: bf16 operands, f32 accumulation.
        return jnp.dot(a.astype(compute_dtype), w,
                       preferred_element_type=jnp.float32)

    def layer_norm(x, a, b):
        mean = jnp.mean(x, axis=-1, keepdims=True)
        # unbiased std (ddof=1), matching torch.Tensor.std()
        var = jnp.sum((x - mean) ** 2, axis=-1, keepdims=True) / (x.shape[-1] - 1)
        std = jnp.sqrt(var)
        return a * (x - mean) * pl.reciprocal(std + eps, approx=True) + b

    def attention(xq, xkv, mask, widx):
        wq, wk, wv, wo = (aw_ref[widx + i] for i in range(4))
        bq, bk, bv, bo = (ab_ref[widx + i] for i in range(4))
        q = mxu(xq, wq) + bq          # (Tq, D) f32
        k = mxu(xkv, wk) + bk         # (Tk, D) f32
        v = mxu(xkv, wv) + bv         # (Tk, D) f32
        # Split heads onto the leading (batch) axis, then one batched
        # contraction per step instead of a per-head matmul loop.
        qh = jnp.stack([q[:, h * dk:(h + 1) * dk] for h in range(heads)], axis=0)
        kh = jnp.stack([k[:, h * dk:(h + 1) * dk] for h in range(heads)], axis=0)
        vh = jnp.stack([v[:, h * dk:(h + 1) * dk] for h in range(heads)], axis=0)
        s = jnp.einsum('hqd,hkd->hqk',
                       qh.astype(compute_dtype), kh.astype(compute_dtype),
                       preferred_element_type=jnp.float32) * inv_sqrt_dk
        s = jnp.where(mask[None, :, :] == 0.0, -1e9, s)      # masked_fill
        s_max = jnp.max(s, axis=-1, keepdims=True)
        e = jnp.exp(s - s_max)
        p = e * pl.reciprocal(jnp.sum(e, axis=-1, keepdims=True), approx=True)
        o = jnp.einsum('hqk,hkd->hqd',
                       p.astype(compute_dtype), vh.astype(compute_dtype),
                       preferred_element_type=jnp.float32)    # (H, Tq, dk)
        concat = jnp.concatenate([o[h] for h in range(heads)], axis=-1)
        return mxu(concat, wo) + bo

    def feed_forward(x, l):
        h = jnp.maximum(mxu(x, fw1_ref[l]) + fb1_ref[l], 0.0)
        return mxu(h, fw2_ref[l]) + fb2_ref[l]

    # x = PE( tanh(Linear(Embed(trg))) )
    x = jnp.tanh(mxu(emb_ref[...], lin_w_ref[...]) + lin_b_ref[...])
    x = x * scale + pe_ref[...]

    e_out = e_ref[...]
    tmask = tmask_ref[...]
    smask = smask_ref[...]

    # N decoder layers, fully unrolled; weights are read straight from the
    # VMEM-resident stacked slabs (no per-layer DMA / launch).
    for l in range(n_layers):
        x2 = layer_norm(x, na_ref[3 * l + 0], nb_ref[3 * l + 0])
        x = x + attention(x2, x2, tmask, 8 * l + 0)           # self-attention
        x2 = layer_norm(x, na_ref[3 * l + 1], nb_ref[3 * l + 1])
        x = x + attention(x2, e_out, smask, 8 * l + 4)        # cross-attention
        x2 = layer_norm(x, na_ref[3 * l + 2], nb_ref[3 * l + 2])
        x = x + feed_forward(x2, l)

    o_ref[...] = layer_norm(x, nfa_ref[...], nfb_ref[...])


# ----------------------------------------------------------------------------
# Wrapper: host-side packing + single pallas_call
# ----------------------------------------------------------------------------
def decoder_forward(params, trg, e_outputs, src_mask, trg_mask,
                    *, d_model, heads, eps=1e-6):
    layers = params["layers"]
    n_layers = len(layers)
    B, T = trg.shape
    S = e_outputs.shape[1]
    E = params["embed_w"].shape[1]
    Dff = layers[0]["ff"]["w1"].shape[1]
    cdt = jnp.bfloat16   # MXU operand dtype (f32 accumulation inside kernel)

    # ---- glue / trace-time packing (not the hot path) ----
    emb = jnp.take(params["embed_w"], trg, axis=0)                 # (B, T, E)
    smask = jnp.broadcast_to(src_mask, (B, T, S)).astype(jnp.float32)
    tmask = jnp.broadcast_to(trg_mask, (B, T, T)).astype(jnp.float32)

    norm_a = jnp.stack([l[k] for l in layers
                        for k in ("n1_a", "n2_a", "n3_a")])        # (3N, 1, D)
    norm_b = jnp.stack([l[k] for l in layers
                        for k in ("n1_b", "n2_b", "n3_b")])        # (3N, 1, D)
    attn_w = jnp.stack([l[a][k] for l in layers
                        for a in ("attn1", "attn2")
                        for k in ("wq", "wk", "wv", "wo")]).astype(cdt)  # (8N,D,D)
    attn_b = jnp.stack([l[a][k] for l in layers
                        for a in ("attn1", "attn2")
                        for k in ("bq", "bk", "bv", "bo")])        # (8N, 1, D)
    ff_w1 = jnp.stack([l["ff"]["w1"] for l in layers]).astype(cdt)  # (N, D, Dff)
    ff_b1 = jnp.stack([l["ff"]["b1"] for l in layers])              # (N, 1, Dff)
    ff_w2 = jnp.stack([l["ff"]["w2"] for l in layers]).astype(cdt)  # (N, Dff, D)
    ff_b2 = jnp.stack([l["ff"]["b2"] for l in layers])              # (N, 1, D)
    lin_w = params["lin_w"].astype(cdt)
    pe = params["pe"][:T]

    kernel = functools.partial(
        _decoder_kernel,
        n_layers=n_layers, heads=heads, d_model=d_model, eps=eps,
        scale=math.sqrt(d_model), compute_dtype=cdt)

    def per_batch(rest):
        return pl.BlockSpec((None,) + tuple(rest),
                            lambda b: (b,) + (0,) * len(rest))

    def full(shape):
        return pl.BlockSpec(tuple(shape), lambda b: (0,) * len(shape))

    out = pl.pallas_call(
        kernel,
        out_shape=jax.ShapeDtypeStruct((B, T, d_model), jnp.float32),
        grid=(B,),
        in_specs=[
            per_batch((T, E)),                      # emb
            per_batch((S, d_model)),                # e_outputs
            per_batch((T, S)),                      # src mask (pre-expanded)
            per_batch((T, T)),                      # trg mask
            full((E, d_model)),                     # lin_w
            full((1, d_model)),                     # lin_b
            full((T, d_model)),                     # pe
            full((3 * n_layers, 1, d_model)),       # norm alphas
            full((3 * n_layers, 1, d_model)),       # norm biases
            full((8 * n_layers, d_model, d_model)), # attn weights
            full((8 * n_layers, 1, d_model)),       # attn biases
            full((n_layers, d_model, Dff)),         # ff w1
            full((n_layers, 1, Dff)),               # ff b1
            full((n_layers, Dff, d_model)),         # ff w2
            full((n_layers, 1, d_model)),           # ff b2
            full((1, d_model)),                     # final norm alpha
            full((1, d_model)),                     # final norm bias
        ],
        out_specs=per_batch((T, d_model)),
        compiler_params=pltpu.CompilerParams(
            dimension_semantics=("parallel",)),     # v7x: 2 TCs split batch
    )(emb, e_outputs, smask, tmask, lin_w, params["lin_b"], pe,
      norm_a, norm_b, attn_w, attn_b, ff_w1, ff_b1, ff_w2, ff_b2,
      params["nf_a"], params["nf_b"])
    return out


# ----------------------------------------------------------------------------
# Deterministic parameter construction + example run
# ----------------------------------------------------------------------------
def _positional_encoding(max_len, d_model):
    # Replicates the tutorial's PE formula (including its 2*(i+1) cosine quirk).
    pe = [[0.0] * d_model for _ in range(max_len)]
    for pos in range(max_len):
        for i in range(0, d_model, 2):
            pe[pos][i] = math.sin(pos / (10000 ** ((2 * i) / d_model)))
            pe[pos][i + 1] = math.cos(pos / (10000 ** ((2 * (i + 1)) / d_model)))
    return jnp.asarray(pe, dtype=jnp.float32)


def make_params(key, vocab_size, embed_dim, d_model, N, heads, d_ff, max_len):
    def nrm(k, shape, scale=0.1):
        return scale * jax.random.normal(k, shape, jnp.float32)

    keys = iter(jax.random.split(key, 8 + N * 32))
    params = {
        "embed_w": nrm(next(keys), (vocab_size, embed_dim), 1.0),
        "lin_w": nrm(next(keys), (embed_dim, d_model)),
        "lin_b": nrm(next(keys), (1, d_model)),
        "pe": _positional_encoding(max_len, d_model),
        "nf_a": 1.0 + nrm(next(keys), (1, d_model)),
        "nf_b": nrm(next(keys), (1, d_model)),
        "layers": [],
    }
    for _ in range(N):
        def attn():
            return {
                "wq": nrm(next(keys), (d_model, d_model)),
                "bq": nrm(next(keys), (1, d_model)),
                "wk": nrm(next(keys), (d_model, d_model)),
                "bk": nrm(next(keys), (1, d_model)),
                "wv": nrm(next(keys), (d_model, d_model)),
                "bv": nrm(next(keys), (1, d_model)),
                "wo": nrm(next(keys), (d_model, d_model)),
                "bo": nrm(next(keys), (1, d_model)),
            }
        layer = {
            "n1_a": 1.0 + nrm(next(keys), (1, d_model)),
            "n1_b": nrm(next(keys), (1, d_model)),
            "n2_a": 1.0 + nrm(next(keys), (1, d_model)),
            "n2_b": nrm(next(keys), (1, d_model)),
            "n3_a": 1.0 + nrm(next(keys), (1, d_model)),
            "n3_b": nrm(next(keys), (1, d_model)),
            "attn1": attn(),
            "attn2": attn(),
            "ff": {
                "w1": nrm(next(keys), (d_model, d_ff)),
                "b1": nrm(next(keys), (1, d_ff)),
                "w2": nrm(next(keys), (d_ff, d_model)),
                "b2": nrm(next(keys), (1, d_model)),
            },
        }
        params["layers"].append(layer)
    return params


if __name__ == "__main__":
    vocab_size, embed_dim, d_model = 50, 32, 32
    N, heads, d_ff = 2, 4, 128
    B, T, S = 2, 8, 8

    key = jax.random.PRNGKey(0)
    kp, kt, ke, km = jax.random.split(key, 4)

    params = make_params(kp, vocab_size, embed_dim, d_model, N, heads, d_ff,
                         max_len=T)

    trg = jax.random.randint(kt, (B, T), 0, vocab_size, dtype=jnp.int32)
    e_outputs = jax.random.normal(ke, (B, S, d_model), jnp.float32)
    # src_mask: (B, 1, S); zero out the last source position of batch 1
    src_mask = jnp.ones((B, 1, S), jnp.float32).at[1, 0, S - 1].set(0.0)
    # trg_mask: (B, T, T) causal no-peek mask
    trg_mask = jnp.broadcast_to(jnp.tril(jnp.ones((T, T), jnp.float32)), (B, T, T))

    fwd = jax.jit(functools.partial(decoder_forward, d_model=d_model, heads=heads))
    out = fwd(params, trg, e_outputs, src_mask, trg_mask)
    jax.block_until_ready(out)
    assert out.shape == (B, T, d_model)
    print("KERNEL_OK")
</pallas_src>

<mosaic_0001>
module attributes {stable_mosaic.version = 11 : i64} {
  func.func @_decoder_kernel(%arg0: i32, %arg1: memref<1x8x32xf32, #tpu.memory_space<vmem>>, %arg2: memref<1x8x32xf32, #tpu.memory_space<vmem>>, %arg3: memref<1x8x8xf32, #tpu.memory_space<vmem>>, %arg4: memref<1x8x8xf32, #tpu.memory_space<vmem>>, %arg5: memref<32x32xbf16, #tpu.memory_space<vmem>>, %arg6: memref<1x32xf32, #tpu.memory_space<vmem>>, %arg7: memref<8x32xf32, #tpu.memory_space<vmem>>, %arg8: memref<6x1x32xf32, #tpu.memory_space<vmem>>, %arg9: memref<6x1x32xf32, #tpu.memory_space<vmem>>, %arg10: memref<16x32x32xbf16, #tpu.memory_space<vmem>>, %arg11: memref<16x1x32xf32, #tpu.memory_space<vmem>>, %arg12: memref<2x32x128xbf16, #tpu.memory_space<vmem>>, %arg13: memref<2x1x128xf32, #tpu.memory_space<vmem>>, %arg14: memref<2x128x32xbf16, #tpu.memory_space<vmem>>, %arg15: memref<2x1x32xf32, #tpu.memory_space<vmem>>, %arg16: memref<1x32xf32, #tpu.memory_space<vmem>>, %arg17: memref<1x32xf32, #tpu.memory_space<vmem>>, %arg18: memref<1x8x32xf32, #tpu.memory_space<vmem>>) attributes {dimension_semantics = [#tpu.dimension_semantics<parallel>], iteration_bounds = array<i64: 2>, scalar_prefetch = 0 : i64, scratch_operands = 0 : i64, tpu.core_type = #tpu.core_type<tc>, window_params = [{transform_indices = @transform_0, window_bounds = array<i64: 1, 8, 32>}, {transform_indices = @transform_1, window_bounds = array<i64: 1, 8, 32>}, {transform_indices = @transform_2, window_bounds = array<i64: 1, 8, 8>}, {transform_indices = @transform_3, window_bounds = array<i64: 1, 8, 8>}, {pipeline_mode = #tpu.pipeline_mode<synchronous>, transform_indices = @transform_4, window_bounds = array<i64: 32, 32>}, {pipeline_mode = #tpu.pipeline_mode<synchronous>, transform_indices = @transform_5, window_bounds = array<i64: 1, 32>}, {pipeline_mode = #tpu.pipeline_mode<synchronous>, transform_indices = @transform_6, window_bounds = array<i64: 8, 32>}, {pipeline_mode = #tpu.pipeline_mode<synchronous>, transform_indices = @transform_7, window_bounds = array<i64: 6, 1, 32>}, {pipeline_mode = #tpu.pipeline_mode<synchronous>, transform_indices = @transform_8, window_bounds = array<i64: 6, 1, 32>}, {pipeline_mode = #tpu.pipeline_mode<synchronous>, transform_indices = @transform_9, window_bounds = array<i64: 16, 32, 32>}, {pipeline_mode = #tpu.pipeline_mode<synchronous>, transform_indices = @transform_10, window_bounds = array<i64: 16, 1, 32>}, {pipeline_mode = #tpu.pipeline_mode<synchronous>, transform_indices = @transform_11, window_bounds = array<i64: 2, 32, 128>}, {pipeline_mode = #tpu.pipeline_mode<synchronous>, transform_indices = @transform_12, window_bounds = array<i64: 2, 1, 128>}, {pipeline_mode = #tpu.pipeline_mode<synchronous>, transform_indices = @transform_13, window_bounds = array<i64: 2, 128, 32>}, {pipeline_mode = #tpu.pipeline_mode<synchronous>, transform_indices = @transform_14, window_bounds = array<i64: 2, 1, 32>}, {pipeline_mode = #tpu.pipeline_mode<synchronous>, transform_indices = @transform_15, window_bounds = array<i64: 1, 32>}, {pipeline_mode = #tpu.pipeline_mode<synchronous>, transform_indices = @transform_16, window_bounds = array<i64: 1, 32>}, {transform_indices = @transform_17, window_bounds = array<i64: 1, 8, 32>}]} {
    %c0 = arith.constant 0 : index
    %c0_0 = arith.constant 0 : index
    %c0_1 = arith.constant 0 : index
    %0 = vector.load %arg1[%c0, %c0_0, %c0_1] : memref<1x8x32xf32, #tpu.memory_space<vmem>>, vector<1x8x32xf32>
    %1 = vector.shape_cast %0 : vector<1x8x32xf32> to vector<8x32xf32>
    %c0_2 = arith.constant 0 : index
    %c0_3 = arith.constant 0 : index
    %2 = vector.load %arg5[%c0_2, %c0_3] : memref<32x32xbf16, #tpu.memory_space<vmem>>, vector<32x32xbf16>
    %3 = arith.truncf %1 : vector<8x32xf32> to vector<8x32xbf16>
    %cst = arith.constant dense<0.000000e+00> : vector<8x32xf32>
    %4 = tpu.matmul %3, %2, %cst {dimension_numbers = #tpu.dot_dimension_numbers<[1], [0], [0], [1], [0, 0, 1, 1], [], []>} : vector<8x32xbf16>, vector<32x32xbf16>, vector<8x32xf32> -> vector<8x32xf32>
    %c0_4 = arith.constant 0 : index
    %c0_5 = arith.constant 0 : index
    %5 = vector.load %arg6[%c0_4, %c0_5] : memref<1x32xf32, #tpu.memory_space<vmem>>, vector<1x32xf32>
    %6 = vector.broadcast %5 : vector<1x32xf32> to vector<8x32xf32>
    %7 = arith.addf %4, %6 : vector<8x32xf32>
    %8 = math.tanh %7 : vector<8x32xf32>
    %cst_6 = arith.constant 5.65685415 : f32
    %9 = vector.broadcast %cst_6 : f32 to vector<8x32xf32>
    %10 = arith.mulf %8, %9 : vector<8x32xf32>
    %c0_7 = arith.constant 0 : index
    %c0_8 = arith.constant 0 : index
    %11 = vector.load %arg7[%c0_7, %c0_8] : memref<8x32xf32, #tpu.memory_space<vmem>>, vector<8x32xf32>
    %12 = arith.addf %10, %11 : vector<8x32xf32>
    %c0_9 = arith.constant 0 : index
    %c0_10 = arith.constant 0 : index
    %c0_11 = arith.constant 0 : index
    %13 = vector.load %arg2[%c0_9, %c0_10, %c0_11] : memref<1x8x32xf32, #tpu.memory_space<vmem>>, vector<1x8x32xf32>
    %14 = vector.shape_cast %13 : vector<1x8x32xf32> to vector<8x32xf32>
    %c0_12 = arith.constant 0 : index
    %c0_13 = arith.constant 0 : index
    %c0_14 = arith.constant 0 : index
    %15 = vector.load %arg4[%c0_12, %c0_13, %c0_14] : memref<1x8x8xf32, #tpu.memory_space<vmem>>, vector<1x8x8xf32>
    %16 = vector.shape_cast %15 : vector<1x8x8xf32> to vector<8x8xf32>
    %c0_15 = arith.constant 0 : index
    %c0_16 = arith.constant 0 : index
    %c0_17 = arith.constant 0 : index
    %17 = vector.load %arg3[%c0_15, %c0_16, %c0_17] : memref<1x8x8xf32, #tpu.memory_space<vmem>>, vector<1x8x8xf32>
    %18 = vector.shape_cast %17 : vector<1x8x8xf32> to vector<8x8xf32>
    %c0_18 = arith.constant 0 : index
    %c0_19 = arith.constant 0 : index
    %c0_20 = arith.constant 0 : index
    %19 = vector.load %arg8[%c0_18, %c0_19, %c0_20] : memref<6x1x32xf32, #tpu.memory_space<vmem>>, vector<1x1x32xf32>
    %20 = vector.shape_cast %19 : vector<1x1x32xf32> to vector<1x32xf32>
    %c0_21 = arith.constant 0 : index
    %c0_22 = arith.constant 0 : index
    %c0_23 = arith.constant 0 : index
    %21 = vector.load %arg9[%c0_21, %c0_22, %c0_23] : memref<6x1x32xf32, #tpu.memory_space<vmem>>, vector<1x1x32xf32>
    %22 = vector.shape_cast %21 : vector<1x1x32xf32> to vector<1x32xf32>
    %cst_24 = arith.constant dense<0.000000e+00> : vector<8xf32>
    %23 = vector.multi_reduction <add>, %12, %cst_24 [1] : vector<8x32xf32> to vector<8xf32>
    %24 = vector.shape_cast %23 : vector<8xf32> to vector<8x1xf32>
    %cst_25 = arith.constant 3.200000e+01 : f32
    %25 = vector.broadcast %cst_25 : f32 to vector<8x1xf32>
    %26 = arith.divf %24, %25 : vector<8x1xf32>
    %27 = vector.broadcast %26 : vector<8x1xf32> to vector<8x32xf32>
    %28 = arith.subf %12, %27 : vector<8x32xf32>
    %29 = arith.mulf %28, %28 : vector<8x32xf32>
    %cst_26 = arith.constant dense<0.000000e+00> : vector<8xf32>
    %30 = vector.multi_reduction <add>, %29, %cst_26 [1] : vector<8x32xf32> to vector<8xf32>
    %31 = vector.shape_cast %30 : vector<8xf32> to vector<8x1xf32>
    %cst_27 = arith.constant 3.100000e+01 : f32
    %32 = vector.broadcast %cst_27 : f32 to vector<8x1xf32>
    %33 = arith.divf %31, %32 : vector<8x1xf32>
    %34 = math.sqrt %33 : vector<8x1xf32>
    %35 = vector.broadcast %26 : vector<8x1xf32> to vector<8x32xf32>
    %36 = arith.subf %12, %35 : vector<8x32xf32>
    %37 = vector.broadcast %20 : vector<1x32xf32> to vector<8x32xf32>
    %38 = arith.mulf %37, %36 : vector<8x32xf32>
    %cst_28 = arith.constant 9.99999997E-7 : f32
    %39 = vector.broadcast %cst_28 : f32 to vector<8x1xf32>
    %40 = arith.addf %34, %39 : vector<8x1xf32>
    %41 = tpu.reciprocal %40 {approx = true} : vector<8x1xf32> -> vector<8x1xf32>
    %42 = vector.broadcast %41 : vector<8x1xf32> to vector<8x32xf32>
    %43 = arith.mulf %38, %42 : vector<8x32xf32>
    %44 = vector.broadcast %22 : vector<1x32xf32> to vector<8x32xf32>
    %45 = arith.addf %43, %44 : vector<8x32xf32>
    %c0_29 = arith.constant 0 : index
    %c0_30 = arith.constant 0 : index
    %c0_31 = arith.constant 0 : index
    %46 = vector.load %arg10[%c0_29, %c0_30, %c0_31] : memref<16x32x32xbf16, #tpu.memory_space<vmem>>, vector<1x32x32xbf16>
    %47 = vector.shape_cast %46 : vector<1x32x32xbf16> to vector<32x32xbf16>
    %c1 = arith.constant 1 : index
    %c0_32 = arith.constant 0 : index
    %c0_33 = arith.constant 0 : index
    %48 = vector.load %arg10[%c1, %c0_32, %c0_33] : memref<16x32x32xbf16, #tpu.memory_space<vmem>>, vector<1x32x32xbf16>
    %49 = vector.shape_cast %48 : vector<1x32x32xbf16> to vector<32x32xbf16>
    %c2 = arith.constant 2 : index
    %c0_34 = arith.constant 0 : index
    %c0_35 = arith.constant 0 : index
    %50 = vector.load %arg10[%c2, %c0_34, %c0_35] : memref<16x32x32xbf16, #tpu.memory_space<vmem>>, vector<1x32x32xbf16>
    %51 = vector.shape_cast %50 : vector<1x32x32xbf16> to vector<32x32xbf16>
    %c3 = arith.constant 3 : index
    %c0_36 = arith.constant 0 : index
    %c0_37 = arith.constant 0 : index
    %52 = vector.load %arg10[%c3, %c0_36, %c0_37] : memref<16x32x32xbf16, #tpu.memory_space<vmem>>, vector<1x32x32xbf16>
    %53 = vector.shape_cast %52 : vector<1x32x32xbf16> to vector<32x32xbf16>
    %c0_38 = arith.constant 0 : index
    %c0_39 = arith.constant 0 : index
    %c0_40 = arith.constant 0 : index
    %54 = vector.load %arg11[%c0_38, %c0_39, %c0_40] : memref<16x1x32xf32, #tpu.memory_space<vmem>>, vector<1x1x32xf32>
    %55 = vector.shape_cast %54 : vector<1x1x32xf32> to vector<1x32xf32>
    %c1_41 = arith.constant 1 : index
    %c0_42 = arith.constant 0 : index
    %c0_43 = arith.constant 0 : index
    %56 = vector.load %arg11[%c1_41, %c0_42, %c0_43] : memref<16x1x32xf32, #tpu.memory_space<vmem>>, vector<1x1x32xf32>
    %57 = vector.shape_cast %56 : vector<1x1x32xf32> to vector<1x32xf32>
    %c2_44 = arith.constant 2 : index
    %c0_45 = arith.constant 0 : index
    %c0_46 = arith.constant 0 : index
    %58 = vector.load %arg11[%c2_44, %c0_45, %c0_46] : memref<16x1x32xf32, #tpu.memory_space<vmem>>, vector<1x1x32xf32>
    %59 = vector.shape_cast %58 : vector<1x1x32xf32> to vector<1x32xf32>
    %c3_47 = arith.constant 3 : index
    %c0_48 = arith.constant 0 : index
    %c0_49 = arith.constant 0 : index
    %60 = vector.load %arg11[%c3_47, %c0_48, %c0_49] : memref<16x1x32xf32, #tpu.memory_space<vmem>>, vector<1x1x32xf32>
    %61 = vector.shape_cast %60 : vector<1x1x32xf32> to vector<1x32xf32>
    %62 = arith.truncf %45 : vector<8x32xf32> to vector<8x32xbf16>
    %cst_50 = arith.constant dense<0.000000e+00> : vector<8x32xf32>
    %63 = tpu.matmul %62, %47, %cst_50 {dimension_numbers = #tpu.dot_dimension_numbers<[1], [0], [0], [1], [0, 0, 1, 1], [], []>} : vector<8x32xbf16>, vector<32x32xbf16>, vector<8x32xf32> -> vector<8x32xf32>
    %64 = vector.broadcast %55 : vector<1x32xf32> to vector<8x32xf32>
    %65 = arith.addf %63, %64 : vector<8x32xf32>
    %66 = arith.truncf %45 : vector<8x32xf32> to vector<8x32xbf16>
    %cst_51 = arith.constant dense<0.000000e+00> : vector<8x32xf32>
    %67 = tpu.matmul %66, %49, %cst_51 {dimension_numbers = #tpu.dot_dimension_numbers<[1], [0], [0], [1], [0, 0, 1, 1], [], []>} : vector<8x32xbf16>, vector<32x32xbf16>, vector<8x32xf32> -> vector<8x32xf32>
    %68 = vector.broadcast %57 : vector<1x32xf32> to vector<8x32xf32>
    %69 = arith.addf %67, %68 : vector<8x32xf32>
    %70 = arith.truncf %45 : vector<8x32xf32> to vector<8x32xbf16>
    %cst_52 = arith.constant dense<0.000000e+00> : vector<8x32xf32>
    %71 = tpu.matmul %70, %51, %cst_52 {dimension_numbers = #tpu.dot_dimension_numbers<[1], [0], [0], [1], [0, 0, 1, 1], [], []>} : vector<8x32xbf16>, vector<32x32xbf16>, vector<8x32xf32> -> vector<8x32xf32>
    %72 = vector.broadcast %59 : vector<1x32xf32> to vector<8x32xf32>
    %73 = arith.addf %71, %72 : vector<8x32xf32>
    %74 = vector.extract_strided_slice %65 {offsets = [0, 0], sizes = [8, 8], strides = [1, 1]} : vector<8x32xf32> to vector<8x8xf32>
    %75 = vector.extract_strided_slice %65 {offsets = [0, 8], sizes = [8, 8], strides = [1, 1]} : vector<8x32xf32> to vector<8x8xf32>
    %76 = vector.extract_strided_slice %65 {offsets = [0, 16], sizes = [8, 8], strides = [1, 1]} : vector<8x32xf32> to vector<8x8xf32>
    %77 = vector.extract_strided_slice %65 {offsets = [0, 24], sizes = [8, 8], strides = [1, 1]} : vector<8x32xf32> to vector<8x8xf32>
    %78 = vector.shape_cast %74 : vector<8x8xf32> to vector<1x8x8xf32>
    %79 = vector.shape_cast %75 : vector<8x8xf32> to vector<1x8x8xf32>
    %80 = vector.shape_cast %76 : vector<8x8xf32> to vector<1x8x8xf32>
    %81 = vector.shape_cast %77 : vector<8x8xf32> to vector<1x8x8xf32>
    %82 = tpu.concatenate %78, %79, %80, %81 in 0 : vector<1x8x8xf32>, vector<1x8x8xf32>, vector<1x8x8xf32>, vector<1x8x8xf32> -> vector<4x8x8xf32>
    %83 = vector.extract_strided_slice %69 {offsets = [0, 0], sizes = [8, 8], strides = [1, 1]} : vector<8x32xf32> to vector<8x8xf32>
    %84 = vector.extract_strided_slice %69 {offsets = [0, 8], sizes = [8, 8], strides = [1, 1]} : vector<8x32xf32> to vector<8x8xf32>
    %85 = vector.extract_strided_slice %69 {offsets = [0, 16], sizes = [8, 8], strides = [1, 1]} : vector<8x32xf32> to vector<8x8xf32>
    %86 = vector.extract_strided_slice %69 {offsets = [0, 24], sizes = [8, 8], strides = [1, 1]} : vector<8x32xf32> to vector<8x8xf32>
    %87 = vector.shape_cast %83 : vector<8x8xf32> to vector<1x8x8xf32>
    %88 = vector.shape_cast %84 : vector<8x8xf32> to vector<1x8x8xf32>
    %89 = vector.shape_cast %85 : vector<8x8xf32> to vector<1x8x8xf32>
    %90 = vector.shape_cast %86 : vector<8x8xf32> to vector<1x8x8xf32>
    %91 = tpu.concatenate %87, %88, %89, %90 in 0 : vector<1x8x8xf32>, vector<1x8x8xf32>, vector<1x8x8xf32>, vector<1x8x8xf32> -> vector<4x8x8xf32>
    %92 = vector.extract_strided_slice %73 {offsets = [0, 0], sizes = [8, 8], strides = [1, 1]} : vector<8x32xf32> to vector<8x8xf32>
    %93 = vector.extract_strided_slice %73 {offsets = [0, 8], sizes = [8, 8], strides = [1, 1]} : vector<8x32xf32> to vector<8x8xf32>
    %94 = vector.extract_strided_slice %73 {offsets = [0, 16], sizes = [8, 8], strides = [1, 1]} : vector<8x32xf32> to vector<8x8xf32>
    %95 = vector.extract_strided_slice %73 {offsets = [0, 24], sizes = [8, 8], strides = [1, 1]} : vector<8x32xf32> to vector<8x8xf32>
    %96 = vector.shape_cast %92 : vector<8x8xf32> to vector<1x8x8xf32>
    %97 = vector.shape_cast %93 : vector<8x8xf32> to vector<1x8x8xf32>
    %98 = vector.shape_cast %94 : vector<8x8xf32> to vector<1x8x8xf32>
    %99 = vector.shape_cast %95 : vector<8x8xf32> to vector<1x8x8xf32>
    %100 = tpu.concatenate %96, %97, %98, %99 in 0 : vector<1x8x8xf32>, vector<1x8x8xf32>, vector<1x8x8xf32>, vector<1x8x8xf32> -> vector<4x8x8xf32>
    %101 = arith.truncf %82 : vector<4x8x8xf32> to vector<4x8x8xbf16>
    %102 = arith.truncf %91 : vector<4x8x8xf32> to vector<4x8x8xbf16>
    "tpu.trace_start"() <{level = 10 : i32, message = "hqd,hkd->hqk"}> : () -> ()
    %cst_53 = arith.constant dense<0.000000e+00> : vector<4x8x8xf32>
    %103 = tpu.matmul %101, %102, %cst_53 {dimension_numbers = #tpu.dot_dimension_numbers<[2], [2], [1], [1], [0, 0, 0, 1, 1, 1], [0], [0]>} : vector<4x8x8xbf16>, vector<4x8x8xbf16>, vector<4x8x8xf32> -> vector<4x8x8xf32>
    "tpu.trace_stop"() : () -> ()
    %cst_54 = arith.constant 0.353553385 : f32
    %104 = vector.broadcast %cst_54 : f32 to vector<4x8x8xf32>
    %105 = arith.mulf %103, %104 : vector<4x8x8xf32>
    %106 = vector.shape_cast %16 : vector<8x8xf32> to vector<1x8x8xf32>
    %cst_55 = arith.constant 0.000000e+00 : f32
    %107 = vector.broadcast %cst_55 : f32 to vector<1x8x8xf32>
    %108 = arith.cmpf oeq, %106, %107 : vector<1x8x8xf32>
    %cst_56 = arith.constant -1.000000e+09 : f32
    %109 = vector.shape_cast %108 : vector<1x8x8xi1> to vector<1x8x8xi1>
    %110 = vector.broadcast %109 : vector<1x8x8xi1> to vector<4x8x8xi1>
    %111 = vector.broadcast %cst_56 : f32 to vector<4x8x8xf32>
    %112 = arith.select %110, %111, %105 : vector<4x8x8xi1>, vector<4x8x8xf32>
    %cst_57 = arith.constant dense<0xFF800000> : vector<4x8xf32>
    %113 = vector.multi_reduction <maximumf>, %112, %cst_57 [2] : vector<4x8x8xf32> to vector<4x8xf32>
    %114 = vector.shape_cast %113 : vector<4x8xf32> to vector<4x8x1xf32>
    %115 = vector.broadcast %114 : vector<4x8x1xf32> to vector<4x8x8xf32>
    %116 = arith.subf %112, %115 : vector<4x8x8xf32>
    %117 = math.exp %116 : vector<4x8x8xf32>
    %cst_58 = arith.constant dense<0.000000e+00> : vector<4x8xf32>
    %118 = vector.multi_reduction <add>, %117, %cst_58 [2] : vector<4x8x8xf32> to vector<4x8xf32>
    %119 = vector.shape_cast %118 : vector<4x8xf32> to vector<4x8x1xf32>
    %120 = tpu.reciprocal %119 {approx = true} : vector<4x8x1xf32> -> vector<4x8x1xf32>
    %121 = vector.broadcast %120 : vector<4x8x1xf32> to vector<4x8x8xf32>
    %122 = arith.mulf %117, %121 : vector<4x8x8xf32>
    %123 = arith.truncf %122 : vector<4x8x8xf32> to vector<4x8x8xbf16>
    %124 = arith.truncf %100 : vector<4x8x8xf32> to vector<4x8x8xbf16>
    "tpu.trace_start"() <{level = 10 : i32, message = "hqk,hkd->hqd"}> : () -> ()
    %cst_59 = arith.constant dense<0.000000e+00> : vector<4x8x8xf32>
    %125 = tpu.matmul %123, %124, %cst_59 {dimension_numbers = #tpu.dot_dimension_numbers<[2], [1], [1], [2], [0, 0, 0, 1, 1, 2], [0], [0]>} : vector<4x8x8xbf16>, vector<4x8x8xbf16>, vector<4x8x8xf32> -> vector<4x8x8xf32>
    "tpu.trace_stop"() : () -> ()
    %126 = vector.extract_strided_slice %125 {offsets = [0, 0, 0], sizes = [1, 8, 8], strides = [1, 1, 1]} : vector<4x8x8xf32> to vector<1x8x8xf32>
    %127 = vector.shape_cast %126 : vector<1x8x8xf32> to vector<8x8xf32>
    %128 = vector.extract_strided_slice %125 {offsets = [1, 0, 0], sizes = [1, 8, 8], strides = [1, 1, 1]} : vector<4x8x8xf32> to vector<1x8x8xf32>
    %129 = vector.shape_cast %128 : vector<1x8x8xf32> to vector<8x8xf32>
    %130 = vector.extract_strided_slice %125 {offsets = [2, 0, 0], sizes = [1, 8, 8], strides = [1, 1, 1]} : vector<4x8x8xf32> to vector<1x8x8xf32>
    %131 = vector.shape_cast %130 : vector<1x8x8xf32> to vector<8x8xf32>
    %132 = vector.extract_strided_slice %125 {offsets = [3, 0, 0], sizes = [1, 8, 8], strides = [1, 1, 1]} : vector<4x8x8xf32> to vector<1x8x8xf32>
    %133 = vector.shape_cast %132 : vector<1x8x8xf32> to vector<8x8xf32>
    %134 = tpu.concatenate %127, %129, %131, %133 in 1 : vector<8x8xf32>, vector<8x8xf32>, vector<8x8xf32>, vector<8x8xf32> -> vector<8x32xf32>
    %135 = arith.truncf %134 : vector<8x32xf32> to vector<8x32xbf16>
    %cst_60 = arith.constant dense<0.000000e+00> : vector<8x32xf32>
    %136 = tpu.matmul %135, %53, %cst_60 {dimension_numbers = #tpu.dot_dimension_numbers<[1], [0], [0], [1], [0, 0, 1, 1], [], []>} : vector<8x32xbf16>, vector<32x32xbf16>, vector<8x32xf32> -> vector<8x32xf32>
    %137 = vector.broadcast %61 : vector<1x32xf32> to vector<8x32xf32>
    %138 = arith.addf %136, %137 : vector<8x32xf32>
    %139 = arith.addf %12, %138 : vector<8x32xf32>
    %c1_61 = arith.constant 1 : index
    %c0_62 = arith.constant 0 : index
    %c0_63 = arith.constant 0 : index
    %140 = vector.load %arg8[%c1_61, %c0_62, %c0_63] : memref<6x1x32xf32, #tpu.memory_space<vmem>>, vector<1x1x32xf32>
    %141 = vector.shape_cast %140 : vector<1x1x32xf32> to vector<1x32xf32>
    %c1_64 = arith.constant 1 : index
    %c0_65 = arith.constant 0 : index
    %c0_66 = arith.constant 0 : index
    %142 = vector.load %arg9[%c1_64, %c0_65, %c0_66] : memref<6x1x32xf32, #tpu.memory_space<vmem>>, vector<1x1x32xf32>
    %143 = vector.shape_cast %142 : vector<1x1x32xf32> to vector<1x32xf32>
    %cst_67 = arith.constant dense<0.000000e+00> : vector<8xf32>
    %144 = vector.multi_reduction <add>, %139, %cst_67 [1] : vector<8x32xf32> to vector<8xf32>
    %145 = vector.shape_cast %144 : vector<8xf32> to vector<8x1xf32>
    %cst_68 = arith.constant 3.200000e+01 : f32
    %146 = vector.broadcast %cst_68 : f32 to vector<8x1xf32>
    %147 = arith.divf %145, %146 : vector<8x1xf32>
    %148 = vector.broadcast %147 : vector<8x1xf32> to vector<8x32xf32>
    %149 = arith.subf %139, %148 : vector<8x32xf32>
    %150 = arith.mulf %149, %149 : vector<8x32xf32>
    %cst_69 = arith.constant dense<0.000000e+00> : vector<8xf32>
    %151 = vector.multi_reduction <add>, %150, %cst_69 [1] : vector<8x32xf32> to vector<8xf32>
    %152 = vector.shape_cast %151 : vector<8xf32> to vector<8x1xf32>
    %cst_70 = arith.constant 3.100000e+01 : f32
    %153 = vector.broadcast %cst_70 : f32 to vector<8x1xf32>
    %154 = arith.divf %152, %153 : vector<8x1xf32>
    %155 = math.sqrt %154 : vector<8x1xf32>
    %156 = vector.broadcast %147 : vector<8x1xf32> to vector<8x32xf32>
    %157 = arith.subf %139, %156 : vector<8x32xf32>
    %158 = vector.broadcast %141 : vector<1x32xf32> to vector<8x32xf32>
    %159 = arith.mulf %158, %157 : vector<8x32xf32>
    %cst_71 = arith.constant 9.99999997E-7 : f32
    %160 = vector.broadcast %cst_71 : f32 to vector<8x1xf32>
    %161 = arith.addf %155, %160 : vector<8x1xf32>
    %162 = tpu.reciprocal %161 {approx = true} : vector<8x1xf32> -> vector<8x1xf32>
    %163 = vector.broadcast %162 : vector<8x1xf32> to vector<8x32xf32>
    %164 = arith.mulf %159, %163 : vector<8x32xf32>
    %165 = vector.broadcast %143 : vector<1x32xf32> to vector<8x32xf32>
    %166 = arith.addf %164, %165 : vector<8x32xf32>
    %c4 = arith.constant 4 : index
    %c0_72 = arith.constant 0 : index
    %c0_73 = arith.constant 0 : index
    %167 = vector.load %arg10[%c4, %c0_72, %c0_73] : memref<16x32x32xbf16, #tpu.memory_space<vmem>>, vector<1x32x32xbf16>
    %168 = vector.shape_cast %167 : vector<1x32x32xbf16> to vector<32x32xbf16>
    %c5 = arith.constant 5 : index
    %c0_74 = arith.constant 0 : index
    %c0_75 = arith.constant 0 : index
    %169 = vector.load %arg10[%c5, %c0_74, %c0_75] : memref<16x32x32xbf16, #tpu.memory_space<vmem>>, vector<1x32x32xbf16>
    %170 = vector.shape_cast %169 : vector<1x32x32xbf16> to vector<32x32xbf16>
    %c6 = arith.constant 6 : index
    %c0_76 = arith.constant 0 : index
    %c0_77 = arith.constant 0 : index
    %171 = vector.load %arg10[%c6, %c0_76, %c0_77] : memref<16x32x32xbf16, #tpu.memory_space<vmem>>, vector<1x32x32xbf16>
    %172 = vector.shape_cast %171 : vector<1x32x32xbf16> to vector<32x32xbf16>
    %c7 = arith.constant 7 : index
    %c0_78 = arith.constant 0 : index
    %c0_79 = arith.constant 0 : index
    %173 = vector.load %arg10[%c7, %c0_78, %c0_79] : memref<16x32x32xbf16, #tpu.memory_space<vmem>>, vector<1x32x32xbf16>
    %174 = vector.shape_cast %173 : vector<1x32x32xbf16> to vector<32x32xbf16>
    %c4_80 = arith.constant 4 : index
    %c0_81 = arith.constant 0 : index
    %c0_82 = arith.constant 0 : index
    %175 = vector.load %arg11[%c4_80, %c0_81, %c0_82] : memref<16x1x32xf32, #tpu.memory_space<vmem>>, vector<1x1x32xf32>
    %176 = vector.shape_cast %175 : vector<1x1x32xf32> to vector<1x32xf32>
    %c5_83 = arith.constant 5 : index
    %c0_84 = arith.constant 0 : index
    %c0_85 = arith.constant 0 : index
    %177 = vector.load %arg11[%c5_83, %c0_84, %c0_85] : memref<16x1x32xf32, #tpu.memory_space<vmem>>, vector<1x1x32xf32>
    %178 = vector.shape_cast %177 : vector<1x1x32xf32> to vector<1x32xf32>
    %c6_86 = arith.constant 6 : index
    %c0_87 = arith.constant 0 : index
    %c0_88 = arith.constant 0 : index
    %179 = vector.load %arg11[%c6_86, %c0_87, %c0_88] : memref<16x1x32xf32, #tpu.memory_space<vmem>>, vector<1x1x32xf32>
    %180 = vector.shape_cast %179 : vector<1x1x32xf32> to vector<1x32xf32>
    %c7_89 = arith.constant 7 : index
    %c0_90 = arith.constant 0 : index
    %c0_91 = arith.constant 0 : index
    %181 = vector.load %arg11[%c7_89, %c0_90, %c0_91] : memref<16x1x32xf32, #tpu.memory_space<vmem>>, vector<1x1x32xf32>
    %182 = vector.shape_cast %181 : vector<1x1x32xf32> to vector<1x32xf32>
    %183 = arith.truncf %166 : vector<8x32xf32> to vector<8x32xbf16>
    %cst_92 = arith.constant dense<0.000000e+00> : vector<8x32xf32>
    %184 = tpu.matmul %183, %168, %cst_92 {dimension_numbers = #tpu.dot_dimension_numbers<[1], [0], [0], [1], [0, 0, 1, 1], [], []>} : vector<8x32xbf16>, vector<32x32xbf16>, vector<8x32xf32> -> vector<8x32xf32>
    %185 = vector.broadcast %176 : vector<1x32xf32> to vector<8x32xf32>
    %186 = arith.addf %184, %185 : vector<8x32xf32>
    %187 = arith.truncf %14 : vector<8x32xf32> to vector<8x32xbf16>
    %cst_93 = arith.constant dense<0.000000e+00> : vector<8x32xf32>
    %188 = tpu.matmul %187, %170, %cst_93 {dimension_numbers = #tpu.dot_dimension_numbers<[1], [0], [0], [1], [0, 0, 1, 1], [], []>} : vector<8x32xbf16>, vector<32x32xbf16>, vector<8x32xf32> -> vector<8x32xf32>
    %189 = vector.broadcast %178 : vector<1x32xf32> to vector<8x32xf32>
    %190 = arith.addf %188, %189 : vector<8x32xf32>
    %191 = arith.truncf %14 : vector<8x32xf32> to vector<8x32xbf16>
    %cst_94 = arith.constant dense<0.000000e+00> : vector<8x32xf32>
    %192 = tpu.matmul %191, %172, %cst_94 {dimension_numbers = #tpu.dot_dimension_numbers<[1], [0], [0], [1], [0, 0, 1, 1], [], []>} : vector<8x32xbf16>, vector<32x32xbf16>, vector<8x32xf32> -> vector<8x32xf32>
    %193 = vector.broadcast %180 : vector<1x32xf32> to vector<8x32xf32>
    %194 = arith.addf %192, %193 : vector<8x32xf32>
    %195 = vector.extract_strided_slice %186 {offsets = [0, 0], sizes = [8, 8], strides = [1, 1]} : vector<8x32xf32> to vector<8x8xf32>
    %196 = vector.extract_strided_slice %186 {offsets = [0, 8], sizes = [8, 8], strides = [1, 1]} : vector<8x32xf32> to vector<8x8xf32>
    %197 = vector.extract_strided_slice %186 {offsets = [0, 16], sizes = [8, 8], strides = [1, 1]} : vector<8x32xf32> to vector<8x8xf32>
    %198 = vector.extract_strided_slice %186 {offsets = [0, 24], sizes = [8, 8], strides = [1, 1]} : vector<8x32xf32> to vector<8x8xf32>
    %199 = vector.shape_cast %195 : vector<8x8xf32> to vector<1x8x8xf32>
    %200 = vector.shape_cast %196 : vector<8x8xf32> to vector<1x8x8xf32>
    %201 = vector.shape_cast %197 : vector<8x8xf32> to vector<1x8x8xf32>
    %202 = vector.shape_cast %198 : vector<8x8xf32> to vector<1x8x8xf32>
    %203 = tpu.concatenate %199, %200, %201, %202 in 0 : vector<1x8x8xf32>, vector<1x8x8xf32>, vector<1x8x8xf32>, vector<1x8x8xf32> -> vector<4x8x8xf32>
    %204 = vector.extract_strided_slice %190 {offsets = [0, 0], sizes = [8, 8], strides = [1, 1]} : vector<8x32xf32> to vector<8x8xf32>
    %205 = vector.extract_strided_slice %190 {offsets = [0, 8], sizes = [8, 8], strides = [1, 1]} : vector<8x32xf32> to vector<8x8xf32>
    %206 = vector.extract_strided_slice %190 {offsets = [0, 16], sizes = [8, 8], strides = [1, 1]} : vector<8x32xf32> to vector<8x8xf32>
    %207 = vector.extract_strided_slice %190 {offsets = [0, 24], sizes = [8, 8], strides = [1, 1]} : vector<8x32xf32> to vector<8x8xf32>
    %208 = vector.shape_cast %204 : vector<8x8xf32> to vector<1x8x8xf32>
    %209 = vector.shape_cast %205 : vector<8x8xf32> to vector<1x8x8xf32>
    %210 = vector.shape_cast %206 : vector<8x8xf32> to vector<1x8x8xf32>
    %211 = vector.shape_cast %207 : vector<8x8xf32> to vector<1x8x8xf32>
    %212 = tpu.concatenate %208, %209, %210, %211 in 0 : vector<1x8x8xf32>, vector<1x8x8xf32>, vector<1x8x8xf32>, vector<1x8x8xf32> -> vector<4x8x8xf32>
    %213 = vector.extract_strided_slice %194 {offsets = [0, 0], sizes = [8, 8], strides = [1, 1]} : vector<8x32xf32> to vector<8x8xf32>
    %214 = vector.extract_strided_slice %194 {offsets = [0, 8], sizes = [8, 8], strides = [1, 1]} : vector<8x32xf32> to vector<8x8xf32>
    %215 = vector.extract_strided_slice %194 {offsets = [0, 16], sizes = [8, 8], strides = [1, 1]} : vector<8x32xf32> to vector<8x8xf32>
    %216 = vector.extract_strided_slice %194 {offsets = [0, 24], sizes = [8, 8], strides = [1, 1]} : vector<8x32xf32> to vector<8x8xf32>
    %217 = vector.shape_cast %213 : vector<8x8xf32> to vector<1x8x8xf32>
    %218 = vector.shape_cast %214 : vector<8x8xf32> to vector<1x8x8xf32>
    %219 = vector.shape_cast %215 : vector<8x8xf32> to vector<1x8x8xf32>
    %220 = vector.shape_cast %216 : vector<8x8xf32> to vector<1x8x8xf32>
    %221 = tpu.concatenate %217, %218, %219, %220 in 0 : vector<1x8x8xf32>, vector<1x8x8xf32>, vector<1x8x8xf32>, vector<1x8x8xf32> -> vector<4x8x8xf32>
    %222 = arith.truncf %203 : vector<4x8x8xf32> to vector<4x8x8xbf16>
    %223 = arith.truncf %212 : vector<4x8x8xf32> to vector<4x8x8xbf16>
    "tpu.trace_start"() <{level = 10 : i32, message = "hqd,hkd->hqk"}> : () -> ()
    %cst_95 = arith.constant dense<0.000000e+00> : vector<4x8x8xf32>
    %224 = tpu.matmul %222, %223, %cst_95 {dimension_numbers = #tpu.dot_dimension_numbers<[2], [2], [1], [1], [0, 0, 0, 1, 1, 1], [0], [0]>} : vector<4x8x8xbf16>, vector<4x8x8xbf16>, vector<4x8x8xf32> -> vector<4x8x8xf32>
    "tpu.trace_stop"() : () -> ()
    %cst_96 = arith.constant 0.353553385 : f32
    %225 = vector.broadcast %cst_96 : f32 to vector<4x8x8xf32>
    %226 = arith.mulf %224, %225 : vector<4x8x8xf32>
    %227 = vector.shape_cast %18 : vector<8x8xf32> to vector<1x8x8xf32>
    %cst_97 = arith.constant 0.000000e+00 : f32
    %228 = vector.broadcast %cst_97 : f32 to vector<1x8x8xf32>
    %229 = arith.cmpf oeq, %227, %228 : vector<1x8x8xf32>
    %cst_98 = arith.constant -1.000000e+09 : f32
    %230 = vector.shape_cast %229 : vector<1x8x8xi1> to vector<1x8x8xi1>
    %231 = vector.broadcast %230 : vector<1x8x8xi1> to vector<4x8x8xi1>
    %232 = vector.broadcast %cst_98 : f32 to vector<4x8x8xf32>
    %233 = arith.select %231, %232, %226 : vector<4x8x8xi1>, vector<4x8x8xf32>
    %cst_99 = arith.constant dense<0xFF800000> : vector<4x8xf32>
    %234 = vector.multi_reduction <maximumf>, %233, %cst_99 [2] : vector<4x8x8xf32> to vector<4x8xf32>
    %235 = vector.shape_cast %234 : vector<4x8xf32> to vector<4x8x1xf32>
    %236 = vector.broadcast %235 : vector<4x8x1xf32> to vector<4x8x8xf32>
    %237 = arith.subf %233, %236 : vector<4x8x8xf32>
    %238 = math.exp %237 : vector<4x8x8xf32>
    %cst_100 = arith.constant dense<0.000000e+00> : vector<4x8xf32>
    %239 = vector.multi_reduction <add>, %238, %cst_100 [2] : vector<4x8x8xf32> to vector<4x8xf32>
    %240 = vector.shape_cast %239 : vector<4x8xf32> to vector<4x8x1xf32>
    %241 = tpu.reciprocal %240 {approx = true} : vector<4x8x1xf32> -> vector<4x8x1xf32>
    %242 = vector.broadcast %241 : vector<4x8x1xf32> to vector<4x8x8xf32>
    %243 = arith.mulf %238, %242 : vector<4x8x8xf32>
    %244 = arith.truncf %243 : vector<4x8x8xf32> to vector<4x8x8xbf16>
    %245 = arith.truncf %221 : vector<4x8x8xf32> to vector<4x8x8xbf16>
    "tpu.trace_start"() <{level = 10 : i32, message = "hqk,hkd->hqd"}> : () -> ()
    %cst_101 = arith.constant dense<0.000000e+00> : vector<4x8x8xf32>
    %246 = tpu.matmul %244, %245, %cst_101 {dimension_numbers = #tpu.dot_dimension_numbers<[2], [1], [1], [2], [0, 0, 0, 1, 1, 2], [0], [0]>} : vector<4x8x8xbf16>, vector<4x8x8xbf16>, vector<4x8x8xf32> -> vector<4x8x8xf32>
    "tpu.trace_stop"() : () -> ()
    %247 = vector.extract_strided_slice %246 {offsets = [0, 0, 0], sizes = [1, 8, 8], strides = [1, 1, 1]} : vector<4x8x8xf32> to vector<1x8x8xf32>
    %248 = vector.shape_cast %247 : vector<1x8x8xf32> to vector<8x8xf32>
    %249 = vector.extract_strided_slice %246 {offsets = [1, 0, 0], sizes = [1, 8, 8], strides = [1, 1, 1]} : vector<4x8x8xf32> to vector<1x8x8xf32>
    %250 = vector.shape_cast %249 : vector<1x8x8xf32> to vector<8x8xf32>
    %251 = vector.extract_strided_slice %246 {offsets = [2, 0, 0], sizes = [1, 8, 8], strides = [1, 1, 1]} : vector<4x8x8xf32> to vector<1x8x8xf32>
    %252 = vector.shape_cast %251 : vector<1x8x8xf32> to vector<8x8xf32>
    %253 = vector.extract_strided_slice %246 {offsets = [3, 0, 0], sizes = [1, 8, 8], strides = [1, 1, 1]} : vector<4x8x8xf32> to vector<1x8x8xf32>
    %254 = vector.shape_cast %253 : vector<1x8x8xf32> to vector<8x8xf32>
    %255 = tpu.concatenate %248, %250, %252, %254 in 1 : vector<8x8xf32>, vector<8x8xf32>, vector<8x8xf32>, vector<8x8xf32> -> vector<8x32xf32>
    %256 = arith.truncf %255 : vector<8x32xf32> to vector<8x32xbf16>
    %cst_102 = arith.constant dense<0.000000e+00> : vector<8x32xf32>
    %257 = tpu.matmul %256, %174, %cst_102 {dimension_numbers = #tpu.dot_dimension_numbers<[1], [0], [0], [1], [0, 0, 1, 1], [], []>} : vector<8x32xbf16>, vector<32x32xbf16>, vector<8x32xf32> -> vector<8x32xf32>
    %258 = vector.broadcast %182 : vector<1x32xf32> to vector<8x32xf32>
    %259 = arith.addf %257, %258 : vector<8x32xf32>
    %260 = arith.addf %139, %259 : vector<8x32xf32>
    %c2_103 = arith.constant 2 : index
    %c0_104 = arith.constant 0 : index
    %c0_105 = arith.constant 0 : index
    %261 = vector.load %arg8[%c2_103, %c0_104, %c0_105] : memref<6x1x32xf32, #tpu.memory_space<vmem>>, vector<1x1x32xf32>
    %262 = vector.shape_cast %261 : vector<1x1x32xf32> to vector<1x32xf32>
    %c2_106 = arith.constant 2 : index
    %c0_107 = arith.constant 0 : index
    %c0_108 = arith.constant 0 : index
    %263 = vector.load %arg9[%c2_106, %c0_107, %c0_108] : memref<6x1x32xf32, #tpu.memory_space<vmem>>, vector<1x1x32xf32>
    %264 = vector.shape_cast %263 : vector<1x1x32xf32> to vector<1x32xf32>
    %cst_109 = arith.constant dense<0.000000e+00> : vector<8xf32>
    %265 = vector.multi_reduction <add>, %260, %cst_109 [1] : vector<8x32xf32> to vector<8xf32>
    %266 = vector.shape_cast %265 : vector<8xf32> to vector<8x1xf32>
    %cst_110 = arith.constant 3.200000e+01 : f32
    %267 = vector.broadcast %cst_110 : f32 to vector<8x1xf32>
    %268 = arith.divf %266, %267 : vector<8x1xf32>
    %269 = vector.broadcast %268 : vector<8x1xf32> to vector<8x32xf32>
    %270 = arith.subf %260, %269 : vector<8x32xf32>
    %271 = arith.mulf %270, %270 : vector<8x32xf32>
    %cst_111 = arith.constant dense<0.000000e+00> : vector<8xf32>
    %272 = vector.multi_reduction <add>, %271, %cst_111 [1] : vector<8x32xf32> to vector<8xf32>
    %273 = vector.shape_cast %272 : vector<8xf32> to vector<8x1xf32>
    %cst_112 = arith.constant 3.100000e+01 : f32
    %274 = vector.broadcast %cst_112 : f32 to vector<8x1xf32>
    %275 = arith.divf %273, %274 : vector<8x1xf32>
    %276 = math.sqrt %275 : vector<8x1xf32>
    %277 = vector.broadcast %268 : vector<8x1xf32> to vector<8x32xf32>
    %278 = arith.subf %260, %277 : vector<8x32xf32>
    %279 = vector.broadcast %262 : vector<1x32xf32> to vector<8x32xf32>
    %280 = arith.mulf %279, %278 : vector<8x32xf32>
    %cst_113 = arith.constant 9.99999997E-7 : f32
    %281 = vector.broadcast %cst_113 : f32 to vector<8x1xf32>
    %282 = arith.addf %276, %281 : vector<8x1xf32>
    %283 = tpu.reciprocal %282 {approx = true} : vector<8x1xf32> -> vector<8x1xf32>
    %284 = vector.broadcast %283 : vector<8x1xf32> to vector<8x32xf32>
    %285 = arith.mulf %280, %284 : vector<8x32xf32>
    %286 = vector.broadcast %264 : vector<1x32xf32> to vector<8x32xf32>
    %287 = arith.addf %285, %286 : vector<8x32xf32>
    %c0_114 = arith.constant 0 : index
    %c0_115 = arith.constant 0 : index
    %c0_116 = arith.constant 0 : index
    %288 = vector.load %arg12[%c0_114, %c0_115, %c0_116] : memref<2x32x128xbf16, #tpu.memory_space<vmem>>, vector<1x32x128xbf16>
    %289 = vector.shape_cast %288 : vector<1x32x128xbf16> to vector<32x128xbf16>
    %290 = arith.truncf %287 : vector<8x32xf32> to vector<8x32xbf16>
    %cst_117 = arith.constant dense<0.000000e+00> : vector<8x128xf32>
    %291 = tpu.matmul %290, %289, %cst_117 {dimension_numbers = #tpu.dot_dimension_numbers<[1], [0], [0], [1], [0, 0, 1, 1], [], []>} : vector<8x32xbf16>, vector<32x128xbf16>, vector<8x128xf32> -> vector<8x128xf32>
    %c0_118 = arith.constant 0 : index
    %c0_119 = arith.constant 0 : index
    %c0_120 = arith.constant 0 : index
    %292 = vector.load %arg13[%c0_118, %c0_119, %c0_120] : memref<2x1x128xf32, #tpu.memory_space<vmem>>, vector<1x1x128xf32>
    %293 = vector.shape_cast %292 : vector<1x1x128xf32> to vector<1x128xf32>
    %294 = vector.broadcast %293 : vector<1x128xf32> to vector<8x128xf32>
    %295 = arith.addf %291, %294 : vector<8x128xf32>
    %cst_121 = arith.constant 0.000000e+00 : f32
    %296 = vector.broadcast %cst_121 : f32 to vector<8x128xf32>
    %297 = arith.maximumf %295, %296 : vector<8x128xf32>
    %c0_122 = arith.constant 0 : index
    %c0_123 = arith.constant 0 : index
    %c0_124 = arith.constant 0 : index
    %298 = vector.load %arg14[%c0_122, %c0_123, %c0_124] : memref<2x128x32xbf16, #tpu.memory_space<vmem>>, vector<1x128x32xbf16>
    %299 = vector.shape_cast %298 : vector<1x128x32xbf16> to vector<128x32xbf16>
    %300 = arith.truncf %297 : vector<8x128xf32> to vector<8x128xbf16>
    %cst_125 = arith.constant dense<0.000000e+00> : vector<8x32xf32>
    %301 = tpu.matmul %300, %299, %cst_125 {dimension_numbers = #tpu.dot_dimension_numbers<[1], [0], [0], [1], [0, 0, 1, 1], [], []>} : vector<8x128xbf16>, vector<128x32xbf16>, vector<8x32xf32> -> vector<8x32xf32>
    %c0_126 = arith.constant 0 : index
    %c0_127 = arith.constant 0 : index
    %c0_128 = arith.constant 0 : index
    %302 = vector.load %arg15[%c0_126, %c0_127, %c0_128] : memref<2x1x32xf32, #tpu.memory_space<vmem>>, vector<1x1x32xf32>
    %303 = vector.shape_cast %302 : vector<1x1x32xf32> to vector<1x32xf32>
    %304 = vector.broadcast %303 : vector<1x32xf32> to vector<8x32xf32>
    %305 = arith.addf %301, %304 : vector<8x32xf32>
    %306 = arith.addf %260, %305 : vector<8x32xf32>
    %c3_129 = arith.constant 3 : index
    %c0_130 = arith.constant 0 : index
    %c0_131 = arith.constant 0 : index
    %307 = vector.load %arg8[%c3_129, %c0_130, %c0_131] : memref<6x1x32xf32, #tpu.memory_space<vmem>>, vector<1x1x32xf32>
    %308 = vector.shape_cast %307 : vector<1x1x32xf32> to vector<1x32xf32>
    %c3_132 = arith.constant 3 : index
    %c0_133 = arith.constant 0 : index
    %c0_134 = arith.constant 0 : index
    %309 = vector.load %arg9[%c3_132, %c0_133, %c0_134] : memref<6x1x32xf32, #tpu.memory_space<vmem>>, vector<1x1x32xf32>
    %310 = vector.shape_cast %309 : vector<1x1x32xf32> to vector<1x32xf32>
    %cst_135 = arith.constant dense<0.000000e+00> : vector<8xf32>
    %311 = vector.multi_reduction <add>, %306, %cst_135 [1] : vector<8x32xf32> to vector<8xf32>
    %312 = vector.shape_cast %311 : vector<8xf32> to vector<8x1xf32>
    %cst_136 = arith.constant 3.200000e+01 : f32
    %313 = vector.broadcast %cst_136 : f32 to vector<8x1xf32>
    %314 = arith.divf %312, %313 : vector<8x1xf32>
    %315 = vector.broadcast %314 : vector<8x1xf32> to vector<8x32xf32>
    %316 = arith.subf %306, %315 : vector<8x32xf32>
    %317 = arith.mulf %316, %316 : vector<8x32xf32>
    %cst_137 = arith.constant dense<0.000000e+00> : vector<8xf32>
    %318 = vector.multi_reduction <add>, %317, %cst_137 [1] : vector<8x32xf32> to vector<8xf32>
    %319 = vector.shape_cast %318 : vector<8xf32> to vector<8x1xf32>
    %cst_138 = arith.constant 3.100000e+01 : f32
    %320 = vector.broadcast %cst_138 : f32 to vector<8x1xf32>
    %321 = arith.divf %319, %320 : vector<8x1xf32>
    %322 = math.sqrt %321 : vector<8x1xf32>
    %323 = vector.broadcast %314 : vector<8x1xf32> to vector<8x32xf32>
    %324 = arith.subf %306, %323 : vector<8x32xf32>
    %325 = vector.broadcast %308 : vector<1x32xf32> to vector<8x32xf32>
    %326 = arith.mulf %325, %324 : vector<8x32xf32>
    %cst_139 = arith.constant 9.99999997E-7 : f32
    %327 = vector.broadcast %cst_139 : f32 to vector<8x1xf32>
    %328 = arith.addf %322, %327 : vector<8x1xf32>
    %329 = tpu.reciprocal %328 {approx = true} : vector<8x1xf32> -> vector<8x1xf32>
    %330 = vector.broadcast %329 : vector<8x1xf32> to vector<8x32xf32>
    %331 = arith.mulf %326, %330 : vector<8x32xf32>
    %332 = vector.broadcast %310 : vector<1x32xf32> to vector<8x32xf32>
    %333 = arith.addf %331, %332 : vector<8x32xf32>
    %c8 = arith.constant 8 : index
    %c0_140 = arith.constant 0 : index
    %c0_141 = arith.constant 0 : index
    %334 = vector.load %arg10[%c8, %c0_140, %c0_141] : memref<16x32x32xbf16, #tpu.memory_space<vmem>>, vector<1x32x32xbf16>
    %335 = vector.shape_cast %334 : vector<1x32x32xbf16> to vector<32x32xbf16>
    %c9 = arith.constant 9 : index
    %c0_142 = arith.constant 0 : index
    %c0_143 = arith.constant 0 : index
    %336 = vector.load %arg10[%c9, %c0_142, %c0_143] : memref<16x32x32xbf16, #tpu.memory_space<vmem>>, vector<1x32x32xbf16>
    %337 = vector.shape_cast %336 : vector<1x32x32xbf16> to vector<32x32xbf16>
    %c10 = arith.constant 10 : index
    %c0_144 = arith.constant 0 : index
    %c0_145 = arith.constant 0 : index
    %338 = vector.load %arg10[%c10, %c0_144, %c0_145] : memref<16x32x32xbf16, #tpu.memory_space<vmem>>, vector<1x32x32xbf16>
    %339 = vector.shape_cast %338 : vector<1x32x32xbf16> to vector<32x32xbf16>
    %c11 = arith.constant 11 : index
    %c0_146 = arith.constant 0 : index
    %c0_147 = arith.constant 0 : index
    %340 = vector.load %arg10[%c11, %c0_146, %c0_147] : memref<16x32x32xbf16, #tpu.memory_space<vmem>>, vector<1x32x32xbf16>
    %341 = vector.shape_cast %340 : vector<1x32x32xbf16> to vector<32x32xbf16>
    %c8_148 = arith.constant 8 : index
    %c0_149 = arith.constant 0 : index
    %c0_150 = arith.constant 0 : index
    %342 = vector.load %arg11[%c8_148, %c0_149, %c0_150] : memref<16x1x32xf32, #tpu.memory_space<vmem>>, vector<1x1x32xf32>
    %343 = vector.shape_cast %342 : vector<1x1x32xf32> to vector<1x32xf32>
    %c9_151 = arith.constant 9 : index
    %c0_152 = arith.constant 0 : index
    %c0_153 = arith.constant 0 : index
    %344 = vector.load %arg11[%c9_151, %c0_152, %c0_153] : memref<16x1x32xf32, #tpu.memory_space<vmem>>, vector<1x1x32xf32>
    %345 = vector.shape_cast %344 : vector<1x1x32xf32> to vector<1x32xf32>
    %c10_154 = arith.constant 10 : index
    %c0_155 = arith.constant 0 : index
    %c0_156 = arith.constant 0 : index
    %346 = vector.load %arg11[%c10_154, %c0_155, %c0_156] : memref<16x1x32xf32, #tpu.memory_space<vmem>>, vector<1x1x32xf32>
    %347 = vector.shape_cast %346 : vector<1x1x32xf32> to vector<1x32xf32>
    %c11_157 = arith.constant 11 : index
    %c0_158 = arith.constant 0 : index
    %c0_159 = arith.constant 0 : index
    %348 = vector.load %arg11[%c11_157, %c0_158, %c0_159] : memref<16x1x32xf32, #tpu.memory_space<vmem>>, vector<1x1x32xf32>
    %349 = vector.shape_cast %348 : vector<1x1x32xf32> to vector<1x32xf32>
    %350 = arith.truncf %333 : vector<8x32xf32> to vector<8x32xbf16>
    %cst_160 = arith.constant dense<0.000000e+00> : vector<8x32xf32>
    %351 = tpu.matmul %350, %335, %cst_160 {dimension_numbers = #tpu.dot_dimension_numbers<[1], [0], [0], [1], [0, 0, 1, 1], [], []>} : vector<8x32xbf16>, vector<32x32xbf16>, vector<8x32xf32> -> vector<8x32xf32>
    %352 = vector.broadcast %343 : vector<1x32xf32> to vector<8x32xf32>
    %353 = arith.addf %351, %352 : vector<8x32xf32>
    %354 = arith.truncf %333 : vector<8x32xf32> to vector<8x32xbf16>
    %cst_161 = arith.constant dense<0.000000e+00> : vector<8x32xf32>
    %355 = tpu.matmul %354, %337, %cst_161 {dimension_numbers = #tpu.dot_dimension_numbers<[1], [0], [0], [1], [0, 0, 1, 1], [], []>} : vector<8x32xbf16>, vector<32x32xbf16>, vector<8x32xf32> -> vector<8x32xf32>
    %356 = vector.broadcast %345 : vector<1x32xf32> to vector<8x32xf32>
    %357 = arith.addf %355, %356 : vector<8x32xf32>
    %358 = arith.truncf %333 : vector<8x32xf32> to vector<8x32xbf16>
    %cst_162 = arith.constant dense<0.000000e+00> : vector<8x32xf32>
    %359 = tpu.matmul %358, %339, %cst_162 {dimension_numbers = #tpu.dot_dimension_numbers<[1], [0], [0], [1], [0, 0, 1, 1], [], []>} : vector<8x32xbf16>, vector<32x32xbf16>, vector<8x32xf32> -> vector<8x32xf32>
    %360 = vector.broadcast %347 : vector<1x32xf32> to vector<8x32xf32>
    %361 = arith.addf %359, %360 : vector<8x32xf32>
    %362 = vector.extract_strided_slice %353 {offsets = [0, 0], sizes = [8, 8], strides = [1, 1]} : vector<8x32xf32> to vector<8x8xf32>
    %363 = vector.extract_strided_slice %353 {offsets = [0, 8], sizes = [8, 8], strides = [1, 1]} : vector<8x32xf32> to vector<8x8xf32>
    %364 = vector.extract_strided_slice %353 {offsets = [0, 16], sizes = [8, 8], strides = [1, 1]} : vector<8x32xf32> to vector<8x8xf32>
    %365 = vector.extract_strided_slice %353 {offsets = [0, 24], sizes = [8, 8], strides = [1, 1]} : vector<8x32xf32> to vector<8x8xf32>
    %366 = vector.shape_cast %362 : vector<8x8xf32> to vector<1x8x8xf32>
    %367 = vector.shape_cast %363 : vector<8x8xf32> to vector<1x8x8xf32>
    %368 = vector.shape_cast %364 : vector<8x8xf32> to vector<1x8x8xf32>
    %369 = vector.shape_cast %365 : vector<8x8xf32> to vector<1x8x8xf32>
    %370 = tpu.concatenate %366, %367, %368, %369 in 0 : vector<1x8x8xf32>, vector<1x8x8xf32>, vector<1x8x8xf32>, vector<1x8x8xf32> -> vector<4x8x8xf32>
    %371 = vector.extract_strided_slice %357 {offsets = [0, 0], sizes = [8, 8], strides = [1, 1]} : vector<8x32xf32> to vector<8x8xf32>
    %372 = vector.extract_strided_slice %357 {offsets = [0, 8], sizes = [8, 8], strides = [1, 1]} : vector<8x32xf32> to vector<8x8xf32>
    %373 = vector.extract_strided_slice %357 {offsets = [0, 16], sizes = [8, 8], strides = [1, 1]} : vector<8x32xf32> to vector<8x8xf32>
    %374 = vector.extract_strided_slice %357 {offsets = [0, 24], sizes = [8, 8], strides = [1, 1]} : vector<8x32xf32> to vector<8x8xf32>
    %375 = vector.shape_cast %371 : vector<8x8xf32> to vector<1x8x8xf32>
    %376 = vector.shape_cast %372 : vector<8x8xf32> to vector<1x8x8xf32>
    %377 = vector.shape_cast %373 : vector<8x8xf32> to vector<1x8x8xf32>
    %378 = vector.shape_cast %374 : vector<8x8xf32> to vector<1x8x8xf32>
    %379 = tpu.concatenate %375, %376, %377, %378 in 0 : vector<1x8x8xf32>, vector<1x8x8xf32>, vector<1x8x8xf32>, vector<1x8x8xf32> -> vector<4x8x8xf32>
    %380 = vector.extract_strided_slice %361 {offsets = [0, 0], sizes = [8, 8], strides = [1, 1]} : vector<8x32xf32> to vector<8x8xf32>
    %381 = vector.extract_strided_slice %361 {offsets = [0, 8], sizes = [8, 8], strides = [1, 1]} : vector<8x32xf32> to vector<8x8xf32>
    %382 = vector.extract_strided_slice %361 {offsets = [0, 16], sizes = [8, 8], strides = [1, 1]} : vector<8x32xf32> to vector<8x8xf32>
    %383 = vector.extract_strided_slice %361 {offsets = [0, 24], sizes = [8, 8], strides = [1, 1]} : vector<8x32xf32> to vector<8x8xf32>
    %384 = vector.shape_cast %380 : vector<8x8xf32> to vector<1x8x8xf32>
    %385 = vector.shape_cast %381 : vector<8x8xf32> to vector<1x8x8xf32>
    %386 = vector.shape_cast %382 : vector<8x8xf32> to vector<1x8x8xf32>
    %387 = vector.shape_cast %383 : vector<8x8xf32> to vector<1x8x8xf32>
    %388 = tpu.concatenate %384, %385, %386, %387 in 0 : vector<1x8x8xf32>, vector<1x8x8xf32>, vector<1x8x8xf32>, vector<1x8x8xf32> -> vector<4x8x8xf32>
    %389 = arith.truncf %370 : vector<4x8x8xf32> to vector<4x8x8xbf16>
    %390 = arith.truncf %379 : vector<4x8x8xf32> to vector<4x8x8xbf16>
    "tpu.trace_start"() <{level = 10 : i32, message = "hqd,hkd->hqk"}> : () -> ()
    %cst_163 = arith.constant dense<0.000000e+00> : vector<4x8x8xf32>
    %391 = tpu.matmul %389, %390, %cst_163 {dimension_numbers = #tpu.dot_dimension_numbers<[2], [2], [1], [1], [0, 0, 0, 1, 1, 1], [0], [0]>} : vector<4x8x8xbf16>, vector<4x8x8xbf16>, vector<4x8x8xf32> -> vector<4x8x8xf32>
    "tpu.trace_stop"() : () -> ()
    %cst_164 = arith.constant 0.353553385 : f32
    %392 = vector.broadcast %cst_164 : f32 to vector<4x8x8xf32>
    %393 = arith.mulf %391, %392 : vector<4x8x8xf32>
    %394 = vector.shape_cast %16 : vector<8x8xf32> to vector<1x8x8xf32>
    %cst_165 = arith.constant 0.000000e+00 : f32
    %395 = vector.broadcast %cst_165 : f32 to vector<1x8x8xf32>
    %396 = arith.cmpf oeq, %394, %395 : vector<1x8x8xf32>
    %cst_166 = arith.constant -1.000000e+09 : f32
    %397 = vector.shape_cast %396 : vector<1x8x8xi1> to vector<1x8x8xi1>
    %398 = vector.broadcast %397 : vector<1x8x8xi1> to vector<4x8x8xi1>
    %399 = vector.broadcast %cst_166 : f32 to vector<4x8x8xf32>
    %400 = arith.select %398, %399, %393 : vector<4x8x8xi1>, vector<4x8x8xf32>
    %cst_167 = arith.constant dense<0xFF800000> : vector<4x8xf32>
    %401 = vector.multi_reduction <maximumf>, %400, %cst_167 [2] : vector<4x8x8xf32> to vector<4x8xf32>
    %402 = vector.shape_cast %401 : vector<4x8xf32> to vector<4x8x1xf32>
    %403 = vector.broadcast %402 : vector<4x8x1xf32> to vector<4x8x8xf32>
    %404 = arith.subf %400, %403 : vector<4x8x8xf32>
    %405 = math.exp %404 : vector<4x8x8xf32>
    %cst_168 = arith.constant dense<0.000000e+00> : vector<4x8xf32>
    %406 = vector.multi_reduction <add>, %405, %cst_168 [2] : vector<4x8x8xf32> to vector<4x8xf32>
    %407 = vector.shape_cast %406 : vector<4x8xf32> to vector<4x8x1xf32>
    %408 = tpu.reciprocal %407 {approx = true} : vector<4x8x1xf32> -> vector<4x8x1xf32>
    %409 = vector.broadcast %408 : vector<4x8x1xf32> to vector<4x8x8xf32>
    %410 = arith.mulf %405, %409 : vector<4x8x8xf32>
    %411 = arith.truncf %410 : vector<4x8x8xf32> to vector<4x8x8xbf16>
    %412 = arith.truncf %388 : vector<4x8x8xf32> to vector<4x8x8xbf16>
    "tpu.trace_start"() <{level = 10 : i32, message = "hqk,hkd->hqd"}> : () -> ()
    %cst_169 = arith.constant dense<0.000000e+00> : vector<4x8x8xf32>
    %413 = tpu.matmul %411, %412, %cst_169 {dimension_numbers = #tpu.dot_dimension_numbers<[2], [1], [1], [2], [0, 0, 0, 1, 1, 2], [0], [0]>} : vector<4x8x8xbf16>, vector<4x8x8xbf16>, vector<4x8x8xf32> -> vector<4x8x8xf32>
    "tpu.trace_stop"() : () -> ()
    %414 = vector.extract_strided_slice %413 {offsets = [0, 0, 0], sizes = [1, 8, 8], strides = [1, 1, 1]} : vector<4x8x8xf32> to vector<1x8x8xf32>
    %415 = vector.shape_cast %414 : vector<1x8x8xf32> to vector<8x8xf32>
    %416 = vector.extract_strided_slice %413 {offsets = [1, 0, 0], sizes = [1, 8, 8], strides = [1, 1, 1]} : vector<4x8x8xf32> to vector<1x8x8xf32>
    %417 = vector.shape_cast %416 : vector<1x8x8xf32> to vector<8x8xf32>
    %418 = vector.extract_strided_slice %413 {offsets = [2, 0, 0], sizes = [1, 8, 8], strides = [1, 1, 1]} : vector<4x8x8xf32> to vector<1x8x8xf32>
    %419 = vector.shape_cast %418 : vector<1x8x8xf32> to vector<8x8xf32>
    %420 = vector.extract_strided_slice %413 {offsets = [3, 0, 0], sizes = [1, 8, 8], strides = [1, 1, 1]} : vector<4x8x8xf32> to vector<1x8x8xf32>
    %421 = vector.shape_cast %420 : vector<1x8x8xf32> to vector<8x8xf32>
    %422 = tpu.concatenate %415, %417, %419, %421 in 1 : vector<8x8xf32>, vector<8x8xf32>, vector<8x8xf32>, vector<8x8xf32> -> vector<8x32xf32>
    %423 = arith.truncf %422 : vector<8x32xf32> to vector<8x32xbf16>
    %cst_170 = arith.constant dense<0.000000e+00> : vector<8x32xf32>
    %424 = tpu.matmul %423, %341, %cst_170 {dimension_numbers = #tpu.dot_dimension_numbers<[1], [0], [0], [1], [0, 0, 1, 1], [], []>} : vector<8x32xbf16>, vector<32x32xbf16>, vector<8x32xf32> -> vector<8x32xf32>
    %425 = vector.broadcast %349 : vector<1x32xf32> to vector<8x32xf32>
    %426 = arith.addf %424, %425 : vector<8x32xf32>
    %427 = arith.addf %306, %426 : vector<8x32xf32>
    %c4_171 = arith.constant 4 : index
    %c0_172 = arith.constant 0 : index
    %c0_173 = arith.constant 0 : index
    %428 = vector.load %arg8[%c4_171, %c0_172, %c0_173] : memref<6x1x32xf32, #tpu.memory_space<vmem>>, vector<1x1x32xf32>
    %429 = vector.shape_cast %428 : vector<1x1x32xf32> to vector<1x32xf32>
    %c4_174 = arith.constant 4 : index
    %c0_175 = arith.constant 0 : index
    %c0_176 = arith.constant 0 : index
    %430 = vector.load %arg9[%c4_174, %c0_175, %c0_176] : memref<6x1x32xf32, #tpu.memory_space<vmem>>, vector<1x1x32xf32>
    %431 = vector.shape_cast %430 : vector<1x1x32xf32> to vector<1x32xf32>
    %cst_177 = arith.constant dense<0.000000e+00> : vector<8xf32>
    %432 = vector.multi_reduction <add>, %427, %cst_177 [1] : vector<8x32xf32> to vector<8xf32>
    %433 = vector.shape_cast %432 : vector<8xf32> to vector<8x1xf32>
    %cst_178 = arith.constant 3.200000e+01 : f32
    %434 = vector.broadcast %cst_178 : f32 to vector<8x1xf32>
    %435 = arith.divf %433, %434 : vector<8x1xf32>
    %436 = vector.broadcast %435 : vector<8x1xf32> to vector<8x32xf32>
    %437 = arith.subf %427, %436 : vector<8x32xf32>
    %438 = arith.mulf %437, %437 : vector<8x32xf32>
    %cst_179 = arith.constant dense<0.000000e+00> : vector<8xf32>
    %439 = vector.multi_reduction <add>, %438, %cst_179 [1] : vector<8x32xf32> to vector<8xf32>
    %440 = vector.shape_cast %439 : vector<8xf32> to vector<8x1xf32>
    %cst_180 = arith.constant 3.100000e+01 : f32
    %441 = vector.broadcast %cst_180 : f32 to vector<8x1xf32>
    %442 = arith.divf %440, %441 : vector<8x1xf32>
    %443 = math.sqrt %442 : vector<8x1xf32>
    %444 = vector.broadcast %435 : vector<8x1xf32> to vector<8x32xf32>
    %445 = arith.subf %427, %444 : vector<8x32xf32>
    %446 = vector.broadcast %429 : vector<1x32xf32> to vector<8x32xf32>
    %447 = arith.mulf %446, %445 : vector<8x32xf32>
    %cst_181 = arith.constant 9.99999997E-7 : f32
    %448 = vector.broadcast %cst_181 : f32 to vector<8x1xf32>
    %449 = arith.addf %443, %448 : vector<8x1xf32>
    %450 = tpu.reciprocal %449 {approx = true} : vector<8x1xf32> -> vector<8x1xf32>
    %451 = vector.broadcast %450 : vector<8x1xf32> to vector<8x32xf32>
    %452 = arith.mulf %447, %451 : vector<8x32xf32>
    %453 = vector.broadcast %431 : vector<1x32xf32> to vector<8x32xf32>
    %454 = arith.addf %452, %453 : vector<8x32xf32>
    %c12 = arith.constant 12 : index
    %c0_182 = arith.constant 0 : index
    %c0_183 = arith.constant 0 : index
    %455 = vector.load %arg10[%c12, %c0_182, %c0_183] : memref<16x32x32xbf16, #tpu.memory_space<vmem>>, vector<1x32x32xbf16>
    %456 = vector.shape_cast %455 : vector<1x32x32xbf16> to vector<32x32xbf16>
    %c13 = arith.constant 13 : index
    %c0_184 = arith.constant 0 : index
    %c0_185 = arith.constant 0 : index
    %457 = vector.load %arg10[%c13, %c0_184, %c0_185] : memref<16x32x32xbf16, #tpu.memory_space<vmem>>, vector<1x32x32xbf16>
    %458 = vector.shape_cast %457 : vector<1x32x32xbf16> to vector<32x32xbf16>
    %c14 = arith.constant 14 : index
    %c0_186 = arith.constant 0 : index
    %c0_187 = arith.constant 0 : index
    %459 = vector.load %arg10[%c14, %c0_186, %c0_187] : memref<16x32x32xbf16, #tpu.memory_space<vmem>>, vector<1x32x32xbf16>
    %460 = vector.shape_cast %459 : vector<1x32x32xbf16> to vector<32x32xbf16>
    %c15 = arith.constant 15 : index
    %c0_188 = arith.constant 0 : index
    %c0_189 = arith.constant 0 : index
    %461 = vector.load %arg10[%c15, %c0_188, %c0_189] : memref<16x32x32xbf16, #tpu.memory_space<vmem>>, vector<1x32x32xbf16>
    %462 = vector.shape_cast %461 : vector<1x32x32xbf16> to vector<32x32xbf16>
    %c12_190 = arith.constant 12 : index
    %c0_191 = arith.constant 0 : index
    %c0_192 = arith.constant 0 : index
    %463 = vector.load %arg11[%c12_190, %c0_191, %c0_192] : memref<16x1x32xf32, #tpu.memory_space<vmem>>, vector<1x1x32xf32>
    %464 = vector.shape_cast %463 : vector<1x1x32xf32> to vector<1x32xf32>
    %c13_193 = arith.constant 13 : index
    %c0_194 = arith.constant 0 : index
    %c0_195 = arith.constant 0 : index
    %465 = vector.load %arg11[%c13_193, %c0_194, %c0_195] : memref<16x1x32xf32, #tpu.memory_space<vmem>>, vector<1x1x32xf32>
    %466 = vector.shape_cast %465 : vector<1x1x32xf32> to vector<1x32xf32>
    %c14_196 = arith.constant 14 : index
    %c0_197 = arith.constant 0 : index
    %c0_198 = arith.constant 0 : index
    %467 = vector.load %arg11[%c14_196, %c0_197, %c0_198] : memref<16x1x32xf32, #tpu.memory_space<vmem>>, vector<1x1x32xf32>
    %468 = vector.shape_cast %467 : vector<1x1x32xf32> to vector<1x32xf32>
    %c15_199 = arith.constant 15 : index
    %c0_200 = arith.constant 0 : index
    %c0_201 = arith.constant 0 : index
    %469 = vector.load %arg11[%c15_199, %c0_200, %c0_201] : memref<16x1x32xf32, #tpu.memory_space<vmem>>, vector<1x1x32xf32>
    %470 = vector.shape_cast %469 : vector<1x1x32xf32> to vector<1x32xf32>
    %471 = arith.truncf %454 : vector<8x32xf32> to vector<8x32xbf16>
    %cst_202 = arith.constant dense<0.000000e+00> : vector<8x32xf32>
    %472 = tpu.matmul %471, %456, %cst_202 {dimension_numbers = #tpu.dot_dimension_numbers<[1], [0], [0], [1], [0, 0, 1, 1], [], []>} : vector<8x32xbf16>, vector<32x32xbf16>, vector<8x32xf32> -> vector<8x32xf32>
    %473 = vector.broadcast %464 : vector<1x32xf32> to vector<8x32xf32>
    %474 = arith.addf %472, %473 : vector<8x32xf32>
    %475 = arith.truncf %14 : vector<8x32xf32> to vector<8x32xbf16>
    %cst_203 = arith.constant dense<0.000000e+00> : vector<8x32xf32>
    %476 = tpu.matmul %475, %458, %cst_203 {dimension_numbers = #tpu.dot_dimension_numbers<[1], [0], [0], [1], [0, 0, 1, 1], [], []>} : vector<8x32xbf16>, vector<32x32xbf16>, vector<8x32xf32> -> vector<8x32xf32>
    %477 = vector.broadcast %466 : vector<1x32xf32> to vector<8x32xf32>
    %478 = arith.addf %476, %477 : vector<8x32xf32>
    %479 = arith.truncf %14 : vector<8x32xf32> to vector<8x32xbf16>
    %cst_204 = arith.constant dense<0.000000e+00> : vector<8x32xf32>
    %480 = tpu.matmul %479, %460, %cst_204 {dimension_numbers = #tpu.dot_dimension_numbers<[1], [0], [0], [1], [0, 0, 1, 1], [], []>} : vector<8x32xbf16>, vector<32x32xbf16>, vector<8x32xf32> -> vector<8x32xf32>
    %481 = vector.broadcast %468 : vector<1x32xf32> to vector<8x32xf32>
    %482 = arith.addf %480, %481 : vector<8x32xf32>
    %483 = vector.extract_strided_slice %474 {offsets = [0, 0], sizes = [8, 8], strides = [1, 1]} : vector<8x32xf32> to vector<8x8xf32>
    %484 = vector.extract_strided_slice %474 {offsets = [0, 8], sizes = [8, 8], strides = [1, 1]} : vector<8x32xf32> to vector<8x8xf32>
    %485 = vector.extract_strided_slice %474 {offsets = [0, 16], sizes = [8, 8], strides = [1, 1]} : vector<8x32xf32> to vector<8x8xf32>
    %486 = vector.extract_strided_slice %474 {offsets = [0, 24], sizes = [8, 8], strides = [1, 1]} : vector<8x32xf32> to vector<8x8xf32>
    %487 = vector.shape_cast %483 : vector<8x8xf32> to vector<1x8x8xf32>
    %488 = vector.shape_cast %484 : vector<8x8xf32> to vector<1x8x8xf32>
    %489 = vector.shape_cast %485 : vector<8x8xf32> to vector<1x8x8xf32>
    %490 = vector.shape_cast %486 : vector<8x8xf32> to vector<1x8x8xf32>
    %491 = tpu.concatenate %487, %488, %489, %490 in 0 : vector<1x8x8xf32>, vector<1x8x8xf32>, vector<1x8x8xf32>, vector<1x8x8xf32> -> vector<4x8x8xf32>
    %492 = vector.extract_strided_slice %478 {offsets = [0, 0], sizes = [8, 8], strides = [1, 1]} : vector<8x32xf32> to vector<8x8xf32>
    %493 = vector.extract_strided_slice %478 {offsets = [0, 8], sizes = [8, 8], strides = [1, 1]} : vector<8x32xf32> to vector<8x8xf32>
    %494 = vector.extract_strided_slice %478 {offsets = [0, 16], sizes = [8, 8], strides = [1, 1]} : vector<8x32xf32> to vector<8x8xf32>
    %495 = vector.extract_strided_slice %478 {offsets = [0, 24], sizes = [8, 8], strides = [1, 1]} : vector<8x32xf32> to vector<8x8xf32>
    %496 = vector.shape_cast %492 : vector<8x8xf32> to vector<1x8x8xf32>
    %497 = vector.shape_cast %493 : vector<8x8xf32> to vector<1x8x8xf32>
    %498 = vector.shape_cast %494 : vector<8x8xf32> to vector<1x8x8xf32>
    %499 = vector.shape_cast %495 : vector<8x8xf32> to vector<1x8x8xf32>
    %500 = tpu.concatenate %496, %497, %498, %499 in 0 : vector<1x8x8xf32>, vector<1x8x8xf32>, vector<1x8x8xf32>, vector<1x8x8xf32> -> vector<4x8x8xf32>
    %501 = vector.extract_strided_slice %482 {offsets = [0, 0], sizes = [8, 8], strides = [1, 1]} : vector<8x32xf32> to vector<8x8xf32>
    %502 = vector.extract_strided_slice %482 {offsets = [0, 8], sizes = [8, 8], strides = [1, 1]} : vector<8x32xf32> to vector<8x8xf32>
    %503 = vector.extract_strided_slice %482 {offsets = [0, 16], sizes = [8, 8], strides = [1, 1]} : vector<8x32xf32> to vector<8x8xf32>
    %504 = vector.extract_strided_slice %482 {offsets = [0, 24], sizes = [8, 8], strides = [1, 1]} : vector<8x32xf32> to vector<8x8xf32>
    %505 = vector.shape_cast %501 : vector<8x8xf32> to vector<1x8x8xf32>
    %506 = vector.shape_cast %502 : vector<8x8xf32> to vector<1x8x8xf32>
    %507 = vector.shape_cast %503 : vector<8x8xf32> to vector<1x8x8xf32>
    %508 = vector.shape_cast %504 : vector<8x8xf32> to vector<1x8x8xf32>
    %509 = tpu.concatenate %505, %506, %507, %508 in 0 : vector<1x8x8xf32>, vector<1x8x8xf32>, vector<1x8x8xf32>, vector<1x8x8xf32> -> vector<4x8x8xf32>
    %510 = arith.truncf %491 : vector<4x8x8xf32> to vector<4x8x8xbf16>
    %511 = arith.truncf %500 : vector<4x8x8xf32> to vector<4x8x8xbf16>
    "tpu.trace_start"() <{level = 10 : i32, message = "hqd,hkd->hqk"}> : () -> ()
    %cst_205 = arith.constant dense<0.000000e+00> : vector<4x8x8xf32>
    %512 = tpu.matmul %510, %511, %cst_205 {dimension_numbers = #tpu.dot_dimension_numbers<[2], [2], [1], [1], [0, 0, 0, 1, 1, 1], [0], [0]>} : vector<4x8x8xbf16>, vector<4x8x8xbf16>, vector<4x8x8xf32> -> vector<4x8x8xf32>
    "tpu.trace_stop"() : () -> ()
    %cst_206 = arith.constant 0.353553385 : f32
    %513 = vector.broadcast %cst_206 : f32 to vector<4x8x8xf32>
    %514 = arith.mulf %512, %513 : vector<4x8x8xf32>
    %515 = vector.shape_cast %18 : vector<8x8xf32> to vector<1x8x8xf32>
    %cst_207 = arith.constant 0.000000e+00 : f32
    %516 = vector.broadcast %cst_207 : f32 to vector<1x8x8xf32>
    %517 = arith.cmpf oeq, %515, %516 : vector<1x8x8xf32>
    %cst_208 = arith.constant -1.000000e+09 : f32
    %518 = vector.shape_cast %517 : vector<1x8x8xi1> to vector<1x8x8xi1>
    %519 = vector.broadcast %518 : vector<1x8x8xi1> to vector<4x8x8xi1>
    %520 = vector.broadcast %cst_208 : f32 to vector<4x8x8xf32>
    %521 = arith.select %519, %520, %514 : vector<4x8x8xi1>, vector<4x8x8xf32>
    %cst_209 = arith.constant dense<0xFF800000> : vector<4x8xf32>
    %522 = vector.multi_reduction <maximumf>, %521, %cst_209 [2] : vector<4x8x8xf32> to vector<4x8xf32>
    %523 = vector.shape_cast %522 : vector<4x8xf32> to vector<4x8x1xf32>
    %524 = vector.broadcast %523 : vector<4x8x1xf32> to vector<4x8x8xf32>
    %525 = arith.subf %521, %524 : vector<4x8x8xf32>
    %526 = math.exp %525 : vector<4x8x8xf32>
    %cst_210 = arith.constant dense<0.000000e+00> : vector<4x8xf32>
    %527 = vector.multi_reduction <add>, %526, %cst_210 [2] : vector<4x8x8xf32> to vector<4x8xf32>
    %528 = vector.shape_cast %527 : vector<4x8xf32> to vector<4x8x1xf32>
    %529 = tpu.reciprocal %528 {approx = true} : vector<4x8x1xf32> -> vector<4x8x1xf32>
    %530 = vector.broadcast %529 : vector<4x8x1xf32> to vector<4x8x8xf32>
    %531 = arith.mulf %526, %530 : vector<4x8x8xf32>
    %532 = arith.truncf %531 : vector<4x8x8xf32> to vector<4x8x8xbf16>
    %533 = arith.truncf %509 : vector<4x8x8xf32> to vector<4x8x8xbf16>
    "tpu.trace_start"() <{level = 10 : i32, message = "hqk,hkd->hqd"}> : () -> ()
    %cst_211 = arith.constant dense<0.000000e+00> : vector<4x8x8xf32>
    %534 = tpu.matmul %532, %533, %cst_211 {dimension_numbers = #tpu.dot_dimension_numbers<[2], [1], [1], [2], [0, 0, 0, 1, 1, 2], [0], [0]>} : vector<4x8x8xbf16>, vector<4x8x8xbf16>, vector<4x8x8xf32> -> vector<4x8x8xf32>
    "tpu.trace_stop"() : () -> ()
    %535 = vector.extract_strided_slice %534 {offsets = [0, 0, 0], sizes = [1, 8, 8], strides = [1, 1, 1]} : vector<4x8x8xf32> to vector<1x8x8xf32>
    %536 = vector.shape_cast %535 : vector<1x8x8xf32> to vector<8x8xf32>
    %537 = vector.extract_strided_slice %534 {offsets = [1, 0, 0], sizes = [1, 8, 8], strides = [1, 1, 1]} : vector<4x8x8xf32> to vector<1x8x8xf32>
    %538 = vector.shape_cast %537 : vector<1x8x8xf32> to vector<8x8xf32>
    %539 = vector.extract_strided_slice %534 {offsets = [2, 0, 0], sizes = [1, 8, 8], strides = [1, 1, 1]} : vector<4x8x8xf32> to vector<1x8x8xf32>
    %540 = vector.shape_cast %539 : vector<1x8x8xf32> to vector<8x8xf32>
    %541 = vector.extract_strided_slice %534 {offsets = [3, 0, 0], sizes = [1, 8, 8], strides = [1, 1, 1]} : vector<4x8x8xf32> to vector<1x8x8xf32>
    %542 = vector.shape_cast %541 : vector<1x8x8xf32> to vector<8x8xf32>
    %543 = tpu.concatenate %536, %538, %540, %542 in 1 : vector<8x8xf32>, vector<8x8xf32>, vector<8x8xf32>, vector<8x8xf32> -> vector<8x32xf32>
    %544 = arith.truncf %543 : vector<8x32xf32> to vector<8x32xbf16>
    %cst_212 = arith.constant dense<0.000000e+00> : vector<8x32xf32>
    %545 = tpu.matmul %544, %462, %cst_212 {dimension_numbers = #tpu.dot_dimension_numbers<[1], [0], [0], [1], [0, 0, 1, 1], [], []>} : vector<8x32xbf16>, vector<32x32xbf16>, vector<8x32xf32> -> vector<8x32xf32>
    %546 = vector.broadcast %470 : vector<1x32xf32> to vector<8x32xf32>
    %547 = arith.addf %545, %546 : vector<8x32xf32>
    %548 = arith.addf %427, %547 : vector<8x32xf32>
    %c5_213 = arith.constant 5 : index
    %c0_214 = arith.constant 0 : index
    %c0_215 = arith.constant 0 : index
    %549 = vector.load %arg8[%c5_213, %c0_214, %c0_215] : memref<6x1x32xf32, #tpu.memory_space<vmem>>, vector<1x1x32xf32>
    %550 = vector.shape_cast %549 : vector<1x1x32xf32> to vector<1x32xf32>
    %c5_216 = arith.constant 5 : index
    %c0_217 = arith.constant 0 : index
    %c0_218 = arith.constant 0 : index
    %551 = vector.load %arg9[%c5_216, %c0_217, %c0_218] : memref<6x1x32xf32, #tpu.memory_space<vmem>>, vector<1x1x32xf32>
    %552 = vector.shape_cast %551 : vector<1x1x32xf32> to vector<1x32xf32>
    %cst_219 = arith.constant dense<0.000000e+00> : vector<8xf32>
    %553 = vector.multi_reduction <add>, %548, %cst_219 [1] : vector<8x32xf32> to vector<8xf32>
    %554 = vector.shape_cast %553 : vector<8xf32> to vector<8x1xf32>
    %cst_220 = arith.constant 3.200000e+01 : f32
    %555 = vector.broadcast %cst_220 : f32 to vector<8x1xf32>
    %556 = arith.divf %554, %555 : vector<8x1xf32>
    %557 = vector.broadcast %556 : vector<8x1xf32> to vector<8x32xf32>
    %558 = arith.subf %548, %557 : vector<8x32xf32>
    %559 = arith.mulf %558, %558 : vector<8x32xf32>
    %cst_221 = arith.constant dense<0.000000e+00> : vector<8xf32>
    %560 = vector.multi_reduction <add>, %559, %cst_221 [1] : vector<8x32xf32> to vector<8xf32>
    %561 = vector.shape_cast %560 : vector<8xf32> to vector<8x1xf32>
    %cst_222 = arith.constant 3.100000e+01 : f32
    %562 = vector.broadcast %cst_222 : f32 to vector<8x1xf32>
    %563 = arith.divf %561, %562 : vector<8x1xf32>
    %564 = math.sqrt %563 : vector<8x1xf32>
    %565 = vector.broadcast %556 : vector<8x1xf32> to vector<8x32xf32>
    %566 = arith.subf %548, %565 : vector<8x32xf32>
    %567 = vector.broadcast %550 : vector<1x32xf32> to vector<8x32xf32>
    %568 = arith.mulf %567, %566 : vector<8x32xf32>
    %cst_223 = arith.constant 9.99999997E-7 : f32
    %569 = vector.broadcast %cst_223 : f32 to vector<8x1xf32>
    %570 = arith.addf %564, %569 : vector<8x1xf32>
    %571 = tpu.reciprocal %570 {approx = true} : vector<8x1xf32> -> vector<8x1xf32>
    %572 = vector.broadcast %571 : vector<8x1xf32> to vector<8x32xf32>
    %573 = arith.mulf %568, %572 : vector<8x32xf32>
    %574 = vector.broadcast %552 : vector<1x32xf32> to vector<8x32xf32>
    %575 = arith.addf %573, %574 : vector<8x32xf32>
    %c1_224 = arith.constant 1 : index
    %c0_225 = arith.constant 0 : index
    %c0_226 = arith.constant 0 : index
    %576 = vector.load %arg12[%c1_224, %c0_225, %c0_226] : memref<2x32x128xbf16, #tpu.memory_space<vmem>>, vector<1x32x128xbf16>
    %577 = vector.shape_cast %576 : vector<1x32x128xbf16> to vector<32x128xbf16>
    %578 = arith.truncf %575 : vector<8x32xf32> to vector<8x32xbf16>
    %cst_227 = arith.constant dense<0.000000e+00> : vector<8x128xf32>
    %579 = tpu.matmul %578, %577, %cst_227 {dimension_numbers = #tpu.dot_dimension_numbers<[1], [0], [0], [1], [0, 0, 1, 1], [], []>} : vector<8x32xbf16>, vector<32x128xbf16>, vector<8x128xf32> -> vector<8x128xf32>
    %c1_228 = arith.constant 1 : index
    %c0_229 = arith.constant 0 : index
    %c0_230 = arith.constant 0 : index
    %580 = vector.load %arg13[%c1_228, %c0_229, %c0_230] : memref<2x1x128xf32, #tpu.memory_space<vmem>>, vector<1x1x128xf32>
    %581 = vector.shape_cast %580 : vector<1x1x128xf32> to vector<1x128xf32>
    %582 = vector.broadcast %581 : vector<1x128xf32> to vector<8x128xf32>
    %583 = arith.addf %579, %582 : vector<8x128xf32>
    %cst_231 = arith.constant 0.000000e+00 : f32
    %584 = vector.broadcast %cst_231 : f32 to vector<8x128xf32>
    %585 = arith.maximumf %583, %584 : vector<8x128xf32>
    %c1_232 = arith.constant 1 : index
    %c0_233 = arith.constant 0 : index
    %c0_234 = arith.constant 0 : index
    %586 = vector.load %arg14[%c1_232, %c0_233, %c0_234] : memref<2x128x32xbf16, #tpu.memory_space<vmem>>, vector<1x128x32xbf16>
    %587 = vector.shape_cast %586 : vector<1x128x32xbf16> to vector<128x32xbf16>
    %588 = arith.truncf %585 : vector<8x128xf32> to vector<8x128xbf16>
    %cst_235 = arith.constant dense<0.000000e+00> : vector<8x32xf32>
    %589 = tpu.matmul %588, %587, %cst_235 {dimension_numbers = #tpu.dot_dimension_numbers<[1], [0], [0], [1], [0, 0, 1, 1], [], []>} : vector<8x128xbf16>, vector<128x32xbf16>, vector<8x32xf32> -> vector<8x32xf32>
    %c1_236 = arith.constant 1 : index
    %c0_237 = arith.constant 0 : index
    %c0_238 = arith.constant 0 : index
    %590 = vector.load %arg15[%c1_236, %c0_237, %c0_238] : memref<2x1x32xf32, #tpu.memory_space<vmem>>, vector<1x1x32xf32>
    %591 = vector.shape_cast %590 : vector<1x1x32xf32> to vector<1x32xf32>
    %592 = vector.broadcast %591 : vector<1x32xf32> to vector<8x32xf32>
    %593 = arith.addf %589, %592 : vector<8x32xf32>
    %594 = arith.addf %548, %593 : vector<8x32xf32>
    %c0_239 = arith.constant 0 : index
    %c0_240 = arith.constant 0 : index
    %595 = vector.load %arg16[%c0_239, %c0_240] : memref<1x32xf32, #tpu.memory_space<vmem>>, vector<1x32xf32>
    %c0_241 = arith.constant 0 : index
    %c0_242 = arith.constant 0 : index
    %596 = vector.load %arg17[%c0_241, %c0_242] : memref<1x32xf32, #tpu.memory_space<vmem>>, vector<1x32xf32>
    %cst_243 = arith.constant dense<0.000000e+00> : vector<8xf32>
    %597 = vector.multi_reduction <add>, %594, %cst_243 [1] : vector<8x32xf32> to vector<8xf32>
    %598 = vector.shape_cast %597 : vector<8xf32> to vector<8x1xf32>
    %cst_244 = arith.constant 3.200000e+01 : f32
    %599 = vector.broadcast %cst_244 : f32 to vector<8x1xf32>
    %600 = arith.divf %598, %599 : vector<8x1xf32>
    %601 = vector.broadcast %600 : vector<8x1xf32> to vector<8x32xf32>
    %602 = arith.subf %594, %601 : vector<8x32xf32>
    %603 = arith.mulf %602, %602 : vector<8x32xf32>
    %cst_245 = arith.constant dense<0.000000e+00> : vector<8xf32>
    %604 = vector.multi_reduction <add>, %603, %cst_245 [1] : vector<8x32xf32> to vector<8xf32>
    %605 = vector.shape_cast %604 : vector<8xf32> to vector<8x1xf32>
    %cst_246 = arith.constant 3.100000e+01 : f32
    %606 = vector.broadcast %cst_246 : f32 to vector<8x1xf32>
    %607 = arith.divf %605, %606 : vector<8x1xf32>
    %608 = math.sqrt %607 : vector<8x1xf32>
    %609 = vector.broadcast %600 : vector<8x1xf32> to vector<8x32xf32>
    %610 = arith.subf %594, %609 : vector<8x32xf32>
    %611 = vector.broadcast %595 : vector<1x32xf32> to vector<8x32xf32>
    %612 = arith.mulf %611, %610 : vector<8x32xf32>
    %cst_247 = arith.constant 9.99999997E-7 : f32
    %613 = vector.broadcast %cst_247 : f32 to vector<8x1xf32>
    %614 = arith.addf %608, %613 : vector<8x1xf32>
    %615 = tpu.reciprocal %614 {approx = true} : vector<8x1xf32> -> vector<8x1xf32>
    %616 = vector.broadcast %615 : vector<8x1xf32> to vector<8x32xf32>
    %617 = arith.mulf %612, %616 : vector<8x32xf32>
    %618 = vector.broadcast %596 : vector<1x32xf32> to vector<8x32xf32>
    %619 = arith.addf %617, %618 : vector<8x32xf32>
    %c0_248 = arith.constant 0 : index
    %c0_249 = arith.constant 0 : index
    %c0_250 = arith.constant 0 : index
    %620 = vector.load %arg18[%c0_248, %c0_249, %c0_250] : memref<1x8x32xf32, #tpu.memory_space<vmem>>, vector<1x8x32xf32>
    %621 = vector.shape_cast %620 : vector<1x8x32xf32> to vector<8x32xf32>
    %622 = vector.shape_cast %619 : vector<8x32xf32> to vector<1x8x32xf32>
    tpu.vector_store %arg18[%c0_248, %c0_249, %c0_250], %622 {strides = array<i32>} : memref<1x8x32xf32, #tpu.memory_space<vmem>>, vector<1x8x32xf32>,
    return
  }
  func.func @transform_0(%arg0: i32) -> (i32, i32, i32) {
    %c0_i32 = arith.constant 0 : i32
    %c0_i32_0 = arith.constant 0 : i32
    %c0_i32_1 = arith.constant 0 : i32
    return %arg0, %c0_i32, %c0_i32_0 : i32, i32, i32
  }
  func.func @transform_1(%arg0: i32) -> (i32, i32, i32) {
    %c0_i32 = arith.constant 0 : i32
    %c0_i32_0 = arith.constant 0 : i32
    %c0_i32_1 = arith.constant 0 : i32
    return %arg0, %c0_i32, %c0_i32_0 : i32, i32, i32
  }
  func.func @transform_2(%arg0: i32) -> (i32, i32, i32) {
    %c0_i32 = arith.constant 0 : i32
    %c0_i32_0 = arith.constant 0 : i32
    %c0_i32_1 = arith.constant 0 : i32
    return %arg0, %c0_i32, %c0_i32_0 : i32, i32, i32
  }
  func.func @transform_3(%arg0: i32) -> (i32, i32, i32) {
    %c0_i32 = arith.constant 0 : i32
    %c0_i32_0 = arith.constant 0 : i32
    %c0_i32_1 = arith.constant 0 : i32
    return %arg0, %c0_i32, %c0_i32_0 : i32, i32, i32
  }
  func.func @transform_4(%arg0: i32) -> (i32, i32) {
    %c0_i32 = arith.constant 0 : i32
    %c0_i32_0 = arith.constant 0 : i32
    %c0_i32_1 = arith.constant 0 : i32
    return %c0_i32, %c0_i32_0 : i32, i32
  }
  func.func @transform_5(%arg0: i32) -> (i32, i32) {
    %c0_i32 = arith.constant 0 : i32
    %c0_i32_0 = arith.constant 0 : i32
    %c0_i32_1 = arith.constant 0 : i32
    return %c0_i32, %c0_i32_0 : i32, i32
  }
  func.func @transform_6(%arg0: i32) -> (i32, i32) {
    %c0_i32 = arith.constant 0 : i32
    %c0_i32_0 = arith.constant 0 : i32
    %c0_i32_1 = arith.constant 0 : i32
    return %c0_i32, %c0_i32_0 : i32, i32
  }
  func.func @transform_7(%arg0: i32) -> (i32, i32, i32) {
    %c0_i32 = arith.constant 0 : i32
    %c0_i32_0 = arith.constant 0 : i32
    %c0_i32_1 = arith.constant 0 : i32
    %c0_i32_2 = arith.constant 0 : i32
    return %c0_i32, %c0_i32_0, %c0_i32_1 : i32, i32, i32
  }
  func.func @transform_8(%arg0: i32) -> (i32, i32, i32) {
    %c0_i32 = arith.constant 0 : i32
    %c0_i32_0 = arith.constant 0 : i32
    %c0_i32_1 = arith.constant 0 : i32
    %c0_i32_2 = arith.constant 0 : i32
    return %c0_i32, %c0_i32_0, %c0_i32_1 : i32, i32, i32
  }
  func.func @transform_9(%arg0: i32) -> (i32, i32, i32) {
    %c0_i32 = arith.constant 0 : i32
    %c0_i32_0 = arith.constant 0 : i32
    %c0_i32_1 = arith.constant 0 : i32
    %c0_i32_2 = arith.constant 0 : i32
    return %c0_i32, %c0_i32_0, %c0_i32_1 : i32, i32, i32
  }
  func.func @transform_10(%arg0: i32) -> (i32, i32, i32) {
    %c0_i32 = arith.constant 0 : i32
    %c0_i32_0 = arith.constant 0 : i32
    %c0_i32_1 = arith.constant 0 : i32
    %c0_i32_2 = arith.constant 0 : i32
    return %c0_i32, %c0_i32_0, %c0_i32_1 : i32, i32, i32
  }
  func.func @transform_11(%arg0: i32) -> (i32, i32, i32) {
    %c0_i32 = arith.constant 0 : i32
    %c0_i32_0 = arith.constant 0 : i32
    %c0_i32_1 = arith.constant 0 : i32
    %c0_i32_2 = arith.constant 0 : i32
    return %c0_i32, %c0_i32_0, %c0_i32_1 : i32, i32, i32
  }
  func.func @transform_12(%arg0: i32) -> (i32, i32, i32) {
    %c0_i32 = arith.constant 0 : i32
    %c0_i32_0 = arith.constant 0 : i32
    %c0_i32_1 = arith.constant 0 : i32
    %c0_i32_2 = arith.constant 0 : i32
    return %c0_i32, %c0_i32_0, %c0_i32_1 : i32, i32, i32
  }
  func.func @transform_13(%arg0: i32) -> (i32, i32, i32) {
    %c0_i32 = arith.constant 0 : i32
    %c0_i32_0 = arith.constant 0 : i32
    %c0_i32_1 = arith.constant 0 : i32
    %c0_i32_2 = arith.constant 0 : i32
    return %c0_i32, %c0_i32_0, %c0_i32_1 : i32, i32, i32
  }
  func.func @transform_14(%arg0: i32) -> (i32, i32, i32) {
    %c0_i32 = arith.constant 0 : i32
    %c0_i32_0 = arith.constant 0 : i32
    %c0_i32_1 = arith.constant 0 : i32
    %c0_i32_2 = arith.constant 0 : i32
    return %c0_i32, %c0_i32_0, %c0_i32_1 : i32, i32, i32
  }
  func.func @transform_15(%arg0: i32) -> (i32, i32) {
    %c0_i32 = arith.constant 0 : i32
    %c0_i32_0 = arith.constant 0 : i32
    %c0_i32_1 = arith.constant 0 : i32
    return %c0_i32, %c0_i32_0 : i32, i32
  }
  func.func @transform_16(%arg0: i32) -> (i32, i32) {
    %c0_i32 = arith.constant 0 : i32
    %c0_i32_0 = arith.constant 0 : i32
    %c0_i32_1 = arith.constant 0 : i32
    return %c0_i32, %c0_i32_0 : i32, i32
  }
  func.func @transform_17(%arg0: i32) -> (i32, i32, i32) {
    %c0_i32 = arith.constant 0 : i32
    %c0_i32_0 = arith.constant 0 : i32
    %c0_i32_1 = arith.constant 0 : i32
    return %arg0, %c0_i32, %c0_i32_0 : i32, i32, i32
  }
}

</mosaic_0001>

<llo_original>
// kernel: decoder_forward.1
$region0: #{decoder_forward.1}
  #allocation0 [shape = 'u32[]', space=smem, size = 0x4, offset = 0x4, fixed_abs, tag = 'smem constant byte address 0x4 - core index']
  #allocation1 [shape = 'u32[72,128]{1,0:T(1,128)}', space=vmem, size = 0x9000, scoped, tag = 'internal scratch']
  %s0 = inlined_call_operand.vmem [shape: f32[2,8,32], index: 0, kind: input, shape index: {}]
  %s1 = inlined_call_operand.vmem [shape: f32[2,8,32], index: 1, kind: input, shape index: {}]
  %s2 = inlined_call_operand.vmem [shape: f32[2,8,8], index: 2, kind: input, shape index: {}]
  %s3 = inlined_call_operand.vmem [shape: f32[2,8,8], index: 3, kind: input, shape index: {}]
  %s4 = inlined_call_operand.vmem [shape: bf16[32,32], index: 4, kind: input, shape index: {}]
  %s5 = inlined_call_operand.vmem [shape: f32[1,32], index: 5, kind: input, shape index: {}]
  %s6 = inlined_call_operand.vmem [shape: f32[8,32], index: 6, kind: input, shape index: {}]
  %s7 = inlined_call_operand.vmem [shape: f32[6,1,32], index: 7, kind: input, shape index: {}]
  %s8 = inlined_call_operand.vmem [shape: f32[6,1,32], index: 8, kind: input, shape index: {}]
  %s9 = inlined_call_operand.vmem [shape: bf16[16,32,32], index: 9, kind: input, shape index: {}]
  %s10 = inlined_call_operand.vmem [shape: f32[16,1,32], index: 10, kind: input, shape index: {}]
  %s11 = inlined_call_operand.vmem [shape: bf16[2,32,128], index: 11, kind: input, shape index: {}]
  %s12 = inlined_call_operand.vmem [shape: f32[2,1,128], index: 12, kind: input, shape index: {}]
  %s13 = inlined_call_operand.vmem [shape: bf16[2,128,32], index: 13, kind: input, shape index: {}]
  %s14 = inlined_call_operand.vmem [shape: f32[2,1,32], index: 14, kind: input, shape index: {}]
  %s15 = inlined_call_operand.vmem [shape: f32[1,32], index: 15, kind: input, shape index: {}]
  %s16 = inlined_call_operand.vmem [shape: f32[1,32], index: 16, kind: input, shape index: {}]
  %s17 = inlined_call_operand.hbm [shape: f32[2,8,32], index: 17, kind: output, shape index: {}]
  %s18 = sld [smem:[#allocation0]]
  $region101: #{decoder_forward.1} parent=0
    _
  %s20 = ssub.s32 1, %s18
  %s21 = scalar_select 0, %s20, %s18
  $region1: #{decoder_forward.1} parent=0
    #allocation2 [shape = 'u8[8192]{0}', space=vmem, size = 0x2000, scoped, tag = 'output window, operand 0']
    #allocation3 [shape = 's32[2]{0}', space=sflag, size = 0x8, scoped, tag = 'scoped memory for decoder_forward.1']
    %22 = vsyncpa [#allocation3], 0
    %s23 = scalar_lea.sflag [#allocation3], 1
    %24 = vsyncpa %s23, 0
    loop: start=0, step=1, limit=4
    $region2: #{decoder_forward.1} parent=1 // loop_pre_header
      _
    $region3: #{decoder_forward.1} parent=1 // loop_header
      %s26 = sphi 0, %s30
      %p27 = scmp.ge.s32.totalorder %s26, 4
      %s36 = sphi 0, %s38
      %s39 = sphi 0, %s36
      %s40 = sphi 0, %s39
      %s56 = sphi 0, %s40
      %s62 = sphi 0, %s64
      %s65 = sphi 0, %s62
      %s66 = sphi 0, %s65
      %s82 = sphi 0, %s66
      %s88 = sphi 0, %s90
      %s91 = sphi 0, %s88
      %s92 = sphi 0, %s91
      %s108 = sphi 0, %s92
      %s114 = sphi 0, %s116
      %s117 = sphi 0, %s114
      %s118 = sphi 0, %s117
      %s134 = sphi 0, %s118
      %s138 = sphi 0, %s138
      %s140 = sphi 0, %s138
      %s141 = sphi 0, %s140
      %s155 = sphi 0, %s141
      %s159 = sphi 0, %s159
      %s161 = sphi 0, %s159
      %s162 = sphi 0, %s161
      %s176 = sphi 0, %s162
      %s180 = sphi 0, %s180
      %s182 = sphi 0, %s180
      %s183 = sphi 0, %s182
      %s197 = sphi 0, %s183
      %s201 = sphi 0, %s201
      %s203 = sphi 0, %s201
      %s204 = sphi 0, %s203
      %s218 = sphi 0, %s204
      %s222 = sphi 0, %s222
      %s224 = sphi 0, %s222
      %s225 = sphi 0, %s224
      %s239 = sphi 0, %s225
      %s243 = sphi 0, %s243
      %s245 = sphi 0, %s243
      %s246 = sphi 0, %s245
      %s260 = sphi 0, %s246
      %s264 = sphi 0, %s264
      %s266 = sphi 0, %s264
      %s267 = sphi 0, %s266
      %s281 = sphi 0, %s267
      %s285 = sphi 0, %s285
      %s287 = sphi 0, %s285
      %s288 = sphi 0, %s287
      %s302 = sphi 0, %s288
      %s306 = sphi 0, %s306
      %s308 = sphi 0, %s306
      %s309 = sphi 0, %s308
      %s323 = sphi 0, %s309
      %s327 = sphi 0, %s327
      %s329 = sphi 0, %s327
      %s330 = sphi 0, %s329
      %s344 = sphi 0, %s330
      %s348 = sphi 0, %s348
      %s350 = sphi 0, %s348
      %s351 = sphi 0, %s350
      %s365 = sphi 0, %s351
      %s369 = sphi 0, %s369
      %s371 = sphi 0, %s369
      %s372 = sphi 0, %s371
      %s386 = sphi 0, %s372
      %s390 = sphi 0, %s390
      %s392 = sphi 0, %s390
      %s393 = sphi 0, %s392
      %s407 = sphi 0, %s393
      %s413 = sphi 0, %s415
      %s416 = sphi 0, %s413
      %s417 = sphi 0, %s416
      %s433 = sphi 0, %s417
    $region4: #{decoder_forward.1} parent=1 // loop_header_branch
      %29 = sbr.rel (%p27) target = $region8
    $region5: #{decoder_forward.1} parent=1 // loop_body
      %s31 = ssub.s32 %s26, 1
      %s32 = ssub.s32 %s26, 2
      %s33 = sadd.s32 %s26, 1
      %s34 = ssub.s32 %s26, %s33
      %p35 = scmp.eq.s32.totalorder %s34, 0
      %s37 = sadd.s32 %s36, 1
      %s38 = scalar_select %p35, %s36, %s37
      %p41 = pneg %p35
      %p42 = scmp.eq.s32.totalorder %s26, 1
      %p43 = por %p41, %p42
      %p44 = scmp.ne.s32.totalorder %s36, %s39
      %p45 = scmp.eq.s32.totalorder %s26, 0
      %p46 = por %p44, %p45
      %p47 = scmp.ne.s32.totalorder %s36, %s39
      %p48 = scmp.eq.s32.totalorder %s31, 1
      %p49 = por %p47, %p48
      %p50 = scmp.ne.s32.totalorder %s39, %s40
      %p51 = scmp.eq.s32.totalorder %s31, 0
      %p52 = por %p50, %p51
      %p53 = scmp.ne.s32.totalorder %s39, %s40
      %p54 = scmp.eq.s32.totalorder %s32, 1
      %p55 = por %p53, %p54
      %p57 = scmp.ne.s32.totalorder %s40, %s56
      %p58 = scmp.eq.s32.totalorder %s32, 0
      %p59 = por %p57, %p58
      %s60 = ssub.s32 %s26, %s33
      %p61 = scmp.eq.s32.totalorder %s60, 0
      %s63 = sadd.s32 %s62, 1
      %s64 = scalar_select %p61, %s62, %s63
      %p67 = pneg %p61
      %p68 = scmp.eq.s32.totalorder %s26, 1
      %p69 = por %p67, %p68
      %p70 = scmp.ne.s32.totalorder %s62, %s65
      %p71 = scmp.eq.s32.totalorder %s26, 0
      %p72 = por %p70, %p71
      %p73 = scmp.ne.s32.totalorder %s62, %s65
      %p74 = scmp.eq.s32.totalorder %s31, 1
      %p75 = por %p73, %p74
      %p76 = scmp.ne.s32.totalorder %s65, %s66
      %p77 = scmp.eq.s32.totalorder %s31, 0
      %p78 = por %p76, %p77
      %p79 = scmp.ne.s32.totalorder %s65, %s66
      %p80 = scmp.eq.s32.totalorder %s32, 1
      %p81 = por %p79, %p80
      %p83 = scmp.ne.s32.totalorder %s66, %s82
      %p84 = scmp.eq.s32.totalorder %s32, 0
      %p85 = por %p83, %p84
      %s86 = ssub.s32 %s26, %s33
      %p87 = scmp.eq.s32.totalorder %s86, 0
      %s89 = sadd.s32 %s88, 1
      %s90 = scalar_select %p87, %s88, %s89
      %p93 = pneg %p87
      %p94 = scmp.eq.s32.totalorder %s26, 1
      %p95 = por %p93, %p94
      %p96 = scmp.ne.s32.totalorder %s88, %s91
      %p97 = scmp.eq.s32.totalorder %s26, 0
      %p98 = por %p96, %p97
      %p99 = scmp.ne.s32.totalorder %s88, %s91
      %p100 = scmp.eq.s32.totalorder %s31, 1
      %p101 = por %p99, %p100
      %p102 = scmp.ne.s32.totalorder %s91, %s92
      %p103 = scmp.eq.s32.totalorder %s31, 0
      %p104 = por %p102, %p103
      %p105 = scmp.ne.s32.totalorder %s91, %s92
      %p106 = scmp.eq.s32.totalorder %s32, 1
      %p107 = por %p105, %p106
      %p109 = scmp.ne.s32.totalorder %s92, %s108
      %p110 = scmp.eq.s32.totalorder %s32, 0
      %p111 = por %p109, %p110
      %s112 = ssub.s32 %s26, %s33
      %p113 = scmp.eq.s32.totalorder %s112, 0
      %s115 = sadd.s32 %s114, 1
      %s116 = scalar_select %p113, %s114, %s115
      %p119 = pneg %p113
      %p120 = scmp.eq.s32.totalorder %s26, 1
      %p121 = por %p119, %p120
      %p122 = scmp.ne.s32.totalorder %s114, %s117
      %p123 = scmp.eq.s32.totalorder %s26, 0
      %p124 = por %p122, %p123
      %p125 = scmp.ne.s32.totalorder %s114, %s117
      %p126 = scmp.eq.s32.totalorder %s31, 1
      %p127 = por %p125, %p126
      %p128 = scmp.ne.s32.totalorder %s117, %s118
      %p129 = scmp.eq.s32.totalorder %s31, 0
      %p130 = por %p128, %p129
      %p131 = scmp.ne.s32.totalorder %s117, %s118
      %p132 = scmp.eq.s32.totalorder %s32, 1
      %p133 = por %p131, %p132
      %p135 = scmp.ne.s32.totalorder %s118, %s134
      %p136 = scmp.eq.s32.totalorder %s32, 0
      %p137 = por %p135, %p136
      %s139 = sadd.s32 %s138, 1
      %p142 = scmp.eq.s32.totalorder %s26, 1
      %p143 = scmp.ne.s32.totalorder %s138, %s140
      %p144 = scmp.eq.s32.totalorder %s26, 0
      %p145 = por %p143, %p144
      %p146 = scmp.ne.s32.totalorder %s138, %s140
      %p147 = scmp.eq.s32.totalorder %s31, 1
      %p148 = por %p146, %p147
      %p149 = scmp.ne.s32.totalorder %s140, %s141
      %p150 = scmp.eq.s32.totalorder %s31, 0
      %p151 = por %p149, %p150
      %p152 = scmp.ne.s32.totalorder %s140, %s141
      %p153 = scmp.eq.s32.totalorder %s32, 1
      %p154 = por %p152, %p153
      %p156 = scmp.ne.s32.totalorder %s141, %s155
      %p157 = scmp.eq.s32.totalorder %s32, 0
      %p158 = por %p156, %p157
      %s160 = sadd.s32 %s159, 1
      %p163 = scmp.eq.s32.totalorder %s26, 1
      %p164 = scmp.ne.s32.totalorder %s159, %s161
      %p165 = scmp.eq.s32.totalorder %s26, 0
      %p166 = por %p164, %p165
      %p167 = scmp.ne.s32.totalorder %s159, %s161
      %p168 = scmp.eq.s32.totalorder %s31, 1
      %p169 = por %p167, %p168
      %p170 = scmp.ne.s32.totalorder %s161, %s162
      %p171 = scmp.eq.s32.totalorder %s31, 0
      %p172 = por %p170, %p171
      %p173 = scmp.ne.s32.totalorder %s161, %s162
      %p174 = scmp.eq.s32.totalorder %s32, 1
      %p175 = por %p173, %p174
      %p177 = scmp.ne.s32.totalorder %s162, %s176
      %p178 = scmp.eq.s32.totalorder %s32, 0
      %p179 = por %p177, %p178
      %s181 = sadd.s32 %s180, 1
      %p184 = scmp.eq.s32.totalorder %s26, 1
      %p185 = scmp.ne.s32.totalorder %s180, %s182
      %p186 = scmp.eq.s32.totalorder %s26, 0
      %p187 = por %p185, %p186
      %p188 = scmp.ne.s32.totalorder %s180, %s182
      %p189 = scmp.eq.s32.totalorder %s31, 1
      %p190 = por %p188, %p189
      %p191 = scmp.ne.s32.totalorder %s182, %s183
      %p192 = scmp.eq.s32.totalorder %s31, 0
      %p193 = por %p191, %p192
      %p194 = scmp.ne.s32.totalorder %s182, %s183
      %p195 = scmp.eq.s32.totalorder %s32, 1
      %p196 = por %p194, %p195
      %p198 = scmp.ne.s32.totalorder %s183, %s197
      %p199 = scmp.eq.s32.totalorder %s32, 0
      %p200 = por %p198, %p199
      %s202 = sadd.s32 %s201, 1
      %p205 = scmp.eq.s32.totalorder %s26, 1
      %p206 = scmp.ne.s32.totalorder %s201, %s203
      %p207 = scmp.eq.s32.totalorder %s26, 0
      %p208 = por %p206, %p207
      %p209 = scmp.ne.s32.totalorder %s201, %s203
      %p210 = scmp.eq.s32.totalorder %s31, 1
      %p211 = por %p209, %p210
      %p212 = scmp.ne.s32.totalorder %s203, %s204
      %p213 = scmp.eq.s32.totalorder %s31, 0
      %p214 = por %p212, %p213
      %p215 = scmp.ne.s32.totalorder %s203, %s204
      %p216 = scmp.eq.s32.totalorder %s32, 1
      %p217 = por %p215, %p216
      %p219 = scmp.ne.s32.totalorder %s204, %s218
      %p220 = scmp.eq.s32.totalorder %s32, 0
      %p221 = por %p219, %p220
      %s223 = sadd.s32 %s222, 1
      %p226 = scmp.eq.s32.totalorder %s26, 1
      %p227 = scmp.ne.s32.totalorder %s222, %s224
      %p228 = scmp.eq.s32.totalorder %s26, 0
      %p229 = por %p227, %p228
      %p230 = scmp.ne.s32.totalorder %s222, %s224
      %p231 = scmp.eq.s32.totalorder %s31, 1
      %p232 = por %p230, %p231
      %p233 = scmp.ne.s32.totalorder %s224, %s225
      %p234 = scmp.eq.s32.totalorder %s31, 0
      %p235 = por %p233, %p234
      %p236 = scmp.ne.s32.totalorder %s224, %s225
      %p237 = scmp.eq.s32.totalorder %s32, 1
      %p238 = por %p236, %p237
      %p240 = scmp.ne.s32.totalorder %s225, %s239
      %p241 = scmp.eq.s32.totalorder %s32, 0
      %p242 = por %p240, %p241
      %s244 = sadd.s32 %s243, 1
      %p247 = scmp.eq.s32.totalorder %s26, 1
      %p248 = scmp.ne.s32.totalorder %s243, %s245
      %p249 = scmp.eq.s32.totalorder %s26, 0
      %p250 = por %p248, %p249
      %p251 = scmp.ne.s32.totalorder %s243, %s245
      %p252 = scmp.eq.s32.totalorder %s31, 1
      %p253 = por %p251, %p252
      %p254 = scmp.ne.s32.totalorder %s245, %s246
      %p255 = scmp.eq.s32.totalorder %s31, 0
      %p256 = por %p254, %p255
      %p257 = scmp.ne.s32.totalorder %s245, %s246
      %p258 = scmp.eq.s32.totalorder %s32, 1
      %p259 = por %p257, %p258
      %p261 = scmp.ne.s32.totalorder %s246, %s260
      %p262 = scmp.eq.s32.totalorder %s32, 0
      %p263 = por %p261, %p262
      %s265 = sadd.s32 %s264, 1
      %p268 = scmp.eq.s32.totalorder %s26, 1
      %p269 = scmp.ne.s32.totalorder %s264, %s266
      %p270 = scmp.eq.s32.totalorder %s26, 0
      %p271 = por %p269, %p270
      %p272 = scmp.ne.s32.totalorder %s264, %s266
      %p273 = scmp.eq.s32.totalorder %s31, 1
      %p274 = por %p272, %p273
      %p275 = scmp.ne.s32.totalorder %s266, %s267
      %p276 = scmp.eq.s32.totalorder %s31, 0
      %p277 = por %p275, %p276
      %p278 = scmp.ne.s32.totalorder %s266, %s267
      %p279 = scmp.eq.s32.totalorder %s32, 1
      %p280 = por %p278, %p279
      %p282 = scmp.ne.s32.totalorder %s267, %s281
      %p283 = scmp.eq.s32.totalorder %s32, 0
      %p284 = por %p282, %p283
      %s286 = sadd.s32 %s285, 1
      %p289 = scmp.eq.s32.totalorder %s26, 1
      %p290 = scmp.ne.s32.totalorder %s285, %s287
      %p291 = scmp.eq.s32.totalorder %s26, 0
      %p292 = por %p290, %p291
      %p293 = scmp.ne.s32.totalorder %s285, %s287
      %p294 = scmp.eq.s32.totalorder %s31, 1
      %p295 = por %p293, %p294
      %p296 = scmp.ne.s32.totalorder %s287, %s288
      %p297 = scmp.eq.s32.totalorder %s31, 0
      %p298 = por %p296, %p297
      %p299 = scmp.ne.s32.totalorder %s287, %s288
      %p300 = scmp.eq.s32.totalorder %s32, 1
      %p301 = por %p299, %p300
      %p303 = scmp.ne.s32.totalorder %s288, %s302
      %p304 = scmp.eq.s32.totalorder %s32, 0
      %p305 = por %p303, %p304
      %s307 = sadd.s32 %s306, 1
      %p310 = scmp.eq.s32.totalorder %s26, 1
      %p311 = scmp.ne.s32.totalorder %s306, %s308
      %p312 = scmp.eq.s32.totalorder %s26, 0
      %p313 = por %p311, %p312
      %p314 = scmp.ne.s32.totalorder %s306, %s308
      %p315 = scmp.eq.s32.totalorder %s31, 1
      %p316 = por %p314, %p315
      %p317 = scmp.ne.s32.totalorder %s308, %s309
      %p318 = scmp.eq.s32.totalorder %s31, 0
      %p319 = por %p317, %p318
      %p320 = scmp.ne.s32.totalorder %s308, %s309
      %p321 = scmp.eq.s32.totalorder %s32, 1
      %p322 = por %p320, %p321
      %p324 = scmp.ne.s32.totalorder %s309, %s323
      %p325 = scmp.eq.s32.totalorder %s32, 0
      %p326 = por %p324, %p325
      %s328 = sadd.s32 %s327, 1
      %p331 = scmp.eq.s32.totalorder %s26, 1
      %p332 = scmp.ne.s32.totalorder %s327, %s329
      %p333 = scmp.eq.s32.totalorder %s26, 0
      %p334 = por %p332, %p333
      %p335 = scmp.ne.s32.totalorder %s327, %s329
      %p336 = scmp.eq.s32.totalorder %s31, 1
      %p337 = por %p335, %p336
      %p338 = scmp.ne.s32.totalorder %s329, %s330
      %p339 = scmp.eq.s32.totalorder %s31, 0
      %p340 = por %p338, %p339
      %p341 = scmp.ne.s32.totalorder %s329, %s330
      %p342 = scmp.eq.s32.totalorder %s32, 1
      %p343 = por %p341, %p342
      %p345 = scmp.ne.s32.totalorder %s330, %s344
      %p346 = scmp.eq.s32.totalorder %s32, 0
      %p347 = por %p345, %p346
      %s349 = sadd.s32 %s348, 1
      %p352 = scmp.eq.s32.totalorder %s26, 1
      %p353 = scmp.ne.s32.totalorder %s348, %s350
      %p354 = scmp.eq.s32.totalorder %s26, 0
      %p355 = por %p353, %p354
      %p356 = scmp.ne.s32.totalorder %s348, %s350
      %p357 = scmp.eq.s32.totalorder %s31, 1
      %p358 = por %p356, %p357
      %p359 = scmp.ne.s32.totalorder %s350, %s351
      %p360 = scmp.eq.s32.totalorder %s31, 0
      %p361 = por %p359, %p360
      %p362 = scmp.ne.s32.totalorder %s350, %s351
      %p363 = scmp.eq.s32.totalorder %s32, 1
      %p364 = por %p362, %p363
      %p366 = scmp.ne.s32.totalorder %s351, %s365
      %p367 = scmp.eq.s32.totalorder %s32, 0
      %p368 = por %p366, %p367
      %s370 = sadd.s32 %s369, 1
      %p373 = scmp.eq.s32.totalorder %s26, 1
      %p374 = scmp.ne.s32.totalorder %s369, %s371
      %p375 = scmp.eq.s32.totalorder %s26, 0
      %p376 = por %p374, %p375
      %p377 = scmp.ne.s32.totalorder %s369, %s371
      %p378 = scmp.eq.s32.totalorder %s31, 1
      %p379 = por %p377, %p378
      %p380 = scmp.ne.s32.totalorder %s371, %s372
      %p381 = scmp.eq.s32.totalorder %s31, 0
      %p382 = por %p380, %p381
      %p383 = scmp.ne.s32.totalorder %s371, %s372
      %p384 = scmp.eq.s32.totalorder %s32, 1
      %p385 = por %p383, %p384
      %p387 = scmp.ne.s32.totalorder %s372, %s386
      %p388 = scmp.eq.s32.totalorder %s32, 0
      %p389 = por %p387, %p388
      %s391 = sadd.s32 %s390, 1
      %p394 = scmp.eq.s32.totalorder %s26, 1
      %p395 = scmp.ne.s32.totalorder %s390, %s392
      %p396 = scmp.eq.s32.totalorder %s26, 0
      %p397 = por %p395, %p396
      %p398 = scmp.ne.s32.totalorder %s390, %s392
      %p399 = scmp.eq.s32.totalorder %s31, 1
      %p400 = por %p398, %p399
      %p401 = scmp.ne.s32.totalorder %s392, %s393
      %p402 = scmp.eq.s32.totalorder %s31, 0
      %p403 = por %p401, %p402
      %p404 = scmp.ne.s32.totalorder %s392, %s393
      %p405 = scmp.eq.s32.totalorder %s32, 1
      %p406 = por %p404, %p405
      %p408 = scmp.ne.s32.totalorder %s393, %s407
      %p409 = scmp.eq.s32.totalorder %s32, 0
      %p410 = por %p408, %p409
      %s411 = ssub.s32 %s26, %s33
      %p412 = scmp.eq.s32.totalorder %s411, 0
      %s414 = sadd.s32 %s413, 1
      %s415 = scalar_select %p412, %s413, %s414
      %p418 = pneg %p412
      %p419 = scmp.eq.s32.totalorder %s26, 1
      %p420 = por %p418, %p419
      %p421 = scmp.ne.s32.totalorder %s413, %s416
      %p422 = scmp.eq.s32.totalorder %s26, 0
      %p423 = por %p421, %p422
      %p424 = scmp.ne.s32.totalorder %s413, %s416
      %p425 = scmp.eq.s32.totalorder %s31, 1
      %p426 = por %p424, %p425
      %p427 = scmp.ne.s32.totalorder %s416, %s417
      %p428 = scmp.eq.s32.totalorder %s31, 0
      %p429 = por %p427, %p428
      %p430 = scmp.ne.s32.totalorder %s416, %s417
      %p431 = scmp.eq.s32.totalorder %s32, 1
      %p432 = por %p430, %p431
      %p434 = scmp.ne.s32.totalorder %s417, %s433
      %p435 = scmp.eq.s32.totalorder %s32, 0
      %p436 = por %p434, %p435
      %p437 = scmp.le.s32.totalorder 1, %s26
      %p438 = scmp.lt.s32.totalorder %s26, 3
      %p439 = pnand %p437, %p438
      %p440 = pneg %p439
      // Predicated region
      $region9: #{decoder_forward.1} parent=5 // pred_check
        _
      $region10: #{decoder_forward.1} parent=5 // pred_check_branch
        %442 = sbr.rel (%p439) target = $region12
      $region11: #{decoder_forward.1} parent=5 // pred_region
        %s443 = ssub.s32 %s26, 1
        // Predicated region
        $region13: #{decoder_forward.1} parent=11 // pred_check
          %p444 = pneg %p151
        $region14: #{decoder_forward.1} parent=11 // pred_check_branch
          %446 = sbr.rel (%p444) target = $region16
        $region15: #{decoder_forward.1} parent=11 // pred_region
          _
        $region16: #{decoder_forward.1} parent=11 // pred_fallthru
          _
        // Predicated region
        $region17: #{decoder_forward.1} parent=11 // pred_check
          %p447 = pneg %p172
        $region18: #{decoder_forward.1} parent=11 // pred_check_branch
          %449 = sbr.rel (%p447) target = $region20
        $region19: #{decoder_forward.1} parent=11 // pred_region
          _
        $region20: #{decoder_forward.1} parent=11 // pred_fallthru
          _
        // Predicated region
        $region21: #{decoder_forward.1} parent=11 // pred_check
          %p450 = pneg %p193
        $region22: #{decoder_forward.1} parent=11 // pred_check_branch
          %452 = sbr.rel (%p450) target = $region24
        $region23: #{decoder_forward.1} parent=11 // pred_region
          _
        $region24: #{decoder_forward.1} parent=11 // pred_fallthru
          _
        // Predicated region
        $region25: #{decoder_forward.1} parent=11 // pred_check
          %p453 = pneg %p214
        $region26: #{decoder_forward.1} parent=11 // pred_check_branch
          %455 = sbr.rel (%p453) target = $region28
        $region27: #{decoder_forward.1} parent=11 // pred_region
          _
        $region28: #{decoder_forward.1} parent=11 // pred_fallthru
          _
        // Predicated region
        $region29: #{decoder_forward.1} parent=11 // pred_check
          %p456 = pneg %p235
        $region30: #{decoder_forward.1} parent=11 // pred_check_branch
          %458 = sbr.rel (%p456) target = $region32
        $region31: #{decoder_forward.1} parent=11 // pred_region
          _
        $region32: #{decoder_forward.1} parent=11 // pred_fallthru
          _
        // Predicated region
        $region33: #{decoder_forward.1} parent=11 // pred_check
          %p459 = pneg %p256
        $region34: #{decoder_forward.1} parent=11 // pred_check_branch
          %461 = sbr.rel (%p459) target = $region36
        $region35: #{decoder_forward.1} parent=11 // pred_region
          _
        $region36: #{decoder_forward.1} parent=11 // pred_fallthru
          _
        // Predicated region
        $region37: #{decoder_forward.1} parent=11 // pred_check
          %p462 = pneg %p277
        $region38: #{decoder_forward.1} parent=11 // pred_check_branch
          %464 = sbr.rel (%p462) target = $region40
        $region39: #{decoder_forward.1} parent=11 // pred_region
          _
        $region40: #{decoder_forward.1} parent=11 // pred_fallthru
          _
        // Predicated region
        $region41: #{decoder_forward.1} parent=11 // pred_check
          %p465 = pneg %p298
        $region42: #{decoder_forward.1} parent=11 // pred_check_branch
          %467 = sbr.rel (%p465) target = $region44
        $region43: #{decoder_forward.1} parent=11 // pred_region
          _
        $region44: #{decoder_forward.1} parent=11 // pred_fallthru
          _
        // Predicated region
        $region45: #{decoder_forward.1} parent=11 // pred_check
          %p468 = pneg %p319
        $region46: #{decoder_forward.1} parent=11 // pred_check_branch
          %470 = sbr.rel (%p468) target = $region48
        $region47: #{decoder_forward.1} parent=11 // pred_region
          _
        $region48: #{decoder_forward.1} parent=11 // pred_fallthru
          _
        // Predicated region
        $region49: #{decoder_forward.1} parent=11 // pred_check
          %p471 = pneg %p340
        $region50: #{decoder_forward.1} parent=11 // pred_check_branch
          %473 = sbr.rel (%p471) target = $region52
        $region51: #{decoder_forward.1} parent=11 // pred_region
          _
        $region52: #{decoder_forward.1} parent=11 // pred_fallthru
          _
        // Predicated region
        $region53: #{decoder_forward.1} parent=11 // pred_check
          %p474 = pneg %p361
        $region54: #{decoder_forward.1} parent=11 // pred_check_branch
          %476 = sbr.rel (%p474) target = $region56
        $region55: #{decoder_forward.1} parent=11 // pred_region
          _
        $region56: #{decoder_forward.1} parent=11 // pred_fallthru
          _
        // Predicated region
        $region57: #{decoder_forward.1} parent=11 // pred_check
          %p477 = pneg %p382
        $region58: #{decoder_forward.1} parent=11 // pred_check_branch
          %479 = sbr.rel (%p477) target = $region60
        $region59: #{decoder_forward.1} parent=11 // pred_region
          _
        $region60: #{decoder_forward.1} parent=11 // pred_fallthru
          _
        // Predicated region
        $region61: #{decoder_forward.1} parent=11 // pred_check
          %p480 = pneg %p403
        $region62: #{decoder_forward.1} parent=11 // pred_check_branch
          %482 = sbr.rel (%p480) target = $region64
        $region63: #{decoder_forward.1} parent=11 // pred_region
          _
        $region64: #{decoder_forward.1} parent=11 // pred_fallthru
          _
      $region12: #{decoder_forward.1} parent=5 // pred_fallthru
        _
      %p483 = scmp.lt.s32.totalorder %s26, 2
      // Predicated region
      $region65: #{decoder_forward.1} parent=5 // pred_check
        %p484 = pneg %p483
      $region66: #{decoder_forward.1} parent=5 // pred_check_branch
        %486 = sbr.rel (%p484) target = $region68
      $region67: #{decoder_forward.1} parent=5 // pred_region
        // Predicated region
        $region69: #{decoder_forward.1} parent=67 // pred_check
          %p487 = pneg %p46
        $region70: #{decoder_forward.1} parent=67 // pred_check_branch
          %489 = sbr.rel (%p487) target = $region72
        $region71: #{decoder_forward.1} parent=67 // pred_region
          %p490 = scmp.lt.s32.totalorder %s26, 1
          %s491 = scalar_select %p490, %s26, 1
          %s492 = smul.addr %s491, 8
          %s493 = scalar_lea.vmem %s0, %s492
        $region72: #{decoder_forward.1} parent=67 // pred_fallthru
          _
        // Predicated region
        $region73: #{decoder_forward.1} parent=67 // pred_check
          %p494 = pneg %p72
        $region74: #{decoder_forward.1} parent=67 // pred_check_branch
          %496 = sbr.rel (%p494) target = $region76
        $region75: #{decoder_forward.1} parent=67 // pred_region
          %p497 = scmp.lt.s32.totalorder %s26, 1
          %s498 = scalar_select %p497, %s26, 1
          %s499 = smul.addr %s498, 8
          %s500 = scalar_lea.vmem %s1, %s499
        $region76: #{decoder_forward.1} parent=67 // pred_fallthru
          _
        // Predicated region
        $region77: #{decoder_forward.1} parent=67 // pred_check
          %p501 = pneg %p98
        $region78: #{decoder_forward.1} parent=67 // pred_check_branch
          %503 = sbr.rel (%p501) target = $region80
        $region79: #{decoder_forward.1} parent=67 // pred_region
          %p504 = scmp.lt.s32.totalorder %s26, 1
          %s505 = scalar_select %p504, %s26, 1
          %s506 = smul.addr %s505, 8
          %s507 = scalar_lea.vmem %s2, %s506
        $region80: #{decoder_forward.1} parent=67 // pred_fallthru
          _
        // Predicated region
        $region81: #{decoder_forward.1} parent=67 // pred_check
          %p508 = pneg %p124
        $region82: #{decoder_forward.1} parent=67 // pred_check_branch
          %510 = sbr.rel (%p508) target = $region84
        $region83: #{decoder_forward.1} parent=67 // pred_region
          %p511 = scmp.lt.s32.totalorder %s26, 1
          %s512 = scalar_select %p511, %s26, 1
          %s513 = smul.addr %s512, 8
          %s514 = scalar_lea.vmem %s3, %s513
        $region84: #{decoder_forward.1} parent=67 // pred_fallthru
          _
      $region68: #{decoder_forward.1} parent=5 // pred_fallthru
        _
      %p515 = scmp.le.s32.totalorder 1, %s26
      %p516 = scmp.lt.s32.totalorder %s26, 3
      %p517 = pnand %p515, %p516
      %p518 = pneg %p517
      // Predicated region
      $region85: #{decoder_forward.1} parent=5 // pred_check
        _
      $region86: #{decoder_forward.1} parent=5 // pred_check_branch
        %520 = sbr.rel (%p517) target = $region88
      $region87: #{decoder_forward.1} parent=5 // pred_region
        %s521 = ssub.s32 %s26, 1
        %p522 = scmp.lt.s32.totalorder %s31, 1
        %s523 = scalar_select %p522, %s31, 1
        %s524 = smul.addr %s523, 8
        %s525 = scalar_lea.vmem %s0, %s524
        %p526 = pneg %p52
        %p527 = pneg %p49
        %p528 = scmp.lt.s32.totalorder %s31, 1
        %s529 = scalar_select %p528, %s31, 1
        %s530 = smul.addr %s529, 8
        %s531 = scalar_lea.vmem %s1, %s530
        %p532 = pneg %p78
        %p533 = pneg %p75
        %p534 = scmp.lt.s32.totalorder %s31, 1
        %s535 = scalar_select %p534, %s31, 1
        %s536 = smul.addr %s535, 8
        %s537 = scalar_lea.vmem %s2, %s536
        %p538 = pneg %p104
        %p539 = pneg %p101
        %p540 = scmp.lt.s32.totalorder %s31, 1
        %s541 = scalar_select %p540, %s31, 1
        %s542 = smul.addr %s541, 8
        %s543 = scalar_lea.vmem %s3, %s542
        %p544 = pneg %p130
        %p545 = pneg %p127
        %p546 = pneg %p151
        %p547 = pneg %p148
        %p548 = pneg %p172
        %p549 = pneg %p169
        %p550 = pneg %p193
        %p551 = pneg %p190
        %p552 = pneg %p214
        %p553 = pneg %p211
        %p554 = pneg %p235
        %p555 = pneg %p232
        %p556 = pneg %p256
        %p557 = pneg %p253
        %p558 = pneg %p277
        %p559 = pneg %p274
        %p560 = pneg %p298
        %p561 = pneg %p295
        %p562 = pneg %p319
        %p563 = pneg %p316
        %p564 = pneg %p340
        %p565 = pneg %p337
        %p566 = pneg %p361
        %p567 = pneg %p358
        %p568 = pneg %p382
        %p569 = pneg %p379
        %p570 = pneg %p403
        %p571 = pneg %p400
        %p572 = pneg %p429
        %p573 = pneg %p426
        %s574 = sand.u32 %s416, 1
        %s575 = scalar_lea.sflag [#allocation3], %s574
        %s576 = sand.u32 %s416, 1
        %s577 = smul.addr %s576, 8
        %s578 = scalar_lea.vmem [#allocation2], %s577
        %p579 = scmp.lt.s32.totalorder %s31, 1
        %s580 = scalar_select %p579, %s31, 1
        %s581 = smul.addr %s580, 8
        %s582 = scalar_lea.vmem %s0, %s581
        %p583 = scmp.lt.s32.totalorder %s31, 1
        %s584 = scalar_select %p583, %s31, 1
        %s585 = smul.addr %s584, 8
        %s586 = scalar_lea.vmem %s1, %s585
        %p587 = scmp.lt.s32.totalorder %s31, 1
        %s588 = scalar_select %p587, %s31, 1
        %s589 = smul.addr %s588, 8
        %s590 = scalar_lea.vmem %s2, %s589
        %p591 = scmp.lt.s32.totalorder %s31, 1
        %s592 = scalar_select %p591, %s31, 1
        %s593 = smul.addr %s592, 8
        %s594 = scalar_lea.vmem %s3, %s593
        %v596 = vld [vmem:[%s582] sm:$0xff]
        %v597 = vld [vmem:[%s4] sm:$0xf]
        %v598 = vld [vmem:[%s4 + $0x4] sm:$0xf]
        %v599 = vld [vmem:[%s4 + $0x8] sm:$0xf]
        %v600 = vld [vmem:[%s4 + $0xc] sm:$0xf]
        %v601 = vpack.c.bf16 %v596, %v596
        %v602 = vld [vmem:[%s5] sm:$0x1]
        %v604 = vperm.slane %v602, 0
        %v610 = vunpack.c.l.b16 %v597
        %v611 = vunpack.c.l.b16 %v598
        %v612 = vunpack.c.l.b16 %v599
        %v613 = vunpack.c.l.b16 %v600
        %v614 = vpack.c.b16 %v611, %v610
        %v615 = vpack.c.b16 %v613, %v612
        %vm618 = vcmask 261120
        %v620 = vsel %vm618, %v601, 0
        %622 = vmatpush.bf16.msra.mxu0 0
        %623 = vmatpush.bf16.msra.mxu0 0
        %624 = vmatpush.bf16.msra.mxu0 0
        %625 = vmatpush.bf16.msra.mxu0 0
        %626 = vmatpush.bf16.msra.mxu0 0
        %627 = vmatpush.bf16.msra.mxu0 0
        %628 = vmatpush.bf16.msra.mxu0 %v615
        %629 = vmatpush.bf16.msra.mxu0 %v614
        %630 = vmatmul.bf16.gmra.mxu0 %v620
        %v631 = vpop.f32.mrf.mxu0
        %v632 = vadd.f32 %v604, %v631
        %v633 = vpop.f32.mrf.mxu0
        %634 = vdwg.mxu0
        %v635 = vtanh.pop %v632
        %v636 = vmul.f32 %v635, 5.656854
        %v637 = vld [vmem:[%s6] sm:$0xff]
        %v638 = vadd.f32 %v636, %v637
        %v639 = vld [vmem:[%s586] sm:$0xff]
        %v640 = vld [vmem:[%s594] sm:$0xff]
        %v641 = vld [vmem:[%s590] sm:$0xff]
        %v642 = vld [vmem:[%s7] sm:$0x1]
        %v643 = vld [vmem:[%s8] sm:$0x1]
        %v644 = vsel %vm618, %v638, 0.0
        %645 = vadd.xlane.f32.xlu0 %v644
        %v646 = vpop.xlane.xlu0 %645
        %v647 = vrcp.pop 32.0
        %v648 = vmul.f32 32.0, %v647
        %v649 = vsub.f32 1.0, %v648
        %v650 = vmul.f32 %v647, %v649
        %v651 = vadd.f32 %v647, %v650
        %vm652 = vweird.f32 %v647
        %v653 = vsel %vm652, %v647, %v651
        %v654 = vmul.f32 %v646, %v653
        %v655 = vsub.f32 %v638, %v654
        %v656 = vmul.f32 %v655, %v655
        %v657 = vsel %vm618, %v656, 0.0
        %658 = vadd.xlane.f32.xlu0 %v657
        %v659 = vpop.xlane.xlu0 %658
        %v660 = vrcp.pop 31.0
        %v661 = vmul.f32 31.0, %v660
        %v662 = vsub.f32 1.0, %v661
        %v663 = vmul.f32 %v660, %v662
        %v664 = vadd.f32 %v660, %v663
        %vm665 = vweird.f32 %v660
        %v666 = vsel %vm665, %v660, %v664
        %v667 = vmul.f32 %v659, %v666
        %v668 = vrsqrt.pop %v667
        %v669 = vmul.f32 %v668, %v667
        %v670 = vmul.f32 %v669, %v668
        %v671 = vmul.f32 0.5, %v670
        %v672 = vsub.f32 1.5, %v671
        %v673 = vmul.f32 %v668, %v672
        %v674 = vmul.f32 %v667, %v673
        %vm675 = vcmp.eq.f32.partialorder %v667, inf
        %v676 = vsel %vm675, %v667, %v674
        %vm677 = vcmp.eq.f32.partialorder %v667, 0.0
        %v678 = vand.u32 %v667, 2147483648
        %v679 = vsel %vm677, %v678, %v676
        %v681 = vperm.slane %v642, 0
        %v683 = vmul.f32 %v681, %v655
        %v684 = vadd.f32 %v679, 1e-06
        %v685 = vrcp.pop %v684
        %v686 = vmul.f32 %v683, %v685
        %v688 = vperm.slane %v643, 0
        %v690 = vadd.f32 %v686, %v688
        %v691 = vld [vmem:[%s9] sm:$0xf]
        %v692 = vld [vmem:[%s9 + $0x4] sm:$0xf]
        %v693 = vld [vmem:[%s9 + $0x8] sm:$0xf]
        %v694 = vld [vmem:[%s9 + $0xc] sm:$0xf]
        %s695 = scalar_lea.vmem %s9, 16
        %v696 = vld [vmem:[%s695] sm:$0xf]
        %v697 = vld [vmem:[%s695 + $0x4] sm:$0xf]
        %v698 = vld [vmem:[%s695 + $0x8] sm:$0xf]
        %v699 = vld [vmem:[%s695 + $0xc] sm:$0xf]
        %s700 = scalar_lea.vmem %s9, 32
        %v701 = vld [vmem:[%s700] sm:$0xf]
        %v702 = vld [vmem:[%s700 + $0x4] sm:$0xf]
        %v703 = vld [vmem:[%s700 + $0x8] sm:$0xf]
        %v704 = vld [vmem:[%s700 + $0xc] sm:$0xf]
        %s705 = scalar_lea.vmem %s9, 48
        %v706 = vld [vmem:[%s705] sm:$0xf]
        %v707 = vld [vmem:[%s705 + $0x4] sm:$0xf]
        %v708 = vld [vmem:[%s705 + $0x8] sm:$0xf]
        %v709 = vld [vmem:[%s705 + $0xc] sm:$0xf]
        %v710 = vld [vmem:[%s10] sm:$0x1]
        %s711 = scalar_lea.vmem %s10, 1
        %v712 = vld [vmem:[%s711] sm:$0x1]
        %s713 = scalar_lea.vmem %s10, 2
        %v714 = vld [vmem:[%s713] sm:$0x1]
        %s715 = scalar_lea.vmem %s10, 3
        %v716 = vld [vmem:[%s715] sm:$0x1]
        %v717 = vpack.c.bf16 %v690, %v690
        %v719 = vperm.slane %v710, 0
        %v725 = vunpack.c.l.b16 %v691
        %v726 = vunpack.c.l.b16 %v692
        %v727 = vunpack.c.l.b16 %v693
        %v728 = vunpack.c.l.b16 %v694
        %v729 = vpack.c.b16 %v726, %v725
        %v730 = vpack.c.b16 %v728, %v727
        %v734 = vsel %vm618, %v717, 0
        %736 = vmatpush.bf16.msra.mxu0 0
        %737 = vmatpush.bf16.msra.mxu0 0
        %738 = vmatpush.bf16.msra.mxu0 0
        %739 = vmatpush.bf16.msra.mxu0 0
        %740 = vmatpush.bf16.msra.mxu0 0
        %741 = vmatpush.bf16.msra.mxu0 0
        %742 = vmatpush.bf16.msra.mxu0 %v730
        %743 = vmatpush.bf16.msra.mxu0 %v729
        %744 = vmatmul.bf16.gmra.mxu0 %v734
        %v745 = vpop.f32.mrf.mxu0
        %v746 = vadd.f32 %v719, %v745
        %v747 = vpop.f32.mrf.mxu0
        %748 = vdwg.mxu0
        %v750 = vperm.slane %v712, 0
        %v756 = vunpack.c.l.b16 %v696
        %v757 = vunpack.c.l.b16 %v697
        %v758 = vunpack.c.l.b16 %v698
        %v759 = vunpack.c.l.b16 %v699
        %v760 = vpack.c.b16 %v757, %v756
        %v761 = vpack.c.b16 %v759, %v758
        %764 = vmatpush.bf16.msra.mxu0 0
        %765 = vmatpush.bf16.msra.mxu0 0
        %766 = vmatpush.bf16.msra.mxu0 0
        %767 = vmatpush.bf16.msra.mxu0 0
        %768 = vmatpush.bf16.msra.mxu0 0
        %769 = vmatpush.bf16.msra.mxu0 0
        %770 = vmatpush.bf16.msra.mxu0 %v761
        %771 = vmatpush.bf16.msra.mxu0 %v760
        %772 = vmatmul.bf16.gmra.mxu0 %v734
        %v773 = vpop.f32.mrf.mxu0
        %v774 = vadd.f32 %v750, %v773
        %v775 = vpop.f32.mrf.mxu0
        %776 = vdwg.mxu0
        %v778 = vperm.slane %v714, 0
        %v784 = vunpack.c.l.b16 %v701
        %v785 = vunpack.c.l.b16 %v702
        %v786 = vunpack.c.l.b16 %v703
        %v787 = vunpack.c.l.b16 %v704
        %v788 = vpack.c.b16 %v785, %v784
        %v789 = vpack.c.b16 %v787, %v786
        %792 = vmatpush.bf16.msra.mxu0 0
        %793 = vmatpush.bf16.msra.mxu0 0
        %794 = vmatpush.bf16.msra.mxu0 0
        %795 = vmatpush.bf16.msra.mxu0 0
        %796 = vmatpush.bf16.msra.mxu0 0
        %797 = vmatpush.bf16.msra.mxu0 0
        %798 = vmatpush.bf16.msra.mxu0 %v789
        %799 = vmatpush.bf16.msra.mxu0 %v788
        %800 = vmatmul.bf16.gmra.mxu0 %v734
        %v801 = vpop.f32.mrf.mxu0
        %v802 = vadd.f32 %v778, %v801
        %v803 = vpop.f32.mrf.mxu0
        %804 = vdwg.mxu0
        %806 = vrot.lane.b32.xlu0 %v746, 120
        %v807 = vpop.permute.xlu0 %806
        %809 = vrot.lane.b32.xlu0 %v746, 112
        %v810 = vpop.permute.xlu0 %809
        %812 = vrot.lane.b32.xlu0 %v746, 104
        %v813 = vpop.permute.xlu0 %812
        %816 = vrot.lane.b32.xlu0 %v774, 120
        %v817 = vpop.permute.xlu0 %816
        %819 = vrot.lane.b32.xlu0 %v774, 112
        %v820 = vpop.permute.xlu0 %819
        %822 = vrot.lane.b32.xlu0 %v774, 104
        %v823 = vpop.permute.xlu0 %822
        %826 = vrot.lane.b32.xlu0 %v802, 120
        %v827 = vpop.permute.xlu0 %826
        %829 = vrot.lane.b32.xlu0 %v802, 112
        %v830 = vpop.permute.xlu0 %829
        %832 = vrot.lane.b32.xlu0 %v802, 104
        %v833 = vpop.permute.xlu0 %832
        %v835 = vpack.c.bf16 %v746, %v746
        %v836 = vpack.c.bf16 %v807, %v807
        %v837 = vpack.c.bf16 %v810, %v810
        %v838 = vpack.c.bf16 %v813, %v813
        %v839 = vpack.c.bf16 %v774, %v774
        %v840 = vpack.c.bf16 %v817, %v817
        %v841 = vpack.c.bf16 %v820, %v820
        %v842 = vpack.c.bf16 %v823, %v823
        %vm843 = vcmask 64512
        %v845 = vsel %vm843, %v835, 0
        %v848 = vsel %vm843, %v839, 0
        %850 = vmatpush.bf16.xpose.msra.mxu0 0
        %851 = vmatpush.bf16.xpose.msra.mxu0 0
        %852 = vmatpush.bf16.xpose.msra.mxu0 0
        %853 = vmatpush.bf16.xpose.msra.mxu0 0
        %854 = vmatpush.bf16.xpose.msra.mxu0 0
        %855 = vmatpush.bf16.xpose.msra.mxu0 0
        %856 = vmatpush.bf16.xpose.msra.mxu0 0
        %857 = vmatpush.bf16.xpose.msra.mxu0 %v848
        %858 = vmatmul.bf16.gmra.mxu0 %v845
        %v859 = vpop.f32.mrf.mxu0
        %v860 = vadd.f32 0.0, %v859
        %v861 = vpop.f32.mrf.mxu0
        %862 = vdwg.mxu0
        %v864 = vsel %vm843, %v836, 0
        %v867 = vsel %vm843, %v840, 0
        %869 = vmatpush.bf16.xpose.msra.mxu0 0
        %870 = vmatpush.bf16.xpose.msra.mxu0 0
        %871 = vmatpush.bf16.xpose.msra.mxu0 0
        %872 = vmatpush.bf16.xpose.msra.mxu0 0
        %873 = vmatpush.bf16.xpose.msra.mxu0 0
        %874 = vmatpush.bf16.xpose.msra.mxu0 0
        %875 = vmatpush.bf16.xpose.msra.mxu0 0
        %876 = vmatpush.bf16.xpose.msra.mxu0 %v867
        %877 = vmatmul.bf16.gmra.mxu0 %v864
        %v878 = vpop.f32.mrf.mxu0
        %v879 = vadd.f32 0.0, %v878
        %v880 = vpop.f32.mrf.mxu0
        %881 = vdwg.mxu0
        %v883 = vsel %vm843, %v837, 0
        %v886 = vsel %vm843, %v841, 0
        %888 = vmatpush.bf16.xpose.msra.mxu0 0
        %889 = vmatpush.bf16.xpose.msra.mxu0 0
        %890 = vmatpush.bf16.xpose.msra.mxu0 0
        %891 = vmatpush.bf16.xpose.msra.mxu0 0
        %892 = vmatpush.bf16.xpose.msra.mxu0 0
        %893 = vmatpush.bf16.xpose.msra.mxu0 0
        %894 = vmatpush.bf16.xpose.msra.mxu0 0
        %895 = vmatpush.bf16.xpose.msra.mxu0 %v886
        %896 = vmatmul.bf16.gmra.mxu0 %v883
        %v897 = vpop.f32.mrf.mxu0
        %v898 = vadd.f32 0.0, %v897
        %v899 = vpop.f32.mrf.mxu0
        %900 = vdwg.mxu0
        %v902 = vsel %vm843, %v838, 0
        %v905 = vsel %vm843, %v842, 0
        %907 = vmatpush.bf16.xpose.msra.mxu0 0
        %908 = vmatpush.bf16.xpose.msra.mxu0 0
        %909 = vmatpush.bf16.xpose.msra.mxu0 0
        %910 = vmatpush.bf16.xpose.msra.mxu0 0
        %911 = vmatpush.bf16.xpose.msra.mxu0 0
        %912 = vmatpush.bf16.xpose.msra.mxu0 0
        %913 = vmatpush.bf16.xpose.msra.mxu0 0
        %914 = vmatpush.bf16.xpose.msra.mxu0 %v905
        %915 = vmatmul.bf16.gmra.mxu0 %v902
        %v916 = vpop.f32.mrf.mxu0
        %v917 = vadd.f32 0.0, %v916
        %v918 = vpop.f32.mrf.mxu0
        %919 = vdwg.mxu0
        %v920 = vmul.f32 %v860, 0.35355338
        %v921 = vmul.f32 %v879, 0.35355338
        %v922 = vmul.f32 %v898, 0.35355338
        %v923 = vmul.f32 %v917, 0.35355338
        %vm924 = vcmp.eq.f32.partialorder %v640, 0.0
        %v925 = vsel %vm924, 1, 0
        %vm926 = vcmp.eq.s32.totalorder %v925, 1
        %v927 = vsel %vm926, -1e+09, %v920
        %v928 = vsel %vm926, -1e+09, %v921
        %v929 = vsel %vm926, -1e+09, %v922
        %v930 = vsel %vm926, -1e+09, %v923
        %v931 = vsel %vm843, %v927, -inf
        %932 = vmax.xlane.f32.xlu0 %v931
        %v933 = vpop.xlane.xlu0 %932
        %v934 = vsel %vm843, %v928, -inf
        %935 = vmax.xlane.f32.xlu0 %v934
        %v936 = vpop.xlane.xlu0 %935
        %v937 = vsel %vm843, %v929, -inf
        %938 = vmax.xlane.f32.xlu0 %v937
        %v939 = vpop.xlane.xlu0 %938
        %v940 = vsel %vm843, %v930, -inf
        %941 = vmax.xlane.f32.xlu0 %v940
        %v942 = vpop.xlane.xlu0 %941
        %v943 = vsub.f32 %v927, %v933
        %v944 = vsub.f32 %v928, %v936
        %v945 = vsub.f32 %v929, %v939
        %v946 = vsub.f32 %v930, %v942
        %v947 = vmul.f32 %v943, 1.442695
        %v948 = vpow.pop %v947
        %v949 = vmul.f32 %v944, 1.442695
        %v950 = vpow.pop %v949
        %v951 = vmul.f32 %v945, 1.442695
        %v952 = vpow.pop %v951
        %v953 = vmul.f32 %v946, 1.442695
        %v954 = vpow.pop %v953
        %v955 = vsel %vm843, %v948, 0.0
        %956 = vadd.xlane.f32.xlu0 %v955
        %v957 = vpop.xlane.xlu0 %956
        %v958 = vsel %vm843, %v950, 0.0
        %959 = vadd.xlane.f32.xlu0 %v958
        %v960 = vpop.xlane.xlu0 %959
        %v961 = vsel %vm843, %v952, 0.0
        %962 = vadd.xlane.f32.xlu0 %v961
        %v963 = vpop.xlane.xlu0 %962
        %v964 = vsel %vm843, %v954, 0.0
        %965 = vadd.xlane.f32.xlu0 %v964
        %v966 = vpop.xlane.xlu0 %965
        %v967 = vrcp.pop %v957
        %v968 = vrcp.pop %v960
        %v969 = vrcp.pop %v963
        %v970 = vrcp.pop %v966
        %v971 = vmul.f32 %v948, %v967
        %v972 = vmul.f32 %v950, %v968
        %v973 = vmul.f32 %v952, %v969
        %v974 = vmul.f32 %v954, %v970
        %v975 = vpack.c.bf16 %v971, %v971
        %v976 = vpack.c.bf16 %v972, %v972
        %v977 = vpack.c.bf16 %v973, %v973
        %v978 = vpack.c.bf16 %v974, %v974
        %v979 = vpack.c.bf16 %v802, %v802
        %v980 = vpack.c.bf16 %v827, %v827
        %v981 = vpack.c.bf16 %v830, %v830
        %v982 = vpack.c.bf16 %v833, %v833
        %v984 = vsel %vm843, %v975, 0
        %vm986 = vcmask 1043456
        %v988 = vsel %vm986, %v979, 0
        %990 = vmatpush.bf16.msra.mxu0 0
        %991 = vmatpush.bf16.msra.mxu0 0
        %992 = vmatpush.bf16.msra.mxu0 0
        %993 = vmatpush.bf16.msra.mxu0 0
        %994 = vmatpush.bf16.msra.mxu0 0
        %995 = vmatpush.bf16.msra.mxu0 0
        %996 = vmatpush.bf16.msra.mxu0 0
        %997 = vmatpush.bf16.msra.mxu0 %v988
        %998 = vmatmul.bf16.gmra.mxu0 %v984
        %v999 = vpop.f32.mrf.mxu0
        %v1000 = vadd.f32 0.0, %v999
        %v1001 = vpop.f32.mrf.mxu0
        %1002 = vdwg.mxu0
        %v1004 = vsel %vm843, %v976, 0
        %v1007 = vsel %vm986, %v980, 0
        %1009 = vmatpush.bf16.msra.mxu0 0
        %1010 = vmatpush.bf16.msra.mxu0 0
        %1011 = vmatpush.bf16.msra.mxu0 0
        %1012 = vmatpush.bf16.msra.mxu0 0
        %1013 = vmatpush.bf16.msra.mxu0 0
        %1014 = vmatpush.bf16.msra.mxu0 0
        %1015 = vmatpush.bf16.msra.mxu0 0
        %1016 = vmatpush.bf16.msra.mxu0 %v1007
        %1017 = vmatmul.bf16.gmra.mxu0 %v1004
        %v1018 = vpop.f32.mrf.mxu0
        %v1019 = vadd.f32 0.0, %v1018
        %v1020 = vpop.f32.mrf.mxu0
        %1021 = vdwg.mxu0
        %v1023 = vsel %vm843, %v977, 0
        %v1026 = vsel %vm986, %v981, 0
        %1028 = vmatpush.bf16.msra.mxu0 0
        %1029 = vmatpush.bf16.msra.mxu0 0
        %1030 = vmatpush.bf16.msra.mxu0 0
        %1031 = vmatpush.bf16.msra.mxu0 0
        %1032 = vmatpush.bf16.msra.mxu0 0
        %1033 = vmatpush.bf16.msra.mxu0 0
        %1034 = vmatpush.bf16.msra.mxu0 0
        %1035 = vmatpush.bf16.msra.mxu0 %v1026
        %1036 = vmatmul.bf16.gmra.mxu0 %v1023
        %v1037 = vpop.f32.mrf.mxu0
        %v1038 = vadd.f32 0.0, %v1037
        %v1039 = vpop.f32.mrf.mxu0
        %1040 = vdwg.mxu0
        %v1042 = vsel %vm843, %v978, 0
        %v1045 = vsel %vm986, %v982, 0
        %1047 = vmatpush.bf16.msra.mxu0 0
        %1048 = vmatpush.bf16.msra.mxu0 0
        %1049 = vmatpush.bf16.msra.mxu0 0
        %1050 = vmatpush.bf16.msra.mxu0 0
        %1051 = vmatpush.bf16.msra.mxu0 0
        %1052 = vmatpush.bf16.msra.mxu0 0
        %1053 = vmatpush.bf16.msra.mxu0 0
        %1054 = vmatpush.bf16.msra.mxu0 %v1045
        %1055 = vmatmul.bf16.gmra.mxu0 %v1042
        %v1056 = vpop.f32.mrf.mxu0
        %v1057 = vadd.f32 0.0, %v1056
        %v1058 = vpop.f32.mrf.mxu0
        %1059 = vdwg.mxu0
        %1061 = vrot.lane.b32.xlu0 %v1019, 8
        %v1062 = vpop.permute.xlu0 %1061
        %1065 = vrot.lane.b32.xlu0 %v1038, 16
        %v1066 = vpop.permute.xlu0 %1065
        %1069 = vrot.lane.b32.xlu0 %v1057, 24
        %v1070 = vpop.permute.xlu0 %1069
        %v1072 = vsel %vm843, %v1000, %v1062
        %vm1073 = vcmask 130048
        %v1074 = vsel %vm1073, %v1072, %v1066
        %vm1075 = vcmask 195584
        %v1076 = vsel %vm1075, %v1074, %v1070
        %v1077 = vpack.c.bf16 %v1076, %v1076
        %v1079 = vperm.slane %v716, 0
        %v1085 = vunpack.c.l.b16 %v706
        %v1086 = vunpack.c.l.b16 %v707
        %v1087 = vunpack.c.l.b16 %v708
        %v1088 = vunpack.c.l.b16 %v709
        %v1089 = vpack.c.b16 %v1086, %v1085
        %v1090 = vpack.c.b16 %v1088, %v1087
        %v1094 = vsel %vm618, %v1077, 0
        %1096 = vmatpush.bf16.msra.mxu0 0
        %1097 = vmatpush.bf16.msra.mxu0 0
        %1098 = vmatpush.bf16.msra.mxu0 0
        %1099 = vmatpush.bf16.msra.mxu0 0
        %1100 = vmatpush.bf16.msra.mxu0 0
        %1101 = vmatpush.bf16.msra.mxu0 0
        %1102 = vmatpush.bf16.msra.mxu0 %v1090
        %1103 = vmatpush.bf16.msra.mxu0 %v1089
        %1104 = vmatmul.bf16.gmra.mxu0 %v1094
        %v1105 = vpop.f32.mrf.mxu0
        %v1106 = vadd.f32 %v1079, %v1105
        %v1107 = vpop.f32.mrf.mxu0
        %1108 = vdwg.mxu0
        %v1109 = vadd.f32 %v638, %v1106
        %s1110 = scalar_lea.vmem %s7, 1
        %v1111 = vld [vmem:[%s1110] sm:$0x1]
        %s1112 = scalar_lea.vmem %s8, 1
        %v1113 = vld [vmem:[%s1112] sm:$0x1]
        %v1114 = vsel %vm618, %v1109, 0.0
        %1115 = vadd.xlane.f32.xlu0 %v1114
        %v1116 = vpop.xlane.xlu0 %1115
        %v1117 = vmul.f32 %v1116, %v653
        %v1118 = vsub.f32 %v1109, %v1117
        %v1119 = vmul.f32 %v1118, %v1118
        %v1120 = vsel %vm618, %v1119, 0.0
        %1121 = vadd.xlane.f32.xlu0 %v1120
        %v1122 = vpop.xlane.xlu0 %1121
        %v1123 = vmul.f32 %v1122, %v666
        %v1124 = vrsqrt.pop %v1123
        %v1125 = vmul.f32 %v1124, %v1123
        %v1126 = vmul.f32 %v1125, %v1124
        %v1127 = vmul.f32 0.5, %v1126
        %v1128 = vsub.f32 1.5, %v1127
        %v1129 = vmul.f32 %v1124, %v1128
        %v1130 = vmul.f32 %v1123, %v1129
        %vm1131 = vcmp.eq.f32.partialorder %v1123, inf
        %v1132 = vsel %vm1131, %v1123, %v1130
        %vm1133 = vcmp.eq.f32.partialorder %v1123, 0.0
        %v1134 = vand.u32 %v1123, 2147483648
        %v1135 = vsel %vm1133, %v1134, %v1132
        %v1137 = vperm.slane %v1111, 0
        %v1139 = vmul.f32 %v1137, %v1118
        %v1140 = vadd.f32 %v1135, 1e-06
        %v1141 = vrcp.pop %v1140
        %v1142 = vmul.f32 %v1139, %v1141
        %v1144 = vperm.slane %v1113, 0
        %v1146 = vadd.f32 %v1142, %v1144
        %s1147 = scalar_lea.vmem %s9, 64
        %v1148 = vld [vmem:[%s1147] sm:$0xf]
        %v1149 = vld [vmem:[%s1147 + $0x4] sm:$0xf]
        %v1150 = vld [vmem:[%s1147 + $0x8] sm:$0xf]
        %v1151 = vld [vmem:[%s1147 + $0xc] sm:$0xf]
        %s1152 = scalar_lea.vmem %s9, 80
        %v1153 = vld [vmem:[%s1152] sm:$0xf]
        %v1154 = vld [vmem:[%s1152 + $0x4] sm:$0xf]
        %v1155 = vld [vmem:[%s1152 + $0x8] sm:$0xf]
        %v1156 = vld [vmem:[%s1152 + $0xc] sm:$0xf]
        %s1157 = scalar_lea.vmem %s9, 96
        %v1158 = vld [vmem:[%s1157] sm:$0xf]
        %v1159 = vld [vmem:[%s1157 + $0x4] sm:$0xf]
        %v1160 = vld [vmem:[%s1157 + $0x8] sm:$0xf]
        %v1161 = vld [vmem:[%s1157 + $0xc] sm:$0xf]
        %s1162 = scalar_lea.vmem %s9, 112
        %v1163 = vld [vmem:[%s1162] sm:$0xf]
        %v1164 = vld [vmem:[%s1162 + $0x4] sm:$0xf]
        %v1165 = vld [vmem:[%s1162 + $0x8] sm:$0xf]
        %v1166 = vld [vmem:[%s1162 + $0xc] sm:$0xf]
        %s1167 = scalar_lea.vmem %s10, 4
        %v1168 = vld [vmem:[%s1167] sm:$0x1]
        %s1169 = scalar_lea.vmem %s10, 5
        %v1170 = vld [vmem:[%s1169] sm:$0x1]
        %s1171 = scalar_lea.vmem %s10, 6
        %v1172 = vld [vmem:[%s1171] sm:$0x1]
        %s1173 = scalar_lea.vmem %s10, 7
        %v1174 = vld [vmem:[%s1173] sm:$0x1]
        %v1175 = vpack.c.bf16 %v1146, %v1146
        %v1177 = vperm.slane %v1168, 0
        %v1183 = vunpack.c.l.b16 %v1148
        %v1184 = vunpack.c.l.b16 %v1149
        %v1185 = vunpack.c.l.b16 %v1150
        %v1186 = vunpack.c.l.b16 %v1151
        %v1187 = vpack.c.b16 %v1184, %v1183
        %v1188 = vpack.c.b16 %v1186, %v1185
        %v1192 = vsel %vm618, %v1175, 0
        %1194 = vmatpush.bf16.msra.mxu0 0
        %1195 = vmatpush.bf16.msra.mxu0 0
        %1196 = vmatpush.bf16.msra.mxu0 0
        %1197 = vmatpush.bf16.msra.mxu0 0
        %1198 = vmatpush.bf16.msra.mxu0 0
        %1199 = vmatpush.bf16.msra.mxu0 0
        %1200 = vmatpush.bf16.msra.mxu0 %v1188
        %1201 = vmatpush.bf16.msra.mxu0 %v1187
        %1202 = vmatmul.bf16.gmra.mxu0 %v1192
        %v1203 = vpop.f32.mrf.mxu0
        %v1204 = vadd.f32 %v1177, %v1203
        %v1205 = vpop.f32.mrf.mxu0
        %1206 = vdwg.mxu0
        %v1207 = vpack.c.bf16 %v639, %v639
        %v1209 = vperm.slane %v1170, 0
        %v1215 = vunpack.c.l.b16 %v1153
        %v1216 = vunpack.c.l.b16 %v1154
        %v1217 = vunpack.c.l.b16 %v1155
        %v1218 = vunpack.c.l.b16 %v1156
        %v1219 = vpack.c.b16 %v1216, %v1215
        %v1220 = vpack.c.b16 %v1218, %v1217
        %v1224 = vsel %vm618, %v1207, 0
        %1226 = vmatpush.bf16.msra.mxu0 0
        %1227 = vmatpush.bf16.msra.mxu0 0
        %1228 = vmatpush.bf16.msra.mxu0 0
        %1229 = vmatpush.bf16.msra.mxu0 0
        %1230 = vmatpush.bf16.msra.mxu0 0
        %1231 = vmatpush.bf16.msra.mxu0 0
        %1232 = vmatpush.bf16.msra.mxu0 %v1220
        %1233 = vmatpush.bf16.msra.mxu0 %v1219
        %1234 = vmatmul.bf16.gmra.mxu0 %v1224
        %v1235 = vpop.f32.mrf.mxu0
        %v1236 = vadd.f32 %v1209, %v1235
        %v1237 = vpop.f32.mrf.mxu0
        %1238 = vdwg.mxu0
        %v1240 = vperm.slane %v1172, 0
        %v1246 = vunpack.c.l.b16 %v1158
        %v1247 = vunpack.c.l.b16 %v1159
        %v1248 = vunpack.c.l.b16 %v1160
        %v1249 = vunpack.c.l.b16 %v1161
        %v1250 = vpack.c.b16 %v1247, %v1246
        %v1251 = vpack.c.b16 %v1249, %v1248
        %1254 = vmatpush.bf16.msra.mxu0 0
        %1255 = vmatpush.bf16.msra.mxu0 0
        %1256 = vmatpush.bf16.msra.mxu0 0
        %1257 = vmatpush.bf16.msra.mxu0 0
        %1258 = vmatpush.bf16.msra.mxu0 0
        %1259 = vmatpush.bf16.msra.mxu0 0
        %1260 = vmatpush.bf16.msra.mxu0 %v1251
        %1261 = vmatpush.bf16.msra.mxu0 %v1250
        %1262 = vmatmul.bf16.gmra.mxu0 %v1224
        %v1263 = vpop.f32.mrf.mxu0
        %v1264 = vadd.f32 %v1240, %v1263
        %v1265 = vpop.f32.mrf.mxu0
        %1266 = vdwg.mxu0
        %1268 = vrot.lane.b32.xlu0 %v1204, 120
        %v1269 = vpop.permute.xlu0 %1268
        %1271 = vrot.lane.b32.xlu0 %v1204, 112
        %v1272 = vpop.permute.xlu0 %1271
        %1274 = vrot.lane.b32.xlu0 %v1204, 104
        %v1275 = vpop.permute.xlu0 %1274
        %1278 = vrot.lane.b32.xlu0 %v1236, 120
        %v1279 = vpop.permute.xlu0 %1278
        %1281 = vrot.lane.b32.xlu0 %v1236, 112
        %v1282 = vpop.permute.xlu0 %1281
        %1284 = vrot.lane.b32.xlu0 %v1236, 104
        %v1285 = vpop.permute.xlu0 %1284
        %1288 = vrot.lane.b32.xlu0 %v1264, 120
        %v1289 = vpop.permute.xlu0 %1288
        %1291 = vrot.lane.b32.xlu0 %v1264, 112
        %v1292 = vpop.permute.xlu0 %1291
        %1294 = vrot.lane.b32.xlu0 %v1264, 104
        %v1295 = vpop.permute.xlu0 %1294
        %v1297 = vpack.c.bf16 %v1204, %v1204
        %v1298 = vpack.c.bf16 %v1269, %v1269
        %v1299 = vpack.c.bf16 %v1272, %v1272
        %v1300 = vpack.c.bf16 %v1275, %v1275
        %v1301 = vpack.c.bf16 %v1236, %v1236
        %v1302 = vpack.c.bf16 %v1279, %v1279
        %v1303 = vpack.c.bf16 %v1282, %v1282
        %v1304 = vpack.c.bf16 %v1285, %v1285
        %v1306 = vsel %vm843, %v1297, 0
        %v1309 = vsel %vm843, %v1301, 0
        %1311 = vmatpush.bf16.xpose.msra.mxu0 0
        %1312 = vmatpush.bf16.xpose.msra.mxu0 0
        %1313 = vmatpush.bf16.xpose.msra.mxu0 0
        %1314 = vmatpush.bf16.xpose.msra.mxu0 0
        %1315 = vmatpush.bf16.xpose.msra.mxu0 0
        %1316 = vmatpush.bf16.xpose.msra.mxu0 0
        %1317 = vmatpush.bf16.xpose.msra.mxu0 0
        %1318 = vmatpush.bf16.xpose.msra.mxu0 %v1309
        %1319 = vmatmul.bf16.gmra.mxu0 %v1306
        %v1320 = vpop.f32.mrf.mxu0
        %v1321 = vadd.f32 0.0, %v1320
        %v1322 = vpop.f32.mrf.mxu0
        %1323 = vdwg.mxu0
        %v1325 = vsel %vm843, %v1298, 0
        %v1328 = vsel %vm843, %v1302, 0
        %1330 = vmatpush.bf16.xpose.msra.mxu0 0
        %1331 = vmatpush.bf16.xpose.msra.mxu0 0
        %1332 = vmatpush.bf16.xpose.msra.mxu0 0
        %1333 = vmatpush.bf16.xpose.msra.mxu0 0
        %1334 = vmatpush.bf16.xpose.msra.mxu0 0
        %1335 = vmatpush.bf16.xpose.msra.mxu0 0
        %1336 = vmatpush.bf16.xpose.msra.mxu0 0
        %1337 = vmatpush.bf16.xpose.msra.mxu0 %v1328
        %1338 = vmatmul.bf16.gmra.mxu0 %v1325
        %v1339 = vpop.f32.mrf.mxu0
        %v1340 = vadd.f32 0.0, %v1339
        %v1341 = vpop.f32.mrf.mxu0
        %1342 = vdwg.mxu0
        %v1344 = vsel %vm843, %v1299, 0
        %v1347 = vsel %vm843, %v1303, 0
        %1349 = vmatpush.bf16.xpose.msra.mxu0 0
        %1350 = vmatpush.bf16.xpose.msra.mxu0 0
        %1351 = vmatpush.bf16.xpose.msra.mxu0 0
        %1352 = vmatpush.bf16.xpose.msra.mxu0 0
        %1353 = vmatpush.bf16.xpose.msra.mxu0 0
        %1354 = vmatpush.bf16.xpose.msra.mxu0 0
        %1355 = vmatpush.bf16.xpose.msra.mxu0 0
        %1356 = vmatpush.bf16.xpose.msra.mxu0 %v1347
        %1357 = vmatmul.bf16.gmra.mxu0 %v1344
        %v1358 = vpop.f32.mrf.mxu0
        %v1359 = vadd.f32 0.0, %v1358
        %v1360 = vpop.f32.mrf.mxu0
        %1361 = vdwg.mxu0
        %v1363 = vsel %vm843, %v1300, 0
        %v1366 = vsel %vm843, %v1304, 0
        %1368 = vmatpush.bf16.xpose.msra.mxu0 0
        %1369 = vmatpush.bf16.xpose.msra.mxu0 0
        %1370 = vmatpush.bf16.xpose.msra.mxu0 0
        %1371 = vmatpush.bf16.xpose.msra.mxu0 0
        %1372 = vmatpush.bf16.xpose.msra.mxu0 0
        %1373 = vmatpush.bf16.xpose.msra.mxu0 0
        %1374 = vmatpush.bf16.xpose.msra.mxu0 0
        %1375 = vmatpush.bf16.xpose.msra.mxu0 %v1366
        %1376 = vmatmul.bf16.gmra.mxu0 %v1363
        %v1377 = vpop.f32.mrf.mxu0
        %v1378 = vadd.f32 0.0, %v1377
        %v1379 = vpop.f32.mrf.mxu0
        %1380 = vdwg.mxu0
        %v1381 = vmul.f32 %v1321, 0.35355338
        %v1382 = vmul.f32 %v1340, 0.35355338
        %v1383 = vmul.f32 %v1359, 0.35355338
        %v1384 = vmul.f32 %v1378, 0.35355338
        %vm1385 = vcmp.eq.f32.partialorder %v641, 0.0
        %v1386 = vsel %vm1385, 1, 0
        %vm1387 = vcmp.eq.s32.totalorder %v1386, 1
        %v1388 = vsel %vm1387, -1e+09, %v1381
        %v1389 = vsel %vm1387, -1e+09, %v1382
        %v1390 = vsel %vm1387, -1e+09, %v1383
        %v1391 = vsel %vm1387, -1e+09, %v1384
        %v1392 = vsel %vm843, %v1388, -inf
        %1393 = vmax.xlane.f32.xlu0 %v1392
        %v1394 = vpop.xlane.xlu0 %1393
        %v1395 = vsel %vm843, %v1389, -inf
        %1396 = vmax.xlane.f32.xlu0 %v1395
        %v1397 = vpop.xlane.xlu0 %1396
        %v1398 = vsel %vm843, %v1390, -inf
        %1399 = vmax.xlane.f32.xlu0 %v1398
        %v1400 = vpop.xlane.xlu0 %1399
        %v1401 = vsel %vm843, %v1391, -inf
        %1402 = vmax.xlane.f32.xlu0 %v1401
        %v1403 = vpop.xlane.xlu0 %1402
        %v1404 = vsub.f32 %v1388, %v1394
        %v1405 = vsub.f32 %v1389, %v1397
        %v1406 = vsub.f32 %v1390, %v1400
        %v1407 = vsub.f32 %v1391, %v1403
        %v1408 = vmul.f32 %v1404, 1.442695
        %v1409 = vpow.pop %v1408
        %v1410 = vmul.f32 %v1405, 1.442695
        %v1411 = vpow.pop %v1410
        %v1412 = vmul.f32 %v1406, 1.442695
        %v1413 = vpow.pop %v1412
        %v1414 = vmul.f32 %v1407, 1.442695
        %v1415 = vpow.pop %v1414
        %v1416 = vsel %vm843, %v1409, 0.0
        %1417 = vadd.xlane.f32.xlu0 %v1416
        %v1418 = vpop.xlane.xlu0 %1417
        %v1419 = vsel %vm843, %v1411, 0.0
        %1420 = vadd.xlane.f32.xlu0 %v1419
        %v1421 = vpop.xlane.xlu0 %1420
        %v1422 = vsel %vm843, %v1413, 0.0
        %1423 = vadd.xlane.f32.xlu0 %v1422
        %v1424 = vpop.xlane.xlu0 %1423
        %v1425 = vsel %vm843, %v1415, 0.0
        %1426 = vadd.xlane.f32.xlu0 %v1425
        %v1427 = vpop.xlane.xlu0 %1426
        %v1428 = vrcp.pop %v1418
        %v1429 = vrcp.pop %v1421
        %v1430 = vrcp.pop %v1424
        %v1431 = vrcp.pop %v1427
        %v1432 = vmul.f32 %v1409, %v1428
        %v1433 = vmul.f32 %v1411, %v1429
        %v1434 = vmul.f32 %v1413, %v1430
        %v1435 = vmul.f32 %v1415, %v1431
        %v1436 = vpack.c.bf16 %v1432, %v1432
        %v1437 = vpack.c.bf16 %v1433, %v1433
        %v1438 = vpack.c.bf16 %v1434, %v1434
        %v1439 = vpack.c.bf16 %v1435, %v1435
        %v1440 = vpack.c.bf16 %v1264, %v1264
        %v1441 = vpack.c.bf16 %v1289, %v1289
        %v1442 = vpack.c.bf16 %v1292, %v1292
        %v1443 = vpack.c.bf16 %v1295, %v1295
        %v1445 = vsel %vm843, %v1436, 0
        %v1448 = vsel %vm986, %v1440, 0
        %1450 = vmatpush.bf16.msra.mxu0 0
        %1451 = vmatpush.bf16.msra.mxu0 0
        %1452 = vmatpush.bf16.msra.mxu0 0
        %1453 = vmatpush.bf16.msra.mxu0 0
        %1454 = vmatpush.bf16.msra.mxu0 0
        %1455 = vmatpush.bf16.msra.mxu0 0
        %1456 = vmatpush.bf16.msra.mxu0 0
        %1457 = vmatpush.bf16.msra.mxu0 %v1448
        %1458 = vmatmul.bf16.gmra.mxu0 %v1445
        %v1459 = vpop.f32.mrf.mxu0
        %v1460 = vadd.f32 0.0, %v1459
        %v1461 = vpop.f32.mrf.mxu0
        %1462 = vdwg.mxu0
        %v1464 = vsel %vm843, %v1437, 0
        %v1467 = vsel %vm986, %v1441, 0
        %1469 = vmatpush.bf16.msra.mxu0 0
        %1470 = vmatpush.bf16.msra.mxu0 0
        %1471 = vmatpush.bf16.msra.mxu0 0
        %1472 = vmatpush.bf16.msra.mxu0 0
        %1473 = vmatpush.bf16.msra.mxu0 0
        %1474 = vmatpush.bf16.msra.mxu0 0
        %1475 = vmatpush.bf16.msra.mxu0 0
        %1476 = vmatpush.bf16.msra.mxu0 %v1467
        %1477 = vmatmul.bf16.gmra.mxu0 %v1464
        %v1478 = vpop.f32.mrf.mxu0
        %v1479 = vadd.f32 0.0, %v1478
        %v1480 = vpop.f32.mrf.mxu0
        %1481 = vdwg.mxu0
        %v1483 = vsel %vm843, %v1438, 0
        %v1486 = vsel %vm986, %v1442, 0
        %1488 = vmatpush.bf16.msra.mxu0 0
        %1489 = vmatpush.bf16.msra.mxu0 0
        %1490 = vmatpush.bf16.msra.mxu0 0
        %1491 = vmatpush.bf16.msra.mxu0 0
        %1492 = vmatpush.bf16.msra.mxu0 0
        %1493 = vmatpush.bf16.msra.mxu0 0
        %1494 = vmatpush.bf16.msra.mxu0 0
        %1495 = vmatpush.bf16.msra.mxu0 %v1486
        %1496 = vmatmul.bf16.gmra.mxu0 %v1483
        %v1497 = vpop.f32.mrf.mxu0
        %v1498 = vadd.f32 0.0, %v1497
        %v1499 = vpop.f32.mrf.mxu0
        %1500 = vdwg.mxu0
        %v1502 = vsel %vm843, %v1439, 0
        %v1505 = vsel %vm986, %v1443, 0
        %1507 = vmatpush.bf16.msra.mxu0 0
        %1508 = vmatpush.bf16.msra.mxu0 0
        %1509 = vmatpush.bf16.msra.mxu0 0
        %1510 = vmatpush.bf16.msra.mxu0 0
        %1511 = vmatpush.bf16.msra.mxu0 0
        %1512 = vmatpush.bf16.msra.mxu0 0
        %1513 = vmatpush.bf16.msra.mxu0 0
        %1514 = vmatpush.bf16.msra.mxu0 %v1505
        %1515 = vmatmul.bf16.gmra.mxu0 %v1502
        %v1516 = vpop.f32.mrf.mxu0
        %v1517 = vadd.f32 0.0, %v1516
        %v1518 = vpop.f32.mrf.mxu0
        %1519 = vdwg.mxu0
        %1521 = vrot.lane.b32.xlu0 %v1479, 8
        %v1522 = vpop.permute.xlu0 %1521
        %1525 = vrot.lane.b32.xlu0 %v1498, 16
        %v1526 = vpop.permute.xlu0 %1525
        %1529 = vrot.lane.b32.xlu0 %v1517, 24
        %v1530 = vpop.permute.xlu0 %1529
        %v1532 = vsel %vm843, %v1460, %v1522
        %v1533 = vsel %vm1073, %v1532, %v1526
        %v1534 = vsel %vm1075, %v1533, %v1530
        %v1535 = vpack.c.bf16 %v1534, %v1534
        %v1537 = vperm.slane %v1174, 0
        %v1543 = vunpack.c.l.b16 %v1163
        %v1544 = vunpack.c.l.b16 %v1164
        %v1545 = vunpack.c.l.b16 %v1165
        %v1546 = vunpack.c.l.b16 %v1166
        %v1547 = vpack.c.b16 %v1544, %v1543
        %v1548 = vpack.c.b16 %v1546, %v1545
        %v1552 = vsel %vm618, %v1535, 0
        %1554 = vmatpush.bf16.msra.mxu0 0
        %1555 = vmatpush.bf16.msra.mxu0 0
        %1556 = vmatpush.bf16.msra.mxu0 0
        %1557 = vmatpush.bf16.msra.mxu0 0
        %1558 = vmatpush.bf16.msra.mxu0 0
        %1559 = vmatpush.bf16.msra.mxu0 0
        %1560 = vmatpush.bf16.msra.mxu0 %v1548
        %1561 = vmatpush.bf16.msra.mxu0 %v1547
        %1562 = vmatmul.bf16.gmra.mxu0 %v1552
        %v1563 = vpop.f32.mrf.mxu0
        %v1564 = vadd.f32 %v1537, %v1563
        %v1565 = vpop.f32.mrf.mxu0
        %1566 = vdwg.mxu0
        %v1567 = vadd.f32 %v1109, %v1564
        %s1568 = scalar_lea.vmem %s7, 2
        %v1569 = vld [vmem:[%s1568] sm:$0x1]
        %s1570 = scalar_lea.vmem %s8, 2
        %v1571 = vld [vmem:[%s1570] sm:$0x1]
        %v1572 = vsel %vm618, %v1567, 0.0
        %1573 = vadd.xlane.f32.xlu0 %v1572
        %v1574 = vpop.xlane.xlu0 %1573
        %v1575 = vmul.f32 %v1574, %v653
        %v1576 = vsub.f32 %v1567, %v1575
        %v1577 = vmul.f32 %v1576, %v1576
        %v1578 = vsel %vm618, %v1577, 0.0
        %1579 = vadd.xlane.f32.xlu0 %v1578
        %v1580 = vpop.xlane.xlu0 %1579
        %v1581 = vmul.f32 %v1580, %v666
        %v1582 = vrsqrt.pop %v1581
        %v1583 = vmul.f32 %v1582, %v1581
        %v1584 = vmul.f32 %v1583, %v1582
        %v1585 = vmul.f32 0.5, %v1584
        %v1586 = vsub.f32 1.5, %v1585
        %v1587 = vmul.f32 %v1582, %v1586
        %v1588 = vmul.f32 %v1581, %v1587
        %vm1589 = vcmp.eq.f32.partialorder %v1581, inf
        %v1590 = vsel %vm1589, %v1581, %v1588
        %vm1591 = vcmp.eq.f32.partialorder %v1581, 0.0
        %v1592 = vand.u32 %v1581, 2147483648
        %v1593 = vsel %vm1591, %v1592, %v1590
        %v1595 = vperm.slane %v1569, 0
        %v1597 = vmul.f32 %v1595, %v1576
        %v1598 = vadd.f32 %v1593, 1e-06
        %v1599 = vrcp.pop %v1598
        %v1600 = vmul.f32 %v1597, %v1599
        %v1602 = vperm.slane %v1571, 0
        %v1604 = vadd.f32 %v1600, %v1602
        %v1605 = vld [vmem:[%s11] sm:$0xf]
        %v1606 = vld [vmem:[%s11 + $0x4] sm:$0xf]
        %v1607 = vld [vmem:[%s11 + $0x8] sm:$0xf]
        %v1608 = vld [vmem:[%s11 + $0xc] sm:$0xf]
        %v1609 = vpack.c.bf16 %v1604, %v1604
        %v1610 = vld [vmem:[%s12] sm:$0x1]
        %v1612 = vperm.slane %v1610, 0
        %v1618 = vunpack.c.l.b16 %v1605
        %v1619 = vunpack.c.l.b16 %v1606
        %v1620 = vunpack.c.l.b16 %v1607
        %v1621 = vunpack.c.l.b16 %v1608
        %v1622 = vpack.c.b16 %v1619, %v1618
        %v1623 = vpack.c.b16 %v1621, %v1620
        %v1627 = vsel %vm618, %v1609, 0
        %1629 = vmatpush.bf16.msra.mxu0 0
        %1630 = vmatpush.bf16.msra.mxu0 0
        %1631 = vmatpush.bf16.msra.mxu0 0
        %1632 = vmatpush.bf16.msra.mxu0 0
        %1633 = vmatpush.bf16.msra.mxu0 0
        %1634 = vmatpush.bf16.msra.mxu0 0
        %1635 = vmatpush.bf16.msra.mxu0 %v1623
        %1636 = vmatpush.bf16.msra.mxu0 %v1622
        %1637 = vmatmul.bf16.gmra.mxu0 %v1627
        %v1638 = vpop.f32.mrf.mxu0
        %v1639 = vadd.f32 %v1612, %v1638
        %v1640 = vpop.f32.mrf.mxu0
        %1641 = vdwg.mxu0
        %v1642 = vmax.f32 %v1639, 0.0
        %v1643 = vld [vmem:[%s13] sm:$0xf]
        %v1644 = vld [vmem:[%s13 + $0x4] sm:$0xf]
        %v1645 = vld [vmem:[%s13 + $0x8] sm:$0xf]
        %v1646 = vld [vmem:[%s13 + $0xc] sm:$0xf]
        %v1647 = vld [vmem:[%s13 + $0x10] sm:$0xf]
        %v1648 = vld [vmem:[%s13 + $0x14] sm:$0xf]
        %v1649 = vld [vmem:[%s13 + $0x18] sm:$0xf]
        %v1650 = vld [vmem:[%s13 + $0x1c] sm:$0xf]
        %v1651 = vld [vmem:[%s13 + $0x20] sm:$0xf]
        %v1652 = vld [vmem:[%s13 + $0x24] sm:$0xf]
        %v1653 = vld [vmem:[%s13 + $0x28] sm:$0xf]
        %v1654 = vld [vmem:[%s13 + $0x2c] sm:$0xf]
        %v1655 = vld [vmem:[%s13 + $0x30] sm:$0xf]
        %v1656 = vld [vmem:[%s13 + $0x34] sm:$0xf]
        %v1657 = vld [vmem:[%s13 + $0x38] sm:$0xf]
        %v1658 = vld [vmem:[%s13 + $0x3c] sm:$0xf]
        %v1659 = vpack.c.bf16 %v1642, %v1642
        %v1660 = vld [vmem:[%s14] sm:$0x1]
        %v1662 = vperm.slane %v1660, 0
        %v1680 = vunpack.c.l.b16 %v1643
        %v1681 = vunpack.c.l.b16 %v1644
        %v1682 = vunpack.c.l.b16 %v1645
        %v1683 = vunpack.c.l.b16 %v1646
        %v1684 = vunpack.c.l.b16 %v1647
        %v1685 = vunpack.c.l.b16 %v1648
        %v1686 = vunpack.c.l.b16 %v1649
        %v1687 = vunpack.c.l.b16 %v1650
        %v1688 = vunpack.c.l.b16 %v1651
        %v1689 = vunpack.c.l.b16 %v1652
        %v1690 = vunpack.c.l.b16 %v1653
        %v1691 = vunpack.c.l.b16 %v1654
        %v1692 = vunpack.c.l.b16 %v1655
        %v1693 = vunpack.c.l.b16 %v1656
        %v1694 = vunpack.c.l.b16 %v1657
        %v1695 = vunpack.c.l.b16 %v1658
        %v1696 = vpack.c.b16 %v1681, %v1680
        %v1697 = vpack.c.b16 %v1683, %v1682
        %v1698 = vpack.c.b16 %v1685, %v1684
        %v1699 = vpack.c.b16 %v1687, %v1686
        %v1700 = vpack.c.b16 %v1689, %v1688
        %v1701 = vpack.c.b16 %v1691, %v1690
        %v1702 = vpack.c.b16 %v1693, %v1692
        %v1703 = vpack.c.b16 %v1695, %v1694
        %1712 = vmatpush.bf16.msra.mxu0 %v1703
        %1713 = vmatpush.bf16.msra.mxu0 %v1702
        %1714 = vmatpush.bf16.msra.mxu0 %v1701
        %1715 = vmatpush.bf16.msra.mxu0 %v1700
        %1716 = vmatpush.bf16.msra.mxu0 %v1699
        %1717 = vmatpush.bf16.msra.mxu0 %v1698
        %1718 = vmatpush.bf16.msra.mxu0 %v1697
        %1719 = vmatpush.bf16.msra.mxu0 %v1696
        %1720 = vmatmul.bf16.gmra.mxu0 %v1659
        %v1721 = vpop.f32.mrf.mxu0
        %v1722 = vadd.f32 %v1662, %v1721
        %v1723 = vpop.f32.mrf.mxu0
        %1724 = vdwg.mxu0
        %v1725 = vadd.f32 %v1567, %v1722
        %s1726 = scalar_lea.vmem %s7, 3
        %v1727 = vld [vmem:[%s1726] sm:$0x1]
        %s1728 = scalar_lea.vmem %s8, 3
        %v1729 = vld [vmem:[%s1728] sm:$0x1]
        %v1730 = vsel %vm618, %v1725, 0.0
        %1731 = vadd.xlane.f32.xlu0 %v1730
        %v1732 = vpop.xlane.xlu0 %1731
        %v1733 = vmul.f32 %v1732, %v653
        %v1734 = vsub.f32 %v1725, %v1733
        %v1735 = vmul.f32 %v1734, %v1734
        %v1736 = vsel %vm618, %v1735, 0.0
        %1737 = vadd.xlane.f32.xlu0 %v1736
        %v1738 = vpop.xlane.xlu0 %1737
        %v1739 = vmul.f32 %v1738, %v666
        %v1740 = vrsqrt.pop %v1739
        %v1741 = vmul.f32 %v1740, %v1739
        %v1742 = vmul.f32 %v1741, %v1740
        %v1743 = vmul.f32 0.5, %v1742
        %v1744 = vsub.f32 1.5, %v1743
        %v1745 = vmul.f32 %v1740, %v1744
        %v1746 = vmul.f32 %v1739, %v1745
        %vm1747 = vcmp.eq.f32.partialorder %v1739, inf
        %v1748 = vsel %vm1747, %v1739, %v1746
        %vm1749 = vcmp.eq.f32.partialorder %v1739, 0.0
        %v1750 = vand.u32 %v1739, 2147483648
        %v1751 = vsel %vm1749, %v1750, %v1748
        %v1753 = vperm.slane %v1727, 0
        %v1755 = vmul.f32 %v1753, %v1734
        %v1756 = vadd.f32 %v1751, 1e-06
        %v1757 = vrcp.pop %v1756
        %v1758 = vmul.f32 %v1755, %v1757
        %v1760 = vperm.slane %v1729, 0
        %v1762 = vadd.f32 %v1758, %v1760
        %s1763 = scalar_lea.vmem %s9, 128
        %v1764 = vld [vmem:[%s1763] sm:$0xf]
        %v1765 = vld [vmem:[%s1763 + $0x4] sm:$0xf]
        %v1766 = vld [vmem:[%s1763 + $0x8] sm:$0xf]
        %v1767 = vld [vmem:[%s1763 + $0xc] sm:$0xf]
        %s1768 = scalar_lea.vmem %s9, 144
        %v1769 = vld [vmem:[%s1768] sm:$0xf]
        %v1770 = vld [vmem:[%s1768 + $0x4] sm:$0xf]
        %v1771 = vld [vmem:[%s1768 + $0x8] sm:$0xf]
        %v1772 = vld [vmem:[%s1768 + $0xc] sm:$0xf]
        %s1773 = scalar_lea.vmem %s9, 160
        %v1774 = vld [vmem:[%s1773] sm:$0xf]
        %v1775 = vld [vmem:[%s1773 + $0x4] sm:$0xf]
        %v1776 = vld [vmem:[%s1773 + $0x8] sm:$0xf]
        %v1777 = vld [vmem:[%s1773 + $0xc] sm:$0xf]
        %s1778 = scalar_lea.vmem %s9, 176
        %v1779 = vld [vmem:[%s1778] sm:$0xf]
        %v1780 = vld [vmem:[%s1778 + $0x4] sm:$0xf]
        %v1781 = vld [vmem:[%s1778 + $0x8] sm:$0xf]
        %v1782 = vld [vmem:[%s1778 + $0xc] sm:$0xf]
        %s1783 = scalar_lea.vmem %s10, 8
        %v1784 = vld [vmem:[%s1783] sm:$0x1]
        %s1785 = scalar_lea.vmem %s10, 9
        %v1786 = vld [vmem:[%s1785] sm:$0x1]
        %s1787 = scalar_lea.vmem %s10, 10
        %v1788 = vld [vmem:[%s1787] sm:$0x1]
        %s1789 = scalar_lea.vmem %s10, 11
        %v1790 = vld [vmem:[%s1789] sm:$0x1]
        %v1791 = vpack.c.bf16 %v1762, %v1762
        %v1793 = vperm.slane %v1784, 0
        %v1799 = vunpack.c.l.b16 %v1764
        %v1800 = vunpack.c.l.b16 %v1765
        %v1801 = vunpack.c.l.b16 %v1766
        %v1802 = vunpack.c.l.b16 %v1767
        %v1803 = vpack.c.b16 %v1800, %v1799
        %v1804 = vpack.c.b16 %v1802, %v1801
        %v1808 = vsel %vm618, %v1791, 0
        %1810 = vmatpush.bf16.msra.mxu0 0
        %1811 = vmatpush.bf16.msra.mxu0 0
        %1812 = vmatpush.bf16.msra.mxu0 0
        %1813 = vmatpush.bf16.msra.mxu0 0
        %1814 = vmatpush.bf16.msra.mxu0 0
        %1815 = vmatpush.bf16.msra.mxu0 0
        %1816 = vmatpush.bf16.msra.mxu0 %v1804
        %1817 = vmatpush.bf16.msra.mxu0 %v1803
        %1818 = vmatmul.bf16.gmra.mxu0 %v1808
        %v1819 = vpop.f32.mrf.mxu0
        %v1820 = vadd.f32 %v1793, %v1819
        %v1821 = vpop.f32.mrf.mxu0
        %1822 = vdwg.mxu0
        %v1824 = vperm.slane %v1786, 0
        %v1830 = vunpack.c.l.b16 %v1769
        %v1831 = vunpack.c.l.b16 %v1770
        %v1832 = vunpack.c.l.b16 %v1771
        %v1833 = vunpack.c.l.b16 %v1772
        %v1834 = vpack.c.b16 %v1831, %v1830
        %v1835 = vpack.c.b16 %v1833, %v1832
        %1838 = vmatpush.bf16.msra.mxu0 0
        %1839 = vmatpush.bf16.msra.mxu0 0
        %1840 = vmatpush.bf16.msra.mxu0 0
        %1841 = vmatpush.bf16.msra.mxu0 0
        %1842 = vmatpush.bf16.msra.mxu0 0
        %1843 = vmatpush.bf16.msra.mxu0 0
        %1844 = vmatpush.bf16.msra.mxu0 %v1835
        %1845 = vmatpush.bf16.msra.mxu0 %v1834
        %1846 = vmatmul.bf16.gmra.mxu0 %v1808
        %v1847 = vpop.f32.mrf.mxu0
        %v1848 = vadd.f32 %v1824, %v1847
        %v1849 = vpop.f32.mrf.mxu0
        %1850 = vdwg.mxu0
        %v1852 = vperm.slane %v1788, 0
        %v1858 = vunpack.c.l.b16 %v1774
        %v1859 = vunpack.c.l.b16 %v1775
        %v1860 = vunpack.c.l.b16 %v1776
        %v1861 = vunpack.c.l.b16 %v1777
        %v1862 = vpack.c.b16 %v1859, %v1858
        %v1863 = vpack.c.b16 %v1861, %v1860
        %1866 = vmatpush.bf16.msra.mxu0 0
        %1867 = vmatpush.bf16.msra.mxu0 0
        %1868 = vmatpush.bf16.msra.mxu0 0
        %1869 = vmatpush.bf16.msra.mxu0 0
        %1870 = vmatpush.bf16.msra.mxu0 0
        %1871 = vmatpush.bf16.msra.mxu0 0
        %1872 = vmatpush.bf16.msra.mxu0 %v1863
        %1873 = vmatpush.bf16.msra.mxu0 %v1862
        %1874 = vmatmul.bf16.gmra.mxu0 %v1808
        %v1875 = vpop.f32.mrf.mxu0
        %v1876 = vadd.f32 %v1852, %v1875
        %v1877 = vpop.f32.mrf.mxu0
        %1878 = vdwg.mxu0
        %1880 = vrot.lane.b32.xlu0 %v1820, 120
        %v1881 = vpop.permute.xlu0 %1880
        %1883 = vrot.lane.b32.xlu0 %v1820, 112
        %v1884 = vpop.permute.xlu0 %1883
        %1886 = vrot.lane.b32.xlu0 %v1820, 104
        %v1887 = vpop.permute.xlu0 %1886
        %1890 = vrot.lane.b32.xlu0 %v1848, 120
        %v1891 = vpop.permute.xlu0 %1890
        %1893 = vrot.lane.b32.xlu0 %v1848, 112
        %v1894 = vpop.permute.xlu0 %1893
        %1896 = vrot.lane.b32.xlu0 %v1848, 104
        %v1897 = vpop.permute.xlu0 %1896
        %1900 = vrot.lane.b32.xlu0 %v1876, 120
        %v1901 = vpop.permute.xlu0 %1900
        %1903 = vrot.lane.b32.xlu0 %v1876, 112
        %v1904 = vpop.permute.xlu0 %1903
        %1906 = vrot.lane.b32.xlu0 %v1876, 104
        %v1907 = vpop.permute.xlu0 %1906
        %v1909 = vpack.c.bf16 %v1820, %v1820
        %v1910 = vpack.c.bf16 %v1881, %v1881
        %v1911 = vpack.c.bf16 %v1884, %v1884
        %v1912 = vpack.c.bf16 %v1887, %v1887
        %v1913 = vpack.c.bf16 %v1848, %v1848
        %v1914 = vpack.c.bf16 %v1891, %v1891
        %v1915 = vpack.c.bf16 %v1894, %v1894
        %v1916 = vpack.c.bf16 %v1897, %v1897
        %v1918 = vsel %vm843, %v1909, 0
        %v1921 = vsel %vm843, %v1913, 0
        %1923 = vmatpush.bf16.xpose.msra.mxu0 0
        %1924 = vmatpush.bf16.xpose.msra.mxu0 0
        %1925 = vmatpush.bf16.xpose.msra.mxu0 0
        %1926 = vmatpush.bf16.xpose.msra.mxu0 0
        %1927 = vmatpush.bf16.xpose.msra.mxu0 0
        %1928 = vmatpush.bf16.xpose.msra.mxu0 0
        %1929 = vmatpush.bf16.xpose.msra.mxu0 0
        %1930 = vmatpush.bf16.xpose.msra.mxu0 %v1921
        %1931 = vmatmul.bf16.gmra.mxu0 %v1918
        %v1932 = vpop.f32.mrf.mxu0
        %v1933 = vadd.f32 0.0, %v1932
        %v1934 = vpop.f32.mrf.mxu0
        %1935 = vdwg.mxu0
        %v1937 = vsel %vm843, %v1910, 0
        %v1940 = vsel %vm843, %v1914, 0
        %1942 = vmatpush.bf16.xpose.msra.mxu0 0
        %1943 = vmatpush.bf16.xpose.msra.mxu0 0
        %1944 = vmatpush.bf16.xpose.msra.mxu0 0
        %1945 = vmatpush.bf16.xpose.msra.mxu0 0
        %1946 = vmatpush.bf16.xpose.msra.mxu0 0
        %1947 = vmatpush.bf16.xpose.msra.mxu0 0
        %1948 = vmatpush.bf16.xpose.msra.mxu0 0
        %1949 = vmatpush.bf16.xpose.msra.mxu0 %v1940
        %1950 = vmatmul.bf16.gmra.mxu0 %v1937
        %v1951 = vpop.f32.mrf.mxu0
        %v1952 = vadd.f32 0.0, %v1951
        %v1953 = vpop.f32.mrf.mxu0
        %1954 = vdwg.mxu0
        %v1956 = vsel %vm843, %v1911, 0
        %v1959 = vsel %vm843, %v1915, 0
        %1961 = vmatpush.bf16.xpose.msra.mxu0 0
        %1962 = vmatpush.bf16.xpose.msra.mxu0 0
        %1963 = vmatpush.bf16.xpose.msra.mxu0 0
        %1964 = vmatpush.bf16.xpose.msra.mxu0 0
        %1965 = vmatpush.bf16.xpose.msra.mxu0 0
        %1966 = vmatpush.bf16.xpose.msra.mxu0 0
        %1967 = vmatpush.bf16.xpose.msra.mxu0 0
        %1968 = vmatpush.bf16.xpose.msra.mxu0 %v1959
        %1969 = vmatmul.bf16.gmra.mxu0 %v1956
        %v1970 = vpop.f32.mrf.mxu0
        %v1971 = vadd.f32 0.0, %v1970
        %v1972 = vpop.f32.mrf.mxu0
        %1973 = vdwg.mxu0
        %v1975 = vsel %vm843, %v1912, 0
        %v1978 = vsel %vm843, %v1916, 0
        %1980 = vmatpush.bf16.xpose.msra.mxu0 0
        %1981 = vmatpush.bf16.xpose.msra.mxu0 0
        %1982 = vmatpush.bf16.xpose.msra.mxu0 0
        %1983 = vmatpush.bf16.xpose.msra.mxu0 0
        %1984 = vmatpush.bf16.xpose.msra.mxu0 0
        %1985 = vmatpush.bf16.xpose.msra.mxu0 0
        %1986 = vmatpush.bf16.xpose.msra.mxu0 0
        %1987 = vmatpush.bf16.xpose.msra.mxu0 %v1978
        %1988 = vmatmul.bf16.gmra.mxu0 %v1975
        %v1989 = vpop.f32.mrf.mxu0
        %v1990 = vadd.f32 0.0, %v1989
        %v1991 = vpop.f32.mrf.mxu0
        %1992 = vdwg.mxu0
        %v1993 = vmul.f32 %v1933, 0.35355338
        %v1994 = vmul.f32 %v1952, 0.35355338
        %v1995 = vmul.f32 %v1971, 0.35355338
        %v1996 = vmul.f32 %v1990, 0.35355338
        %v1997 = vsel %vm926, -1e+09, %v1993
        %v1998 = vsel %vm926, -1e+09, %v1994
        %v1999 = vsel %vm926, -1e+09, %v1995
        %v2000 = vsel %vm926, -1e+09, %v1996
        %v2001 = vsel %vm843, %v1997, -inf
        %2002 = vmax.xlane.f32.xlu0 %v2001
        %v2003 = vpop.xlane.xlu0 %2002
        %v2004 = vsel %vm843, %v1998, -inf
        %2005 = vmax.xlane.f32.xlu0 %v2004
        %v2006 = vpop.xlane.xlu0 %2005
        %v2007 = vsel %vm843, %v1999, -inf
        %2008 = vmax.xlane.f32.xlu0 %v2007
        %v2009 = vpop.xlane.xlu0 %2008
        %v2010 = vsel %vm843, %v2000, -inf
        %2011 = vmax.xlane.f32.xlu0 %v2010
        %v2012 = vpop.xlane.xlu0 %2011
        %v2013 = vsub.f32 %v1997, %v2003
        %v2014 = vsub.f32 %v1998, %v2006
        %v2015 = vsub.f32 %v1999, %v2009
        %v2016 = vsub.f32 %v2000, %v2012
        %v2017 = vmul.f32 %v2013, 1.442695
        %v2018 = vpow.pop %v2017
        %v2019 = vmul.f32 %v2014, 1.442695
        %v2020 = vpow.pop %v2019
        %v2021 = vmul.f32 %v2015, 1.442695
        %v2022 = vpow.pop %v2021
        %v2023 = vmul.f32 %v2016, 1.442695
        %v2024 = vpow.pop %v2023
        %v2025 = vsel %vm843, %v2018, 0.0
        %2026 = vadd.xlane.f32.xlu0 %v2025
        %v2027 = vpop.xlane.xlu0 %2026
        %v2028 = vsel %vm843, %v2020, 0.0
        %2029 = vadd.xlane.f32.xlu0 %v2028
        %v2030 = vpop.xlane.xlu0 %2029
        %v2031 = vsel %vm843, %v2022, 0.0
        %2032 = vadd.xlane.f32.xlu0 %v2031
        %v2033 = vpop.xlane.xlu0 %2032
        %v2034 = vsel %vm843, %v2024, 0.0
        %2035 = vadd.xlane.f32.xlu0 %v2034
        %v2036 = vpop.xlane.xlu0 %2035
        %v2037 = vrcp.pop %v2027
        %v2038 = vrcp.pop %v2030
        %v2039 = vrcp.pop %v2033
        %v2040 = vrcp.pop %v2036
        %v2041 = vmul.f32 %v2018, %v2037
        %v2042 = vmul.f32 %v2020, %v2038
        %v2043 = vmul.f32 %v2022, %v2039
        %v2044 = vmul.f32 %v2024, %v2040
        %v2045 = vpack.c.bf16 %v2041, %v2041
        %v2046 = vpack.c.bf16 %v2042, %v2042
        %v2047 = vpack.c.bf16 %v2043, %v2043
        %v2048 = vpack.c.bf16 %v2044, %v2044
        %v2049 = vpack.c.bf16 %v1876, %v1876
        %v2050 = vpack.c.bf16 %v1901, %v1901
        %v2051 = vpack.c.bf16 %v1904, %v1904
        %v2052 = vpack.c.bf16 %v1907, %v1907
        %v2054 = vsel %vm843, %v2045, 0
        %v2057 = vsel %vm986, %v2049, 0
        %2059 = vmatpush.bf16.msra.mxu0 0
        %2060 = vmatpush.bf16.msra.mxu0 0
        %2061 = vmatpush.bf16.msra.mxu0 0
        %2062 = vmatpush.bf16.msra.mxu0 0
        %2063 = vmatpush.bf16.msra.mxu0 0
        %2064 = vmatpush.bf16.msra.mxu0 0
        %2065 = vmatpush.bf16.msra.mxu0 0
        %2066 = vmatpush.bf16.msra.mxu0 %v2057
        %2067 = vmatmul.bf16.gmra.mxu0 %v2054
        %v2068 = vpop.f32.mrf.mxu0
        %v2069 = vadd.f32 0.0, %v2068
        %v2070 = vpop.f32.mrf.mxu0
        %2071 = vdwg.mxu0
        %v2073 = vsel %vm843, %v2046, 0
        %v2076 = vsel %vm986, %v2050, 0
        %2078 = vmatpush.bf16.msra.mxu0 0
        %2079 = vmatpush.bf16.msra.mxu0 0
        %2080 = vmatpush.bf16.msra.mxu0 0
        %2081 = vmatpush.bf16.msra.mxu0 0
        %2082 = vmatpush.bf16.msra.mxu0 0
        %2083 = vmatpush.bf16.msra.mxu0 0
        %2084 = vmatpush.bf16.msra.mxu0 0
        %2085 = vmatpush.bf16.msra.mxu0 %v2076
        %2086 = vmatmul.bf16.gmra.mxu0 %v2073
        %v2087 = vpop.f32.mrf.mxu0
        %v2088 = vadd.f32 0.0, %v2087
        %v2089 = vpop.f32.mrf.mxu0
        %2090 = vdwg.mxu0
        %v2092 = vsel %vm843, %v2047, 0
        %v2095 = vsel %vm986, %v2051, 0
        %2097 = vmatpush.bf16.msra.mxu0 0
        %2098 = vmatpush.bf16.msra.mxu0 0
        %2099 = vmatpush.bf16.msra.mxu0 0
        %2100 = vmatpush.bf16.msra.mxu0 0
        %2101 = vmatpush.bf16.msra.mxu0 0
        %2102 = vmatpush.bf16.msra.mxu0 0
        %2103 = vmatpush.bf16.msra.mxu0 0
        %2104 = vmatpush.bf16.msra.mxu0 %v2095
        %2105 = vmatmul.bf16.gmra.mxu0 %v2092
        %v2106 = vpop.f32.mrf.mxu0
        %v2107 = vadd.f32 0.0, %v2106
        %v2108 = vpop.f32.mrf.mxu0
        %2109 = vdwg.mxu0
        %v2111 = vsel %vm843, %v2048, 0
        %v2114 = vsel %vm986, %v2052, 0
        %2116 = vmatpush.bf16.msra.mxu0 0
        %2117 = vmatpush.bf16.msra.mxu0 0
        %2118 = vmatpush.bf16.msra.mxu0 0
        %2119 = vmatpush.bf16.msra.mxu0 0
        %2120 = vmatpush.bf16.msra.mxu0 0
        %2121 = vmatpush.bf16.msra.mxu0 0
        %2122 = vmatpush.bf16.msra.mxu0 0
        %2123 = vmatpush.bf16.msra.mxu0 %v2114
        %2124 = vmatmul.bf16.gmra.mxu0 %v2111
        %v2125 = vpop.f32.mrf.mxu0
        %v2126 = vadd.f32 0.0, %v2125
        %v2127 = vpop.f32.mrf.mxu0
        %2128 = vdwg.mxu0
        %2130 = vrot.lane.b32.xlu0 %v2088, 8
        %v2131 = vpop.permute.xlu0 %2130
        %2134 = vrot.lane.b32.xlu0 %v2107, 16
        %v2135 = vpop.permute.xlu0 %2134
        %2138 = vrot.lane.b32.xlu0 %v2126, 24
        %v2139 = vpop.permute.xlu0 %2138
        %v2141 = vsel %vm843, %v2069, %v2131
        %v2142 = vsel %vm1073, %v2141, %v2135
        %v2143 = vsel %vm1075, %v2142, %v2139
        %v2144 = vpack.c.bf16 %v2143, %v2143
        %v2146 = vperm.slane %v1790, 0
        %v2152 = vunpack.c.l.b16 %v1779
        %v2153 = vunpack.c.l.b16 %v1780
        %v2154 = vunpack.c.l.b16 %v1781
        %v2155 = vunpack.c.l.b16 %v1782
        %v2156 = vpack.c.b16 %v2153, %v2152
        %v2157 = vpack.c.b16 %v2155, %v2154
        %v2161 = vsel %vm618, %v2144, 0
        %2163 = vmatpush.bf16.msra.mxu0 0
        %2164 = vmatpush.bf16.msra.mxu0 0
        %2165 = vmatpush.bf16.msra.mxu0 0
        %2166 = vmatpush.bf16.msra.mxu0 0
        %2167 = vmatpush.bf16.msra.mxu0 0
        %2168 = vmatpush.bf16.msra.mxu0 0
        %2169 = vmatpush.bf16.msra.mxu0 %v2157
        %2170 = vmatpush.bf16.msra.mxu0 %v2156
        %2171 = vmatmul.bf16.gmra.mxu0 %v2161
        %v2172 = vpop.f32.mrf.mxu0
        %v2173 = vadd.f32 %v2146, %v2172
        %v2174 = vpop.f32.mrf.mxu0
        %2175 = vdwg.mxu0
        %v2176 = vadd.f32 %v1725, %v2173
        %s2177 = scalar_lea.vmem %s7, 4
        %v2178 = vld [vmem:[%s2177] sm:$0x1]
        %s2179 = scalar_lea.vmem %s8, 4
        %v2180 = vld [vmem:[%s2179] sm:$0x1]
        %v2181 = vsel %vm618, %v2176, 0.0
        %2182 = vadd.xlane.f32.xlu0 %v2181
        %v2183 = vpop.xlane.xlu0 %2182
        %v2184 = vmul.f32 %v2183, %v653
        %v2185 = vsub.f32 %v2176, %v2184
        %v2186 = vmul.f32 %v2185, %v2185
        %v2187 = vsel %vm618, %v2186, 0.0
        %2188 = vadd.xlane.f32.xlu0 %v2187
        %v2189 = vpop.xlane.xlu0 %2188
        %v2190 = vmul.f32 %v2189, %v666
        %v2191 = vrsqrt.pop %v2190
        %v2192 = vmul.f32 %v2191, %v2190
        %v2193 = vmul.f32 %v2192, %v2191
        %v2194 = vmul.f32 0.5, %v2193
        %v2195 = vsub.f32 1.5, %v2194
        %v2196 = vmul.f32 %v2191, %v2195
        %v2197 = vmul.f32 %v2190, %v2196
        %vm2198 = vcmp.eq.f32.partialorder %v2190, inf
        %v2199 = vsel %vm2198, %v2190, %v2197
        %vm2200 = vcmp.eq.f32.partialorder %v2190, 0.0
        %v2201 = vand.u32 %v2190, 2147483648
        %v2202 = vsel %vm2200, %v2201, %v2199
        %v2204 = vperm.slane %v2178, 0
        %v2206 = vmul.f32 %v2204, %v2185
        %v2207 = vadd.f32 %v2202, 1e-06
        %v2208 = vrcp.pop %v2207
        %v2209 = vmul.f32 %v2206, %v2208
        %v2211 = vperm.slane %v2180, 0
        %v2213 = vadd.f32 %v2209, %v2211
        %s2214 = scalar_lea.vmem %s9, 192
        %v2215 = vld [vmem:[%s2214] sm:$0xf]
        %v2216 = vld [vmem:[%s2214 + $0x4] sm:$0xf]
        %v2217 = vld [vmem:[%s2214 + $0x8] sm:$0xf]
        %v2218 = vld [vmem:[%s2214 + $0xc] sm:$0xf]
        %s2219 = scalar_lea.vmem %s9, 208
        %v2220 = vld [vmem:[%s2219] sm:$0xf]
        %v2221 = vld [vmem:[%s2219 + $0x4] sm:$0xf]
        %v2222 = vld [vmem:[%s2219 + $0x8] sm:$0xf]
        %v2223 = vld [vmem:[%s2219 + $0xc] sm:$0xf]
        %s2224 = scalar_lea.vmem %s9, 224
        %v2225 = vld [vmem:[%s2224] sm:$0xf]
        %v2226 = vld [vmem:[%s2224 + $0x4] sm:$0xf]
        %v2227 = vld [vmem:[%s2224 + $0x8] sm:$0xf]
        %v2228 = vld [vmem:[%s2224 + $0xc] sm:$0xf]
        %s2229 = scalar_lea.vmem %s9, 240
        %v2230 = vld [vmem:[%s2229] sm:$0xf]
        %v2231 = vld [vmem:[%s2229 + $0x4] sm:$0xf]
        %v2232 = vld [vmem:[%s2229 + $0x8] sm:$0xf]
        %v2233 = vld [vmem:[%s2229 + $0xc] sm:$0xf]
        %s2234 = scalar_lea.vmem %s10, 12
        %v2235 = vld [vmem:[%s2234] sm:$0x1]
        %s2236 = scalar_lea.vmem %s10, 13
        %v2237 = vld [vmem:[%s2236] sm:$0x1]
        %s2238 = scalar_lea.vmem %s10, 14
        %v2239 = vld [vmem:[%s2238] sm:$0x1]
        %s2240 = scalar_lea.vmem %s10, 15
        %v2241 = vld [vmem:[%s2240] sm:$0x1]
        %v2242 = vpack.c.bf16 %v2213, %v2213
        %v2244 = vperm.slane %v2235, 0
        %v2250 = vunpack.c.l.b16 %v2215
        %v2251 = vunpack.c.l.b16 %v2216
        %v2252 = vunpack.c.l.b16 %v2217
        %v2253 = vunpack.c.l.b16 %v2218
        %v2254 = vpack.c.b16 %v2251, %v2250
        %v2255 = vpack.c.b16 %v2253, %v2252
        %v2259 = vsel %vm618, %v2242, 0
        %2261 = vmatpush.bf16.msra.mxu0 0
        %2262 = vmatpush.bf16.msra.mxu0 0
        %2263 = vmatpush.bf16.msra.mxu0 0
        %2264 = vmatpush.bf16.msra.mxu0 0
        %2265 = vmatpush.bf16.msra.mxu0 0
        %2266 = vmatpush.bf16.msra.mxu0 0
        %2267 = vmatpush.bf16.msra.mxu0 %v2255
        %2268 = vmatpush.bf16.msra.mxu0 %v2254
        %2269 = vmatmul.bf16.gmra.mxu0 %v2259
        %v2270 = vpop.f32.mrf.mxu0
        %v2271 = vadd.f32 %v2244, %v2270
        %v2272 = vpop.f32.mrf.mxu0
        %2273 = vdwg.mxu0
        %v2275 = vperm.slane %v2237, 0
        %v2281 = vunpack.c.l.b16 %v2220
        %v2282 = vunpack.c.l.b16 %v2221
        %v2283 = vunpack.c.l.b16 %v2222
        %v2284 = vunpack.c.l.b16 %v2223
        %v2285 = vpack.c.b16 %v2282, %v2281
        %v2286 = vpack.c.b16 %v2284, %v2283
        %2289 = vmatpush.bf16.msra.mxu0 0
        %2290 = vmatpush.bf16.msra.mxu0 0
        %2291 = vmatpush.bf16.msra.mxu0 0
        %2292 = vmatpush.bf16.msra.mxu0 0
        %2293 = vmatpush.bf16.msra.mxu0 0
        %2294 = vmatpush.bf16.msra.mxu0 0
        %2295 = vmatpush.bf16.msra.mxu0 %v2286
        %2296 = vmatpush.bf16.msra.mxu0 %v2285
        %2297 = vmatmul.bf16.gmra.mxu0 %v1224
        %v2298 = vpop.f32.mrf.mxu0
        %v2299 = vadd.f32 %v2275, %v2298
        %v2300 = vpop.f32.mrf.mxu0
        %2301 = vdwg.mxu0
        %v2303 = vperm.slane %v2239, 0
        %v2309 = vunpack.c.l.b16 %v2225
        %v2310 = vunpack.c.l.b16 %v2226
        %v2311 = vunpack.c.l.b16 %v2227
        %v2312 = vunpack.c.l.b16 %v2228
        %v2313 = vpack.c.b16 %v2310, %v2309
        %v2314 = vpack.c.b16 %v2312, %v2311
        %2317 = vmatpush.bf16.msra.mxu0 0
        %2318 = vmatpush.bf16.msra.mxu0 0
        %2319 = vmatpush.bf16.msra.mxu0 0
        %2320 = vmatpush.bf16.msra.mxu0 0
        %2321 = vmatpush.bf16.msra.mxu0 0
        %2322 = vmatpush.bf16.msra.mxu0 0
        %2323 = vmatpush.bf16.msra.mxu0 %v2314
        %2324 = vmatpush.bf16.msra.mxu0 %v2313
        %2325 = vmatmul.bf16.gmra.mxu0 %v1224
        %v2326 = vpop.f32.mrf.mxu0
        %v2327 = vadd.f32 %v2303, %v2326
        %v2328 = vpop.f32.mrf.mxu0
        %2329 = vdwg.mxu0
        %2331 = vrot.lane.b32.xlu0 %v2271, 120
        %v2332 = vpop.permute.xlu0 %2331
        %2334 = vrot.lane.b32.xlu0 %v2271, 112
        %v2335 = vpop.permute.xlu0 %2334
        %2337 = vrot.lane.b32.xlu0 %v2271, 104
        %v2338 = vpop.permute.xlu0 %2337
        %2341 = vrot.lane.b32.xlu0 %v2299, 120
        %v2342 = vpop.permute.xlu0 %2341
        %2344 = vrot.lane.b32.xlu0 %v2299, 112
        %v2345 = vpop.permute.xlu0 %2344
        %2347 = vrot.lane.b32.xlu0 %v2299, 104
        %v2348 = vpop.permute.xlu0 %2347
        %2351 = vrot.lane.b32.xlu0 %v2327, 120
        %v2352 = vpop.permute.xlu0 %2351
        %2354 = vrot.lane.b32.xlu0 %v2327, 112
        %v2355 = vpop.permute.xlu0 %2354
        %2357 = vrot.lane.b32.xlu0 %v2327, 104
        %v2358 = vpop.permute.xlu0 %2357
        %v2360 = vpack.c.bf16 %v2271, %v2271
        %v2361 = vpack.c.bf16 %v2332, %v2332
        %v2362 = vpack.c.bf16 %v2335, %v2335
        %v2363 = vpack.c.bf16 %v2338, %v2338
        %v2364 = vpack.c.bf16 %v2299, %v2299
        %v2365 = vpack.c.bf16 %v2342, %v2342
        %v2366 = vpack.c.bf16 %v2345, %v2345
        %v2367 = vpack.c.bf16 %v2348, %v2348
        %v2369 = vsel %vm843, %v2360, 0
        %v2372 = vsel %vm843, %v2364, 0
        %2374 = vmatpush.bf16.xpose.msra.mxu0 0
        %2375 = vmatpush.bf16.xpose.msra.mxu0 0
        %2376 = vmatpush.bf16.xpose.msra.mxu0 0
        %2377 = vmatpush.bf16.xpose.msra.mxu0 0
        %2378 = vmatpush.bf16.xpose.msra.mxu0 0
        %2379 = vmatpush.bf16.xpose.msra.mxu0 0
        %2380 = vmatpush.bf16.xpose.msra.mxu0 0
        %2381 = vmatpush.bf16.xpose.msra.mxu0 %v2372
        %2382 = vmatmul.bf16.gmra.mxu0 %v2369
        %v2383 = vpop.f32.mrf.mxu0
        %v2384 = vadd.f32 0.0, %v2383
        %v2385 = vpop.f32.mrf.mxu0
        %2386 = vdwg.mxu0
        %v2388 = vsel %vm843, %v2361, 0
        %v2391 = vsel %vm843, %v2365, 0
        %2393 = vmatpush.bf16.xpose.msra.mxu0 0
        %2394 = vmatpush.bf16.xpose.msra.mxu0 0
        %2395 = vmatpush.bf16.xpose.msra.mxu0 0
        %2396 = vmatpush.bf16.xpose.msra.mxu0 0
        %2397 = vmatpush.bf16.xpose.msra.mxu0 0
        %2398 = vmatpush.bf16.xpose.msra.mxu0 0
        %2399 = vmatpush.bf16.xpose.msra.mxu0 0
        %2400 = vmatpush.bf16.xpose.msra.mxu0 %v2391
        %2401 = vmatmul.bf16.gmra.mxu0 %v2388
        %v2402 = vpop.f32.mrf.mxu0
        %v2403 = vadd.f32 0.0, %v2402
        %v2404 = vpop.f32.mrf.mxu0
        %2405 = vdwg.mxu0
        %v2407 = vsel %vm843, %v2362, 0
        %v2410 = vsel %vm843, %v2366, 0
        %2412 = vmatpush.bf16.xpose.msra.mxu0 0
        %2413 = vmatpush.bf16.xpose.msra.mxu0 0
        %2414 = vmatpush.bf16.xpose.msra.mxu0 0
        %2415 = vmatpush.bf16.xpose.msra.mxu0 0
        %2416 = vmatpush.bf16.xpose.msra.mxu0 0
        %2417 = vmatpush.bf16.xpose.msra.mxu0 0
        %2418 = vmatpush.bf16.xpose.msra.mxu0 0
        %2419 = vmatpush.bf16.xpose.msra.mxu0 %v2410
        %2420 = vmatmul.bf16.gmra.mxu0 %v2407
        %v2421 = vpop.f32.mrf.mxu0
        %v2422 = vadd.f32 0.0, %v2421
        %v2423 = vpop.f32.mrf.mxu0
        %2424 = vdwg.mxu0
        %v2426 = vsel %vm843, %v2363, 0
        %v2429 = vsel %vm843, %v2367, 0
        %2431 = vmatpush.bf16.xpose.msra.mxu0 0
        %2432 = vmatpush.bf16.xpose.msra.mxu0 0
        %2433 = vmatpush.bf16.xpose.msra.mxu0 0
        %2434 = vmatpush.bf16.xpose.msra.mxu0 0
        %2435 = vmatpush.bf16.xpose.msra.mxu0 0
        %2436 = vmatpush.bf16.xpose.msra.mxu0 0
        %2437 = vmatpush.bf16.xpose.msra.mxu0 0
        %2438 = vmatpush.bf16.xpose.msra.mxu0 %v2429
        %2439 = vmatmul.bf16.gmra.mxu0 %v2426
        %v2440 = vpop.f32.mrf.mxu0
        %v2441 = vadd.f32 0.0, %v2440
        %v2442 = vpop.f32.mrf.mxu0
        %2443 = vdwg.mxu0
        %v2444 = vmul.f32 %v2384, 0.35355338
        %v2445 = vmul.f32 %v2403, 0.35355338
        %v2446 = vmul.f32 %v2422, 0.35355338
        %v2447 = vmul.f32 %v2441, 0.35355338
        %v2448 = vsel %vm1387, -1e+09, %v2444
        %v2449 = vsel %vm1387, -1e+09, %v2445
        %v2450 = vsel %vm1387, -1e+09, %v2446
        %v2451 = vsel %vm1387, -1e+09, %v2447
        %v2452 = vsel %vm843, %v2448, -inf
        %2453 = vmax.xlane.f32.xlu0 %v2452
        %v2454 = vpop.xlane.xlu0 %2453
        %v2455 = vsel %vm843, %v2449, -inf
        %2456 = vmax.xlane.f32.xlu0 %v2455
        %v2457 = vpop.xlane.xlu0 %2456
        %v2458 = vsel %vm843, %v2450, -inf
        %2459 = vmax.xlane.f32.xlu0 %v2458
        %v2460 = vpop.xlane.xlu0 %2459
        %v2461 = vsel %vm843, %v2451, -inf
        %2462 = vmax.xlane.f32.xlu0 %v2461
        %v2463 = vpop.xlane.xlu0 %2462
        %v2464 = vsub.f32 %v2448, %v2454
        %v2465 = vsub.f32 %v2449, %v2457
        %v2466 = vsub.f32 %v2450, %v2460
        %v2467 = vsub.f32 %v2451, %v2463
        %v2468 = vmul.f32 %v2464, 1.442695
        %v2469 = vpow.pop %v2468
        %v2470 = vmul.f32 %v2465, 1.442695
        %v2471 = vpow.pop %v2470
        %v2472 = vmul.f32 %v2466, 1.442695
        %v2473 = vpow.pop %v2472
        %v2474 = vmul.f32 %v2467, 1.442695
        %v2475 = vpow.pop %v2474
        %v2476 = vsel %vm843, %v2469, 0.0
        %2477 = vadd.xlane.f32.xlu0 %v2476
        %v2478 = vpop.xlane.xlu0 %2477
        %v2479 = vsel %vm843, %v2471, 0.0
        %2480 = vadd.xlane.f32.xlu0 %v2479
        %v2481 = vpop.xlane.xlu0 %2480
        %v2482 = vsel %vm843, %v2473, 0.0
        %2483 = vadd.xlane.f32.xlu0 %v2482
        %v2484 = vpop.xlane.xlu0 %2483
        %v2485 = vsel %vm843, %v2475, 0.0
        %2486 = vadd.xlane.f32.xlu0 %v2485
        %v2487 = vpop.xlane.xlu0 %2486
        %v2488 = vrcp.pop %v2478
        %v2489 = vrcp.pop %v2481
        %v2490 = vrcp.pop %v2484
        %v2491 = vrcp.pop %v2487
        %v2492 = vmul.f32 %v2469, %v2488
        %v2493 = vmul.f32 %v2471, %v2489
        %v2494 = vmul.f32 %v2473, %v2490
        %v2495 = vmul.f32 %v2475, %v2491
        %v2496 = vpack.c.bf16 %v2492, %v2492
        %v2497 = vpack.c.bf16 %v2493, %v2493
        %v2498 = vpack.c.bf16 %v2494, %v2494
        %v2499 = vpack.c.bf16 %v2495, %v2495
        %v2500 = vpack.c.bf16 %v2327, %v2327
        %v2501 = vpack.c.bf16 %v2352, %v2352
        %v2502 = vpack.c.bf16 %v2355, %v2355
        %v2503 = vpack.c.bf16 %v2358, %v2358
        %v2505 = vsel %vm843, %v2496, 0
        %v2508 = vsel %vm986, %v2500, 0
        %2510 = vmatpush.bf16.msra.mxu0 0
        %2511 = vmatpush.bf16.msra.mxu0 0
        %2512 = vmatpush.bf16.msra.mxu0 0
        %2513 = vmatpush.bf16.msra.mxu0 0
        %2514 = vmatpush.bf16.msra.mxu0 0
        %2515 = vmatpush.bf16.msra.mxu0 0
        %2516 = vmatpush.bf16.msra.mxu0 0
        %2517 = vmatpush.bf16.msra.mxu0 %v2508
        %2518 = vmatmul.bf16.gmra.mxu0 %v2505
        %v2519 = vpop.f32.mrf.mxu0
        %v2520 = vadd.f32 0.0, %v2519
        %v2521 = vpop.f32.mrf.mxu0
        %2522 = vdwg.mxu0
        %v2524 = vsel %vm843, %v2497, 0
        %v2527 = vsel %vm986, %v2501, 0
        %2529 = vmatpush.bf16.msra.mxu0 0
        %2530 = vmatpush.bf16.msra.mxu0 0
        %2531 = vmatpush.bf16.msra.mxu0 0
        %2532 = vmatpush.bf16.msra.mxu0 0
        %2533 = vmatpush.bf16.msra.mxu0 0
        %2534 = vmatpush.bf16.msra.mxu0 0
        %2535 = vmatpush.bf16.msra.mxu0 0
        %2536 = vmatpush.bf16.msra.mxu0 %v2527
        %2537 = vmatmul.bf16.gmra.mxu0 %v2524
        %v2538 = vpop.f32.mrf.mxu0
        %v2539 = vadd.f32 0.0, %v2538
        %v2540 = vpop.f32.mrf.mxu0
        %2541 = vdwg.mxu0
        %v2543 = vsel %vm843, %v2498, 0
        %v2546 = vsel %vm986, %v2502, 0
        %2548 = vmatpush.bf16.msra.mxu0 0
        %2549 = vmatpush.bf16.msra.mxu0 0
        %2550 = vmatpush.bf16.msra.mxu0 0
        %2551 = vmatpush.bf16.msra.mxu0 0
        %2552 = vmatpush.bf16.msra.mxu0 0
        %2553 = vmatpush.bf16.msra.mxu0 0
        %2554 = vmatpush.bf16.msra.mxu0 0
        %2555 = vmatpush.bf16.msra.mxu0 %v2546
        %2556 = vmatmul.bf16.gmra.mxu0 %v2543
        %v2557 = vpop.f32.mrf.mxu0
        %v2558 = vadd.f32 0.0, %v2557
        %v2559 = vpop.f32.mrf.mxu0
        %2560 = vdwg.mxu0
        %v2562 = vsel %vm843, %v2499, 0
        %v2565 = vsel %vm986, %v2503, 0
        %2567 = vmatpush.bf16.msra.mxu0 0
        %2568 = vmatpush.bf16.msra.mxu0 0
        %2569 = vmatpush.bf16.msra.mxu0 0
        %2570 = vmatpush.bf16.msra.mxu0 0
        %2571 = vmatpush.bf16.msra.mxu0 0
        %2572 = vmatpush.bf16.msra.mxu0 0
        %2573 = vmatpush.bf16.msra.mxu0 0
        %2574 = vmatpush.bf16.msra.mxu0 %v2565
        %2575 = vmatmul.bf16.gmra.mxu0 %v2562
        %v2576 = vpop.f32.mrf.mxu0
        %v2577 = vadd.f32 0.0, %v2576
        %v2578 = vpop.f32.mrf.mxu0
        %2579 = vdwg.mxu0
        %2581 = vrot.lane.b32.xlu0 %v2539, 8
        %v2582 = vpop.permute.xlu0 %2581
        %2585 = vrot.lane.b32.xlu0 %v2558, 16
        %v2586 = vpop.permute.xlu0 %2585
        %2589 = vrot.lane.b32.xlu0 %v2577, 24
        %v2590 = vpop.permute.xlu0 %2589
        %v2592 = vsel %vm843, %v2520, %v2582
        %v2593 = vsel %vm1073, %v2592, %v2586
        %v2594 = vsel %vm1075, %v2593, %v2590
        %v2595 = vpack.c.bf16 %v2594, %v2594
        %v2597 = vperm.slane %v2241, 0
        %v2603 = vunpack.c.l.b16 %v2230
        %v2604 = vunpack.c.l.b16 %v2231
        %v2605 = vunpack.c.l.b16 %v2232
        %v2606 = vunpack.c.l.b16 %v2233
        %v2607 = vpack.c.b16 %v2604, %v2603
        %v2608 = vpack.c.b16 %v2606, %v2605
        %v2612 = vsel %vm618, %v2595, 0
        %2614 = vmatpush.bf16.msra.mxu0 0
        %2615 = vmatpush.bf16.msra.mxu0 0
        %2616 = vmatpush.bf16.msra.mxu0 0
        %2617 = vmatpush.bf16.msra.mxu0 0
        %2618 = vmatpush.bf16.msra.mxu0 0
        %2619 = vmatpush.bf16.msra.mxu0 0
        %2620 = vmatpush.bf16.msra.mxu0 %v2608
        %2621 = vmatpush.bf16.msra.mxu0 %v2607
        %2622 = vmatmul.bf16.gmra.mxu0 %v2612
        %v2623 = vpop.f32.mrf.mxu0
        %v2624 = vadd.f32 %v2597, %v2623
        %v2625 = vpop.f32.mrf.mxu0
        %2626 = vdwg.mxu0
        %v2627 = vadd.f32 %v2176, %v2624
        %s2628 = scalar_lea.vmem %s7, 5
        %v2629 = vld [vmem:[%s2628] sm:$0x1]
        %s2630 = scalar_lea.vmem %s8, 5
        %v2631 = vld [vmem:[%s2630] sm:$0x1]
        %v2632 = vsel %vm618, %v2627, 0.0
        %2633 = vadd.xlane.f32.xlu0 %v2632
        %v2634 = vpop.xlane.xlu0 %2633
        %v2635 = vmul.f32 %v2634, %v653
        %v2636 = vsub.f32 %v2627, %v2635
        %v2637 = vmul.f32 %v2636, %v2636
        %v2638 = vsel %vm618, %v2637, 0.0
        %2639 = vadd.xlane.f32.xlu0 %v2638
        %v2640 = vpop.xlane.xlu0 %2639
        %v2641 = vmul.f32 %v2640, %v666
        %v2642 = vrsqrt.pop %v2641
        %v2643 = vmul.f32 %v2642, %v2641
        %v2644 = vmul.f32 %v2643, %v2642
        %v2645 = vmul.f32 0.5, %v2644
        %v2646 = vsub.f32 1.5, %v2645
        %v2647 = vmul.f32 %v2642, %v2646
        %v2648 = vmul.f32 %v2641, %v2647
        %vm2649 = vcmp.eq.f32.partialorder %v2641, inf
        %v2650 = vsel %vm2649, %v2641, %v2648
        %vm2651 = vcmp.eq.f32.partialorder %v2641, 0.0
        %v2652 = vand.u32 %v2641, 2147483648
        %v2653 = vsel %vm2651, %v2652, %v2650
        %v2655 = vperm.slane %v2629, 0
        %v2657 = vmul.f32 %v2655, %v2636
        %v2658 = vadd.f32 %v2653, 1e-06
        %v2659 = vrcp.pop %v2658
        %v2660 = vmul.f32 %v2657, %v2659
        %v2662 = vperm.slane %v2631, 0
        %v2664 = vadd.f32 %v2660, %v2662
        %s2665 = scalar_lea.vmem %s11, 16
        %v2666 = vld [vmem:[%s2665] sm:$0xf]
        %v2667 = vld [vmem:[%s2665 + $0x4] sm:$0xf]
        %v2668 = vld [vmem:[%s2665 + $0x8] sm:$0xf]
        %v2669 = vld [vmem:[%s2665 + $0xc] sm:$0xf]
        %v2670 = vpack.c.bf16 %v2664, %v2664
        %s2671 = scalar_lea.vmem %s12, 1
        %v2672 = vld [vmem:[%s2671] sm:$0x1]
        %v2674 = vperm.slane %v2672, 0
        %v2680 = vunpack.c.l.b16 %v2666
        %v2681 = vunpack.c.l.b16 %v2667
        %v2682 = vunpack.c.l.b16 %v2668
        %v2683 = vunpack.c.l.b16 %v2669
        %v2684 = vpack.c.b16 %v2681, %v2680
        %v2685 = vpack.c.b16 %v2683, %v2682
        %v2689 = vsel %vm618, %v2670, 0
        %2691 = vmatpush.bf16.msra.mxu0 0
        %2692 = vmatpush.bf16.msra.mxu0 0
        %2693 = vmatpush.bf16.msra.mxu0 0
        %2694 = vmatpush.bf16.msra.mxu0 0
        %2695 = vmatpush.bf16.msra.mxu0 0
        %2696 = vmatpush.bf16.msra.mxu0 0
        %2697 = vmatpush.bf16.msra.mxu0 %v2685
        %2698 = vmatpush.bf16.msra.mxu0 %v2684
        %2699 = vmatmul.bf16.gmra.mxu0 %v2689
        %v2700 = vpop.f32.mrf.mxu0
        %v2701 = vadd.f32 %v2674, %v2700
        %v2702 = vpop.f32.mrf.mxu0
        %2703 = vdwg.mxu0
        %v2704 = vmax.f32 %v2701, 0.0
        %s2705 = scalar_lea.vmem %s13, 64
        %v2706 = vld [vmem:[%s2705] sm:$0xf]
        %v2707 = vld [vmem:[%s2705 + $0x4] sm:$0xf]
        %v2708 = vld [vmem:[%s2705 + $0x8] sm:$0xf]
        %v2709 = vld [vmem:[%s2705 + $0xc] sm:$0xf]
        %v2710 = vld [vmem:[%s2705 + $0x10] sm:$0xf]
        %v2711 = vld [vmem:[%s2705 + $0x14] sm:$0xf]
        %v2712 = vld [vmem:[%s2705 + $0x18] sm:$0xf]
        %v2713 = vld [vmem:[%s2705 + $0x1c] sm:$0xf]
        %v2714 = vld [vmem:[%s2705 + $0x20] sm:$0xf]
        %v2715 = vld [vmem:[%s2705 + $0x24] sm:$0xf]
        %v2716 = vld [vmem:[%s2705 + $0x28] sm:$0xf]
        %v2717 = vld [vmem:[%s2705 + $0x2c] sm:$0xf]
        %v2718 = vld [vmem:[%s2705 + $0x30] sm:$0xf]
        %v2719 = vld [vmem:[%s2705 + $0x34] sm:$0xf]
        %v2720 = vld [vmem:[%s2705 + $0x38] sm:$0xf]
        %v2721 = vld [vmem:[%s2705 + $0x3c] sm:$0xf]
        %v2722 = vpack.c.bf16 %v2704, %v2704
        %s2723 = scalar_lea.vmem %s14, 1
        %v2724 = vld [vmem:[%s2723] sm:$0x1]
        %v2726 = vperm.slane %v2724, 0
        %v2744 = vunpack.c.l.b16 %v2706
        %v2745 = vunpack.c.l.b16 %v2707
        %v2746 = vunpack.c.l.b16 %v2708
        %v2747 = vunpack.c.l.b16 %v2709
        %v2748 = vunpack.c.l.b16 %v2710
        %v2749 = vunpack.c.l.b16 %v2711
        %v2750 = vunpack.c.l.b16 %v2712
        %v2751 = vunpack.c.l.b16 %v2713
        %v2752 = vunpack.c.l.b16 %v2714
        %v2753 = vunpack.c.l.b16 %v2715
        %v2754 = vunpack.c.l.b16 %v2716
        %v2755 = vunpack.c.l.b16 %v2717
        %v2756 = vunpack.c.l.b16 %v2718
        %v2757 = vunpack.c.l.b16 %v2719
        %v2758 = vunpack.c.l.b16 %v2720
        %v2759 = vunpack.c.l.b16 %v2721
        %v2760 = vpack.c.b16 %v2745, %v2744
        %v2761 = vpack.c.b16 %v2747, %v2746
        %v2762 = vpack.c.b16 %v2749, %v2748
        %v2763 = vpack.c.b16 %v2751, %v2750
        %v2764 = vpack.c.b16 %v2753, %v2752
        %v2765 = vpack.c.b16 %v2755, %v2754
        %v2766 = vpack.c.b16 %v2757, %v2756
        %v2767 = vpack.c.b16 %v2759, %v2758
        %2776 = vmatpush.bf16.msra.mxu0 %v2767
        %2777 = vmatpush.bf16.msra.mxu0 %v2766
        %2778 = vmatpush.bf16.msra.mxu0 %v2765
        %2779 = vmatpush.bf16.msra.mxu0 %v2764
        %2780 = vmatpush.bf16.msra.mxu0 %v2763
        %2781 = vmatpush.bf16.msra.mxu0 %v2762
        %2782 = vmatpush.bf16.msra.mxu0 %v2761
        %2783 = vmatpush.bf16.msra.mxu0 %v2760
        %2784 = vmatmul.bf16.gmra.mxu0 %v2722
        %v2785 = vpop.f32.mrf.mxu0
        %v2786 = vadd.f32 %v2726, %v2785
        %v2787 = vpop.f32.mrf.mxu0
        %2788 = vdwg.mxu0
        %v2789 = vadd.f32 %v2627, %v2786
        %v2790 = vld [vmem:[%s15] sm:$0x1]
        %v2791 = vld [vmem:[%s16] sm:$0x1]
        %v2792 = vsel %vm618, %v2789, 0.0
        %2793 = vadd.xlane.f32.xlu0 %v2792
        %v2794 = vpop.xlane.xlu0 %2793
        %v2795 = vmul.f32 %v2794, %v653
        %v2796 = vsub.f32 %v2789, %v2795
        %v2797 = vmul.f32 %v2796, %v2796
        %v2798 = vsel %vm618, %v2797, 0.0
        %2799 = vadd.xlane.f32.xlu0 %v2798
        %v2800 = vpop.xlane.xlu0 %2799
        %v2801 = vmul.f32 %v2800, %v666
        %v2802 = vrsqrt.pop %v2801
        %v2803 = vmul.f32 %v2802, %v2801
        %v2804 = vmul.f32 %v2803, %v2802
        %v2805 = vmul.f32 0.5, %v2804
        %v2806 = vsub.f32 1.5, %v2805
        %v2807 = vmul.f32 %v2802, %v2806
        %v2808 = vmul.f32 %v2801, %v2807
        %vm2809 = vcmp.eq.f32.partialorder %v2801, inf
        %v2810 = vsel %vm2809, %v2801, %v2808
        %vm2811 = vcmp.eq.f32.partialorder %v2801, 0.0
        %v2812 = vand.u32 %v2801, 2147483648
        %v2813 = vsel %vm2811, %v2812, %v2810
        %v2815 = vperm.slane %v2790, 0
        %v2817 = vmul.f32 %v2815, %v2796
        %v2818 = vadd.f32 %v2813, 1e-06
        %v2819 = vrcp.pop %v2818
        %v2820 = vmul.f32 %v2817, %v2819
        %v2822 = vperm.slane %v2791, 0
        %v2824 = vadd.f32 %v2820, %v2822
        %2825 = vst.msk [vmem:[%s578] sm:$0xff] %vm618, %v2824
        %s2826 = sand.u32 %s416, 1
        %s2827 = scalar_lea.sflag [#allocation3], %s2826
        %s2828 = sand.u32 %s416, 1
        %s2829 = smul.addr %s2828, 8
        %s2830 = scalar_lea.vmem [#allocation2], %s2829
        // Predicated region
        $region89: #{decoder_forward.1} parent=87 // pred_check
          %p2831 = pneg %p426
        $region90: #{decoder_forward.1} parent=87 // pred_check_branch
          %2833 = sbr.rel (%p2831) target = $region92
        $region91: #{decoder_forward.1} parent=87 // pred_region
          %2835 = vsyncadd %s2827, 0
          %s2836 = smul.addr %s31, 8
          %s2837 = scalar_lea.hbm %s17, %s2836
          %s2839 = sshll.u32 %s2830, 4
          %s2840 = int_to_ptr.vmem [resolvable:$true] %s2839
          %s2841 = sshll.u32 %s2837, 4
          %s2842 = int_to_ptr.hbm [resolvable:$true] %s2841
          %2844 = dma.vmem_to_hbm [thread:$0]  %s2840, 128, %s2842, %s2827
        $region92: #{decoder_forward.1} parent=87 // pred_fallthru
          _
      $region88: #{decoder_forward.1} parent=5 // pred_fallthru
        _
      %p2845 = scmp.le.s32.totalorder 2, %s26
      // Predicated region
      $region93: #{decoder_forward.1} parent=5 // pred_check
        %p2846 = pneg %p2845
      $region94: #{decoder_forward.1} parent=5 // pred_check_branch
        %2848 = sbr.rel (%p2846) target = $region96
      $region95: #{decoder_forward.1} parent=5 // pred_region
        %s2849 = ssub.s32 %s26, 2
        // Predicated region
        $region97: #{decoder_forward.1} parent=95 // pred_check
          %p2850 = pneg %p432
        $region98: #{decoder_forward.1} parent=95 // pred_check_branch
          %2852 = sbr.rel (%p2850) target = $region100
        $region99: #{decoder_forward.1} parent=95 // pred_region
          %s2853 = sand.u32 %s417, 1
          %s2854 = scalar_lea.sflag [#allocation3], %s2853
          %s2855 = sand.u32 %s417, 1
          %s2856 = smul.addr %s2855, 8
          %s2857 = scalar_lea.vmem [#allocation2], %s2856
          %2859 = dma.done %s2854, 128
        $region100: #{decoder_forward.1} parent=95 // pred_fallthru
          _
      $region96: #{decoder_forward.1} parent=5 // pred_fallthru
        _
    $region6: #{decoder_forward.1} parent=1 // loop_footer
      %s30 = sadd.s32 1, %s26
    $region7: #{decoder_forward.1} parent=1 // loop_footer_branch
      %25 = sbr.rel target = $region3
    $region8: #{decoder_forward.1} parent=1 // loop_exit
      _
    %2860 = vsyncpa [#allocation3], 1
    %s2861 = scalar_lea.sflag [#allocation3], 1
    %2862 = vsyncpa %s2861, 1

</llo_original>
